<compile_context>
chip_gen: v6e
topology: v6e:2x2x1
jax: 0.10.0
libtpu: 0.0.40
codegen_flags: <defaults>
</compile_context>

<pallas_src>
from functools import partial

import jax
import jax.numpy as jnp
from jax import lax
from jax.experimental import pallas as pl
from jax.experimental.pallas import tpu as pltpu


def _round_up(x, m):
    return (x + m - 1) // m * m


def decoder_gru_kernel(x_ref, h0_ref, c0_ref,
                       wih0_ref, bgx0_ref,
                       wstack_ref, bstack_ref,
                       wout_ref, bout_ref,
                       out_ref, hn0_ref, hn1_ref,
                       gx_ref, hseq_ref, bbias_ref,
                       *, seq_len, b_pad, h_pad):
    """Wavefront 2-layer GRU forward.

    x_ref:      (T*b_pad, F_PAD)   raw input (relu'd + projected in the prologue).
    h0/c0:      (b_pad, h_pad)     initial hidden state of layer 0 / layer 1.
    wih0_ref:   (F_PAD, 3*h_pad)   layer-0 input weights (transposed, gate-blocked r|z|n).
    wstack_ref: (2*h_pad, 7*h_pad) stacked recurrent weight:
                  rows [0:HP]   (h0 feats): [Whh0 (3HP) | Wih1_rz (2HP) | Wih1_n (HP) |   0    ]
                  rows [HP:2HP] (h1 feats): [   0 (3HP) | Whh1_rz (2HP) |    0  (HP) | Whh1_n ]
    bstack_ref: (1, 7*h_pad)       per-step bias for the stacked matmul (see wrapper).
    gx_ref:     (T*b_pad, 3*h_pad) scratch: hoisted layer-0 input-gate projections.
    hseq_ref:   (T*b_pad, h_pad)   scratch: layer-1 per-step outputs (fed to the final Linear).
    bbias_ref:  (b_pad, 7*h_pad)   scratch: bstack pre-broadcast once (no per-step broadcast).
    Gate order (PyTorch): r, z, n ; b_hn must stay inside the r*(...) term.
    """
    HP = h_pad

    # ---- prologue: ReLU + layer-0 input projection for ALL timesteps (one batched matmul).
    # bgx0 already contains bih0 + bhh0[r,z] (loop-invariant bias fold).
    x = jnp.maximum(x_ref[...], 0.0).astype(jnp.bfloat16)
    gx_ref[...] = jnp.dot(x, wih0_ref[...],
                          preferred_element_type=jnp.float32) + bgx0_ref[...]
    # Pre-broadcast the per-step bias once into VMEM (hoisted out of the recurrence).
    bbias_ref[...] = jnp.broadcast_to(bstack_ref[...], (b_pad, 7 * HP))

    def row(t):
        r = t * b_pad
        return r if isinstance(t, int) else pl.multiple_of(r, b_pad)

    def stacked_g(h0, h1):
        # One MXU push per step: (b_pad, 2*HP) x (2*HP, 7*HP), bf16 operands, f32 accumulate.
        lhs = jnp.concatenate([h0, h1], axis=1).astype(jnp.bfloat16)
        return jnp.dot(lhs, wstack_ref[...],
                       preferred_element_type=jnp.float32) + bbias_ref[...]

    def l0_update(t, h0, g):
        gx = gx_ref[pl.ds(row(t), b_pad), :]
        rz = jax.nn.sigmoid(gx[:, 0:2 * HP] + g[:, 0:2 * HP])   # one EUP stream for r and z
        n = jnp.tanh(gx[:, 2 * HP:3 * HP] + rz[:, 0:HP] * g[:, 2 * HP:3 * HP])
        z = rz[:, HP:2 * HP]
        return (1.0 - z) * n + z * h0

    def l1_update(t, h1, g):
        rz = jax.nn.sigmoid(g[:, 3 * HP:5 * HP])                # gx+gh+biases already summed
        n = jnp.tanh(g[:, 5 * HP:6 * HP] + rz[:, 0:HP] * g[:, 6 * HP:7 * HP])
        z = rz[:, HP:2 * HP]
        h1n = (1.0 - z) * n + z * h1
        hseq_ref[pl.ds(row(t), b_pad), :] = h1n                 # full lane-dense tile store
        return h1n

    # ---- wavefront recurrence: T+1 serial steps instead of 2*T.
    h0 = h0_ref[...]
    h1 = c0_ref[...]

    # step 0: layer-0 only (layer-1 columns of g are computed but ignored).
    g = stacked_g(h0, h1)
    h0 = l0_update(0, h0, g)

    # steps 1..T-1: merged; layer 1 processes timestep s-1 while layer 0 processes timestep s.
    def merged(s, carry):
        h0, h1 = carry
        g = stacked_g(h0, h1)
        h1 = l1_update(s - 1, h1, g)
        h0 = l0_update(s, h0, g)
        return (h0, h1)

    h0, h1 = lax.fori_loop(1, seq_len, merged, (h0, h1), unroll=True)

    # step T: layer-1 only, final timestep (layer-0 columns of g ignored).
    g = stacked_g(h0, h1)
    h1 = l1_update(seq_len - 1, h1, g)

    hn0_ref[...] = h0
    hn1_ref[...] = h1

    # ---- epilogue: Linear + sigmoid over the whole layer-1 sequence (one batched matmul).
    # TODO(synk): nn.GRU(dropout=0.5) between layers is train-time only; eval forward omits it.
    out_ref[...] = jax.nn.sigmoid(
        jnp.dot(hseq_ref[...].astype(jnp.bfloat16), wout_ref[...],
                preferred_element_type=jnp.float32) + bout_ref[...])


def decoder_forward(x, hidden, cell, params):
    """x: (T, B, F) f32; hidden, cell: (B, H) f32.  Returns (out (T,B,F), hidden, cell)."""
    T, B, F = x.shape
    H = hidden.shape[-1]
    # bf16 vregs pack (16,128): pad the batch to >=16 so per-step LHS tiles are full native tiles.
    B_PAD = max(_round_up(B, 8), 16)
    H_PAD = _round_up(H, 128)
    F_PAD = _round_up(F, 128)
    HP = H_PAD

    xp = jnp.pad(x.astype(jnp.float32), ((0, 0), (0, B_PAD - B), (0, F_PAD - F)))
    xp = xp.reshape(T * B_PAD, F_PAD)
    h0p = jnp.pad(hidden.astype(jnp.float32), ((0, B_PAD - B), (0, H_PAD - H)))
    c0p = jnp.pad(cell.astype(jnp.float32), ((0, B_PAD - B), (0, H_PAD - H)))

    def gate_w_t(w, in_dim, in_pad):
        # torch (3H, in) -> (in_pad, 3*H_PAD): transposed, gate-blocked r|z|n, zero-padded.
        w3 = w.reshape(3, H, in_dim)
        w3 = jnp.pad(w3, ((0, 0), (0, H_PAD - H), (0, in_pad - in_dim)))
        return w3.transpose(2, 0, 1).reshape(in_pad, 3 * H_PAD)

    def gate_b(b):
        return jnp.pad(b.reshape(3, H), ((0, 0), (0, H_PAD - H)))   # (3, HP)

    wih0t = gate_w_t(params["wih0"], F, F_PAD)          # (F_PAD, 3HP)
    whh0t = gate_w_t(params["whh0"], H, H_PAD)          # (HP, 3HP)
    wih1t = gate_w_t(params["wih1"], H, H_PAD)
    whh1t = gate_w_t(params["whh1"], H, H_PAD)

    bih0, bhh0 = gate_b(params["bih0"]), gate_b(params["bhh0"])
    bih1, bhh1 = gate_b(params["bih1"]), gate_b(params["bhh1"])

    # Stacked recurrent weight: rows = [h0 features ; h1 features] (block structure, see kernel).
    zeros_hp = jnp.zeros((HP, HP), jnp.float32)
    top = jnp.concatenate([whh0t, wih1t[:, :2 * HP], wih1t[:, 2 * HP:], zeros_hp], axis=1)
    bot = jnp.concatenate([jnp.zeros((HP, 3 * HP), jnp.float32),
                           whh1t[:, :2 * HP], zeros_hp, whh1t[:, 2 * HP:]], axis=1)
    wstack = jnp.concatenate([top, bot], axis=0).astype(jnp.bfloat16)    # (2HP, 7HP)

    # Layer-0 input-projection bias with bhh0's r,z thirds folded in (loop-invariant).
    bgx0 = jnp.concatenate([bih0[0] + bhh0[0], bih0[1] + bhh0[1], bih0[2]]
                           ).reshape(1, 3 * HP).astype(jnp.float32)
    # Per-step stacked bias: [0 (l0 r,z) | bhh0_n | bih1_rz+bhh1_rz | bih1_n | bhh1_n].
    bstack = jnp.concatenate([jnp.zeros((2 * HP,), jnp.float32), bhh0[2],
                              bih1[0] + bhh1[0], bih1[1] + bhh1[1],
                              bih1[2], bhh1[2]]).reshape(1, 7 * HP).astype(jnp.float32)

    wih0 = wih0t.astype(jnp.bfloat16)
    wout = jnp.pad(params["wout"].T, ((0, H_PAD - H), (0, F_PAD - F))).astype(jnp.bfloat16)
    bout = jnp.pad(params["bout"], (0, F_PAD - F)).reshape(1, F_PAD).astype(jnp.float32)

    vmem = pl.BlockSpec(memory_space=pltpu.MemorySpace.VMEM)
    # TODO(synk): for long T on v7x, chunk gx/hseq scratch over time blocks (or store gx in bf16)
    # and add a parallel batch grid axis when B >= 16; unnecessary at these tiny shapes.
    out_p, hn0, hn1 = pl.pallas_call(
        partial(decoder_gru_kernel, seq_len=T, b_pad=B_PAD, h_pad=H_PAD),
        out_shape=(
            jax.ShapeDtypeStruct((T * B_PAD, F_PAD), jnp.float32),
            jax.ShapeDtypeStruct((B_PAD, H_PAD), jnp.float32),
            jax.ShapeDtypeStruct((B_PAD, H_PAD), jnp.float32),
        ),
        in_specs=[vmem] * 9,
        out_specs=(vmem, vmem, vmem),
        scratch_shapes=[
            pltpu.VMEM((T * B_PAD, 3 * H_PAD), jnp.float32),   # hoisted layer-0 gate projections
            pltpu.VMEM((T * B_PAD, H_PAD), jnp.float32),       # layer-1 hidden sequence
            pltpu.VMEM((B_PAD, 7 * H_PAD), jnp.float32),       # pre-broadcast per-step bias
        ],
    )(xp, h0p, c0p, wih0, bgx0, wstack, bstack, wout, bout)

    out = out_p.reshape(T, B_PAD, F_PAD)[:, :B, :F]
    return out, hn0[:B, :H], hn1[:B, :H]


def init_params(key, H, F):
    """PyTorch-style uniform(-1/sqrt(H), 1/sqrt(H)) init for GRU + Linear."""
    k = 1.0 / jnp.sqrt(jnp.float32(H))
    ks = jax.random.split(key, 10)
    u = lambda kk, shape: jax.random.uniform(kk, shape, jnp.float32, -k, k)
    return {
        "wih0": u(ks[0], (3 * H, F)), "whh0": u(ks[1], (3 * H, H)),
        "bih0": u(ks[2], (3 * H,)),   "bhh0": u(ks[3], (3 * H,)),
        "wih1": u(ks[4], (3 * H, H)), "whh1": u(ks[5], (3 * H, H)),
        "bih1": u(ks[6], (3 * H,)),   "bhh1": u(ks[7], (3 * H,)),
        "wout": u(ks[8], (F, H)),     "bout": u(ks[9], (F,)),
    }


def decoder_reference(x, hidden, cell, params):
    """Pure-JAX f32 reference mirroring the torch DecoderRNN forward (eval mode)."""
    H = hidden.shape[-1]

    def cell_fn(xt, h, wih, whh, bih, bhh):
        gx = xt @ wih.T + bih
        gh = h @ whh.T + bhh
        r = jax.nn.sigmoid(gx[..., :H] + gh[..., :H])
        z = jax.nn.sigmoid(gx[..., H:2 * H] + gh[..., H:2 * H])
        n = jnp.tanh(gx[..., 2 * H:] + r * gh[..., 2 * H:])
        return (1.0 - z) * n + z * h

    xr = jnp.maximum(x, 0.0)

    def scan0(h, xt):
        h = cell_fn(xt, h, params["wih0"], params["whh0"], params["bih0"], params["bhh0"])
        return h, h

    hn0, seq0 = lax.scan(scan0, hidden, xr)

    def scan1(h, xt):
        h = cell_fn(xt, h, params["wih1"], params["whh1"], params["bih1"], params["bhh1"])
        return h, h

    hn1, seq1 = lax.scan(scan1, cell, seq0)
    out = jax.nn.sigmoid(seq1 @ params["wout"].T + params["bout"])
    return out, hn0, hn1


if __name__ == "__main__":
    key = jax.random.PRNGKey(0)
    k_x, k_h, k_c, k_p = jax.random.split(key, 4)

    # Small shapes implied by the forward: (seq, batch, output_size) input,
    # (batch, hidden_size) hidden & cell, 2-layer GRU.
    T, B, H, F = 6, 4, 32, 48
    x = jax.random.normal(k_x, (T, B, F), jnp.float32)
    hidden = 0.5 * jax.random.normal(k_h, (B, H), jnp.float32)
    cell = 0.5 * jax.random.normal(k_c, (B, H), jnp.float32)
    params = init_params(k_p, H, F)

    out, hn, cn = decoder_forward(x, hidden, cell, params)
    out = jax.block_until_ready(out)

    ref_out, ref_hn, ref_cn = decoder_reference(x, hidden, cell, params)
    ref_out = jax.block_until_ready(ref_out)

    assert out.shape == (T, B, F) and hn.shape == (B, H) and cn.shape == (B, H)
    # bf16 matmul operands -> relaxed tolerance vs the f32 reference.
    assert jnp.allclose(out, ref_out, atol=2e-2, rtol=2e-2), "output mismatch vs reference"
    assert jnp.allclose(hn, ref_hn, atol=2e-2, rtol=2e-2), "hidden mismatch vs reference"
    assert jnp.allclose(cn, ref_cn, atol=2e-2, rtol=2e-2), "cell mismatch vs reference"
    print("KERNEL_OK")
</pallas_src>

<mosaic_0001>
module attributes {stable_mosaic.version = 11 : i64} {
  func.func @decoder_gru_kernel(%arg0: memref<96x128xf32, #tpu.memory_space<vmem>>, %arg1: memref<16x128xf32, #tpu.memory_space<vmem>>, %arg2: memref<16x128xf32, #tpu.memory_space<vmem>>, %arg3: memref<128x384xbf16, #tpu.memory_space<vmem>>, %arg4: memref<1x384xf32, #tpu.memory_space<vmem>>, %arg5: memref<256x896xbf16, #tpu.memory_space<vmem>>, %arg6: memref<1x896xf32, #tpu.memory_space<vmem>>, %arg7: memref<128x128xbf16, #tpu.memory_space<vmem>>, %arg8: memref<1x128xf32, #tpu.memory_space<vmem>>, %arg9: memref<96x128xf32, #tpu.memory_space<vmem>>, %arg10: memref<16x128xf32, #tpu.memory_space<vmem>>, %arg11: memref<16x128xf32, #tpu.memory_space<vmem>>, %arg12: memref<96x384xf32, #tpu.memory_space<vmem>>, %arg13: memref<96x128xf32, #tpu.memory_space<vmem>>, %arg14: memref<16x896xf32, #tpu.memory_space<vmem>>) attributes {dimension_semantics = [], scalar_prefetch = 0 : i64, scratch_operands = 3 : i64, tpu.core_type = #tpu.core_type<tc>} {
    %c0 = arith.constant 0 : index
    %c0_0 = arith.constant 0 : index
    %0 = vector.load %arg0[%c0, %c0_0] : memref<96x128xf32, #tpu.memory_space<vmem>>, vector<96x128xf32>
    %cst = arith.constant 0.000000e+00 : f32
    %1 = vector.broadcast %cst : f32 to vector<96x128xf32>
    %2 = arith.maximumf %0, %1 : vector<96x128xf32>
    %3 = arith.truncf %2 : vector<96x128xf32> to vector<96x128xbf16>
    %c0_1 = arith.constant 0 : index
    %c0_2 = arith.constant 0 : index
    %4 = vector.load %arg3[%c0_1, %c0_2] : memref<128x384xbf16, #tpu.memory_space<vmem>>, vector<128x384xbf16>
    %cst_3 = arith.constant dense<0.000000e+00> : vector<96x384xf32>
    %5 = tpu.matmul %3, %4, %cst_3 {dimension_numbers = #tpu.dot_dimension_numbers<[1], [0], [0], [1], [0, 0, 1, 1], [], []>} : vector<96x128xbf16>, vector<128x384xbf16>, vector<96x384xf32> -> vector<96x384xf32>
    %c0_4 = arith.constant 0 : index
    %c0_5 = arith.constant 0 : index
    %6 = vector.load %arg4[%c0_4, %c0_5] : memref<1x384xf32, #tpu.memory_space<vmem>>, vector<1x384xf32>
    %7 = vector.broadcast %6 : vector<1x384xf32> to vector<96x384xf32>
    %8 = arith.addf %5, %7 : vector<96x384xf32>
    %c0_6 = arith.constant 0 : index
    %c0_7 = arith.constant 0 : index
    %9 = vector.load %arg12[%c0_6, %c0_7] : memref<96x384xf32, #tpu.memory_space<vmem>>, vector<96x384xf32>
    tpu.vector_store %arg12[%c0_6, %c0_7], %8 {strides = array<i32>} : memref<96x384xf32, #tpu.memory_space<vmem>>, vector<96x384xf32>,
    %c0_8 = arith.constant 0 : index
    %c0_9 = arith.constant 0 : index
    %10 = vector.load %arg6[%c0_8, %c0_9] : memref<1x896xf32, #tpu.memory_space<vmem>>, vector<1x896xf32>
    %11 = vector.shape_cast %10 : vector<1x896xf32> to vector<1x896xf32>
    %12 = vector.broadcast %11 : vector<1x896xf32> to vector<16x896xf32>
    %c0_10 = arith.constant 0 : index
    %c0_11 = arith.constant 0 : index
    %13 = vector.load %arg14[%c0_10, %c0_11] : memref<16x896xf32, #tpu.memory_space<vmem>>, vector<16x896xf32>
    tpu.vector_store %arg14[%c0_10, %c0_11], %12 {strides = array<i32>} : memref<16x896xf32, #tpu.memory_space<vmem>>, vector<16x896xf32>,
    %c0_12 = arith.constant 0 : index
    %c0_13 = arith.constant 0 : index
    %14 = vector.load %arg1[%c0_12, %c0_13] : memref<16x128xf32, #tpu.memory_space<vmem>>, vector<16x128xf32>
    %c0_14 = arith.constant 0 : index
    %c0_15 = arith.constant 0 : index
    %15 = vector.load %arg2[%c0_14, %c0_15] : memref<16x128xf32, #tpu.memory_space<vmem>>, vector<16x128xf32>
    %16 = tpu.concatenate %14, %15 in 1 : vector<16x128xf32>, vector<16x128xf32> -> vector<16x256xf32>
    %17 = arith.truncf %16 : vector<16x256xf32> to vector<16x256xbf16>
    %c0_16 = arith.constant 0 : index
    %c0_17 = arith.constant 0 : index
    %18 = vector.load %arg5[%c0_16, %c0_17] : memref<256x896xbf16, #tpu.memory_space<vmem>>, vector<256x896xbf16>
    %cst_18 = arith.constant dense<0.000000e+00> : vector<16x896xf32>
    %19 = tpu.matmul %17, %18, %cst_18 {dimension_numbers = #tpu.dot_dimension_numbers<[1], [0], [0], [1], [0, 0, 1, 1], [], []>} : vector<16x256xbf16>, vector<256x896xbf16>, vector<16x896xf32> -> vector<16x896xf32>
    %c0_19 = arith.constant 0 : index
    %c0_20 = arith.constant 0 : index
    %20 = vector.load %arg14[%c0_19, %c0_20] : memref<16x896xf32, #tpu.memory_space<vmem>>, vector<16x896xf32>
    %21 = arith.addf %19, %20 : vector<16x896xf32>
    %c0_21 = arith.constant 0 : index
    %c0_22 = arith.constant 0 : index
    %22 = vector.load %arg12[%c0_21, %c0_22] : memref<96x384xf32, #tpu.memory_space<vmem>>, vector<16x384xf32>
    %23 = vector.extract_strided_slice %22 {offsets = [0, 0], sizes = [16, 256], strides = [1, 1]} : vector<16x384xf32> to vector<16x256xf32>
    %24 = vector.extract_strided_slice %21 {offsets = [0, 0], sizes = [16, 256], strides = [1, 1]} : vector<16x896xf32> to vector<16x256xf32>
    %25 = arith.addf %23, %24 : vector<16x256xf32>
    %26 = arith.negf %25 : vector<16x256xf32>
    %27 = math.exp %26 : vector<16x256xf32>
    %cst_23 = arith.constant 1.000000e+00 : f32
    %28 = vector.broadcast %cst_23 : f32 to vector<16x256xf32>
    %29 = arith.addf %28, %27 : vector<16x256xf32>
    %30 = arith.divf %28, %29 : vector<16x256xf32>
    %31 = vector.extract_strided_slice %22 {offsets = [0, 256], sizes = [16, 128], strides = [1, 1]} : vector<16x384xf32> to vector<16x128xf32>
    %32 = vector.extract_strided_slice %30 {offsets = [0, 0], sizes = [16, 128], strides = [1, 1]} : vector<16x256xf32> to vector<16x128xf32>
    %33 = vector.extract_strided_slice %21 {offsets = [0, 256], sizes = [16, 128], strides = [1, 1]} : vector<16x896xf32> to vector<16x128xf32>
    %34 = arith.mulf %32, %33 : vector<16x128xf32>
    %35 = arith.addf %31, %34 : vector<16x128xf32>
    %36 = math.tanh %35 : vector<16x128xf32>
    %37 = vector.extract_strided_slice %30 {offsets = [0, 128], sizes = [16, 128], strides = [1, 1]} : vector<16x256xf32> to vector<16x128xf32>
    %cst_24 = arith.constant 1.000000e+00 : f32
    %38 = vector.broadcast %cst_24 : f32 to vector<16x128xf32>
    %39 = arith.subf %38, %37 : vector<16x128xf32>
    %40 = arith.mulf %39, %36 : vector<16x128xf32>
    %41 = arith.mulf %37, %14 : vector<16x128xf32>
    %42 = arith.addf %40, %41 : vector<16x128xf32>
    %c1_i32 = arith.constant 1 : i32
    %43 = tpu.concatenate %42, %15 in 1 : vector<16x128xf32>, vector<16x128xf32> -> vector<16x256xf32>
    %44 = arith.truncf %43 : vector<16x256xf32> to vector<16x256xbf16>
    %c0_25 = arith.constant 0 : index
    %c0_26 = arith.constant 0 : index
    %45 = vector.load %arg5[%c0_25, %c0_26] : memref<256x896xbf16, #tpu.memory_space<vmem>>, vector<256x896xbf16>
    %cst_27 = arith.constant dense<0.000000e+00> : vector<16x896xf32>
    %46 = tpu.matmul %44, %45, %cst_27 {dimension_numbers = #tpu.dot_dimension_numbers<[1], [0], [0], [1], [0, 0, 1, 1], [], []>} : vector<16x256xbf16>, vector<256x896xbf16>, vector<16x896xf32> -> vector<16x896xf32>
    %c0_28 = arith.constant 0 : index
    %c0_29 = arith.constant 0 : index
    %47 = vector.load %arg14[%c0_28, %c0_29] : memref<16x896xf32, #tpu.memory_space<vmem>>, vector<16x896xf32>
    %48 = arith.addf %46, %47 : vector<16x896xf32>
    %c1_i32_30 = arith.constant 1 : i32
    %49 = arith.subi %c1_i32, %c1_i32_30 : i32
    %50 = vector.extract_strided_slice %48 {offsets = [0, 384], sizes = [16, 256], strides = [1, 1]} : vector<16x896xf32> to vector<16x256xf32>
    %51 = arith.negf %50 : vector<16x256xf32>
    %52 = math.exp %51 : vector<16x256xf32>
    %cst_31 = arith.constant 1.000000e+00 : f32
    %53 = vector.broadcast %cst_31 : f32 to vector<16x256xf32>
    %54 = arith.addf %53, %52 : vector<16x256xf32>
    %55 = arith.divf %53, %54 : vector<16x256xf32>
    %56 = vector.extract_strided_slice %48 {offsets = [0, 640], sizes = [16, 128], strides = [1, 1]} : vector<16x896xf32> to vector<16x128xf32>
    %57 = vector.extract_strided_slice %55 {offsets = [0, 0], sizes = [16, 128], strides = [1, 1]} : vector<16x256xf32> to vector<16x128xf32>
    %58 = vector.extract_strided_slice %48 {offsets = [0, 768], sizes = [16, 128], strides = [1, 1]} : vector<16x896xf32> to vector<16x128xf32>
    %59 = arith.mulf %57, %58 : vector<16x128xf32>
    %60 = arith.addf %56, %59 : vector<16x128xf32>
    %61 = math.tanh %60 : vector<16x128xf32>
    %62 = vector.extract_strided_slice %55 {offsets = [0, 128], sizes = [16, 128], strides = [1, 1]} : vector<16x256xf32> to vector<16x128xf32>
    %cst_32 = arith.constant 1.000000e+00 : f32
    %63 = vector.broadcast %cst_32 : f32 to vector<16x128xf32>
    %64 = arith.subf %63, %62 : vector<16x128xf32>
    %65 = arith.mulf %64, %61 : vector<16x128xf32>
    %66 = arith.mulf %62, %15 : vector<16x128xf32>
    %67 = arith.addf %65, %66 : vector<16x128xf32>
    %c16_i32 = arith.constant 16 : i32
    %68 = arith.muli %49, %c16_i32 : i32
    %69 = tpu.assume_multiple %68, 16 : i32
    %70 = arith.index_cast %69 : i32 to index
    %c0_33 = arith.constant 0 : index
    %71 = vector.load %arg13[%70, %c0_33] : memref<96x128xf32, #tpu.memory_space<vmem>>, vector<16x128xf32>
    tpu.vector_store %arg13[%70, %c0_33], %67 {strides = array<i32>} : memref<96x128xf32, #tpu.memory_space<vmem>>, vector<16x128xf32>,
    %c16_i32_34 = arith.constant 16 : i32
    %72 = arith.muli %c1_i32, %c16_i32_34 : i32
    %73 = tpu.assume_multiple %72, 16 : i32
    %74 = arith.index_cast %73 : i32 to index
    %c0_35 = arith.constant 0 : index
    %75 = vector.load %arg12[%74, %c0_35] : memref<96x384xf32, #tpu.memory_space<vmem>>, vector<16x384xf32>
    %76 = vector.extract_strided_slice %75 {offsets = [0, 0], sizes = [16, 256], strides = [1, 1]} : vector<16x384xf32> to vector<16x256xf32>
    %77 = vector.extract_strided_slice %48 {offsets = [0, 0], sizes = [16, 256], strides = [1, 1]} : vector<16x896xf32> to vector<16x256xf32>
    %78 = arith.addf %76, %77 : vector<16x256xf32>
    %79 = arith.negf %78 : vector<16x256xf32>
    %80 = math.exp %79 : vector<16x256xf32>
    %cst_36 = arith.constant 1.000000e+00 : f32
    %81 = vector.broadcast %cst_36 : f32 to vector<16x256xf32>
    %82 = arith.addf %81, %80 : vector<16x256xf32>
    %83 = arith.divf %81, %82 : vector<16x256xf32>
    %84 = vector.extract_strided_slice %75 {offsets = [0, 256], sizes = [16, 128], strides = [1, 1]} : vector<16x384xf32> to vector<16x128xf32>
    %85 = vector.extract_strided_slice %83 {offsets = [0, 0], sizes = [16, 128], strides = [1, 1]} : vector<16x256xf32> to vector<16x128xf32>
    %86 = vector.extract_strided_slice %48 {offsets = [0, 256], sizes = [16, 128], strides = [1, 1]} : vector<16x896xf32> to vector<16x128xf32>
    %87 = arith.mulf %85, %86 : vector<16x128xf32>
    %88 = arith.addf %84, %87 : vector<16x128xf32>
    %89 = math.tanh %88 : vector<16x128xf32>
    %90 = vector.extract_strided_slice %83 {offsets = [0, 128], sizes = [16, 128], strides = [1, 1]} : vector<16x256xf32> to vector<16x128xf32>
    %cst_37 = arith.constant 1.000000e+00 : f32
    %91 = vector.broadcast %cst_37 : f32 to vector<16x128xf32>
    %92 = arith.subf %91, %90 : vector<16x128xf32>
    %93 = arith.mulf %92, %89 : vector<16x128xf32>
    %94 = arith.mulf %90, %42 : vector<16x128xf32>
    %95 = arith.addf %93, %94 : vector<16x128xf32>
    %c2_i32 = arith.constant 2 : i32
    %96 = tpu.concatenate %95, %67 in 1 : vector<16x128xf32>, vector<16x128xf32> -> vector<16x256xf32>
    %97 = arith.truncf %96 : vector<16x256xf32> to vector<16x256xbf16>
    %c0_38 = arith.constant 0 : index
    %c0_39 = arith.constant 0 : index
    %98 = vector.load %arg5[%c0_38, %c0_39] : memref<256x896xbf16, #tpu.memory_space<vmem>>, vector<256x896xbf16>
    %cst_40 = arith.constant dense<0.000000e+00> : vector<16x896xf32>
    %99 = tpu.matmul %97, %98, %cst_40 {dimension_numbers = #tpu.dot_dimension_numbers<[1], [0], [0], [1], [0, 0, 1, 1], [], []>} : vector<16x256xbf16>, vector<256x896xbf16>, vector<16x896xf32> -> vector<16x896xf32>
    %c0_41 = arith.constant 0 : index
    %c0_42 = arith.constant 0 : index
    %100 = vector.load %arg14[%c0_41, %c0_42] : memref<16x896xf32, #tpu.memory_space<vmem>>, vector<16x896xf32>
    %101 = arith.addf %99, %100 : vector<16x896xf32>
    %c1_i32_43 = arith.constant 1 : i32
    %102 = arith.subi %c2_i32, %c1_i32_43 : i32
    %103 = vector.extract_strided_slice %101 {offsets = [0, 384], sizes = [16, 256], strides = [1, 1]} : vector<16x896xf32> to vector<16x256xf32>
    %104 = arith.negf %103 : vector<16x256xf32>
    %105 = math.exp %104 : vector<16x256xf32>
    %cst_44 = arith.constant 1.000000e+00 : f32
    %106 = vector.broadcast %cst_44 : f32 to vector<16x256xf32>
    %107 = arith.addf %106, %105 : vector<16x256xf32>
    %108 = arith.divf %106, %107 : vector<16x256xf32>
    %109 = vector.extract_strided_slice %101 {offsets = [0, 640], sizes = [16, 128], strides = [1, 1]} : vector<16x896xf32> to vector<16x128xf32>
    %110 = vector.extract_strided_slice %108 {offsets = [0, 0], sizes = [16, 128], strides = [1, 1]} : vector<16x256xf32> to vector<16x128xf32>
    %111 = vector.extract_strided_slice %101 {offsets = [0, 768], sizes = [16, 128], strides = [1, 1]} : vector<16x896xf32> to vector<16x128xf32>
    %112 = arith.mulf %110, %111 : vector<16x128xf32>
    %113 = arith.addf %109, %112 : vector<16x128xf32>
    %114 = math.tanh %113 : vector<16x128xf32>
    %115 = vector.extract_strided_slice %108 {offsets = [0, 128], sizes = [16, 128], strides = [1, 1]} : vector<16x256xf32> to vector<16x128xf32>
    %cst_45 = arith.constant 1.000000e+00 : f32
    %116 = vector.broadcast %cst_45 : f32 to vector<16x128xf32>
    %117 = arith.subf %116, %115 : vector<16x128xf32>
    %118 = arith.mulf %117, %114 : vector<16x128xf32>
    %119 = arith.mulf %115, %67 : vector<16x128xf32>
    %120 = arith.addf %118, %119 : vector<16x128xf32>
    %c16_i32_46 = arith.constant 16 : i32
    %121 = arith.muli %102, %c16_i32_46 : i32
    %122 = tpu.assume_multiple %121, 16 : i32
    %123 = arith.index_cast %122 : i32 to index
    %c0_47 = arith.constant 0 : index
    %124 = vector.load %arg13[%123, %c0_47] : memref<96x128xf32, #tpu.memory_space<vmem>>, vector<16x128xf32>
    tpu.vector_store %arg13[%123, %c0_47], %120 {strides = array<i32>} : memref<96x128xf32, #tpu.memory_space<vmem>>, vector<16x128xf32>,
    %c16_i32_48 = arith.constant 16 : i32
    %125 = arith.muli %c2_i32, %c16_i32_48 : i32
    %126 = tpu.assume_multiple %125, 16 : i32
    %127 = arith.index_cast %126 : i32 to index
    %c0_49 = arith.constant 0 : index
    %128 = vector.load %arg12[%127, %c0_49] : memref<96x384xf32, #tpu.memory_space<vmem>>, vector<16x384xf32>
    %129 = vector.extract_strided_slice %128 {offsets = [0, 0], sizes = [16, 256], strides = [1, 1]} : vector<16x384xf32> to vector<16x256xf32>
    %130 = vector.extract_strided_slice %101 {offsets = [0, 0], sizes = [16, 256], strides = [1, 1]} : vector<16x896xf32> to vector<16x256xf32>
    %131 = arith.addf %129, %130 : vector<16x256xf32>
    %132 = arith.negf %131 : vector<16x256xf32>
    %133 = math.exp %132 : vector<16x256xf32>
    %cst_50 = arith.constant 1.000000e+00 : f32
    %134 = vector.broadcast %cst_50 : f32 to vector<16x256xf32>
    %135 = arith.addf %134, %133 : vector<16x256xf32>
    %136 = arith.divf %134, %135 : vector<16x256xf32>
    %137 = vector.extract_strided_slice %128 {offsets = [0, 256], sizes = [16, 128], strides = [1, 1]} : vector<16x384xf32> to vector<16x128xf32>
    %138 = vector.extract_strided_slice %136 {offsets = [0, 0], sizes = [16, 128], strides = [1, 1]} : vector<16x256xf32> to vector<16x128xf32>
    %139 = vector.extract_strided_slice %101 {offsets = [0, 256], sizes = [16, 128], strides = [1, 1]} : vector<16x896xf32> to vector<16x128xf32>
    %140 = arith.mulf %138, %139 : vector<16x128xf32>
    %141 = arith.addf %137, %140 : vector<16x128xf32>
    %142 = math.tanh %141 : vector<16x128xf32>
    %143 = vector.extract_strided_slice %136 {offsets = [0, 128], sizes = [16, 128], strides = [1, 1]} : vector<16x256xf32> to vector<16x128xf32>
    %cst_51 = arith.constant 1.000000e+00 : f32
    %144 = vector.broadcast %cst_51 : f32 to vector<16x128xf32>
    %145 = arith.subf %144, %143 : vector<16x128xf32>
    %146 = arith.mulf %145, %142 : vector<16x128xf32>
    %147 = arith.mulf %143, %95 : vector<16x128xf32>
    %148 = arith.addf %146, %147 : vector<16x128xf32>
    %c3_i32 = arith.constant 3 : i32
    %149 = tpu.concatenate %148, %120 in 1 : vector<16x128xf32>, vector<16x128xf32> -> vector<16x256xf32>
    %150 = arith.truncf %149 : vector<16x256xf32> to vector<16x256xbf16>
    %c0_52 = arith.constant 0 : index
    %c0_53 = arith.constant 0 : index
    %151 = vector.load %arg5[%c0_52, %c0_53] : memref<256x896xbf16, #tpu.memory_space<vmem>>, vector<256x896xbf16>
    %cst_54 = arith.constant dense<0.000000e+00> : vector<16x896xf32>
    %152 = tpu.matmul %150, %151, %cst_54 {dimension_numbers = #tpu.dot_dimension_numbers<[1], [0], [0], [1], [0, 0, 1, 1], [], []>} : vector<16x256xbf16>, vector<256x896xbf16>, vector<16x896xf32> -> vector<16x896xf32>
    %c0_55 = arith.constant 0 : index
    %c0_56 = arith.constant 0 : index
    %153 = vector.load %arg14[%c0_55, %c0_56] : memref<16x896xf32, #tpu.memory_space<vmem>>, vector<16x896xf32>
    %154 = arith.addf %152, %153 : vector<16x896xf32>
    %c1_i32_57 = arith.constant 1 : i32
    %155 = arith.subi %c3_i32, %c1_i32_57 : i32
    %156 = vector.extract_strided_slice %154 {offsets = [0, 384], sizes = [16, 256], strides = [1, 1]} : vector<16x896xf32> to vector<16x256xf32>
    %157 = arith.negf %156 : vector<16x256xf32>
    %158 = math.exp %157 : vector<16x256xf32>
    %cst_58 = arith.constant 1.000000e+00 : f32
    %159 = vector.broadcast %cst_58 : f32 to vector<16x256xf32>
    %160 = arith.addf %159, %158 : vector<16x256xf32>
    %161 = arith.divf %159, %160 : vector<16x256xf32>
    %162 = vector.extract_strided_slice %154 {offsets = [0, 640], sizes = [16, 128], strides = [1, 1]} : vector<16x896xf32> to vector<16x128xf32>
    %163 = vector.extract_strided_slice %161 {offsets = [0, 0], sizes = [16, 128], strides = [1, 1]} : vector<16x256xf32> to vector<16x128xf32>
    %164 = vector.extract_strided_slice %154 {offsets = [0, 768], sizes = [16, 128], strides = [1, 1]} : vector<16x896xf32> to vector<16x128xf32>
    %165 = arith.mulf %163, %164 : vector<16x128xf32>
    %166 = arith.addf %162, %165 : vector<16x128xf32>
    %167 = math.tanh %166 : vector<16x128xf32>
    %168 = vector.extract_strided_slice %161 {offsets = [0, 128], sizes = [16, 128], strides = [1, 1]} : vector<16x256xf32> to vector<16x128xf32>
    %cst_59 = arith.constant 1.000000e+00 : f32
    %169 = vector.broadcast %cst_59 : f32 to vector<16x128xf32>
    %170 = arith.subf %169, %168 : vector<16x128xf32>
    %171 = arith.mulf %170, %167 : vector<16x128xf32>
    %172 = arith.mulf %168, %120 : vector<16x128xf32>
    %173 = arith.addf %171, %172 : vector<16x128xf32>
    %c16_i32_60 = arith.constant 16 : i32
    %174 = arith.muli %155, %c16_i32_60 : i32
    %175 = tpu.assume_multiple %174, 16 : i32
    %176 = arith.index_cast %175 : i32 to index
    %c0_61 = arith.constant 0 : index
    %177 = vector.load %arg13[%176, %c0_61] : memref<96x128xf32, #tpu.memory_space<vmem>>, vector<16x128xf32>
    tpu.vector_store %arg13[%176, %c0_61], %173 {strides = array<i32>} : memref<96x128xf32, #tpu.memory_space<vmem>>, vector<16x128xf32>,
    %c16_i32_62 = arith.constant 16 : i32
    %178 = arith.muli %c3_i32, %c16_i32_62 : i32
    %179 = tpu.assume_multiple %178, 16 : i32
    %180 = arith.index_cast %179 : i32 to index
    %c0_63 = arith.constant 0 : index
    %181 = vector.load %arg12[%180, %c0_63] : memref<96x384xf32, #tpu.memory_space<vmem>>, vector<16x384xf32>
    %182 = vector.extract_strided_slice %181 {offsets = [0, 0], sizes = [16, 256], strides = [1, 1]} : vector<16x384xf32> to vector<16x256xf32>
    %183 = vector.extract_strided_slice %154 {offsets = [0, 0], sizes = [16, 256], strides = [1, 1]} : vector<16x896xf32> to vector<16x256xf32>
    %184 = arith.addf %182, %183 : vector<16x256xf32>
    %185 = arith.negf %184 : vector<16x256xf32>
    %186 = math.exp %185 : vector<16x256xf32>
    %cst_64 = arith.constant 1.000000e+00 : f32
    %187 = vector.broadcast %cst_64 : f32 to vector<16x256xf32>
    %188 = arith.addf %187, %186 : vector<16x256xf32>
    %189 = arith.divf %187, %188 : vector<16x256xf32>
    %190 = vector.extract_strided_slice %181 {offsets = [0, 256], sizes = [16, 128], strides = [1, 1]} : vector<16x384xf32> to vector<16x128xf32>
    %191 = vector.extract_strided_slice %189 {offsets = [0, 0], sizes = [16, 128], strides = [1, 1]} : vector<16x256xf32> to vector<16x128xf32>
    %192 = vector.extract_strided_slice %154 {offsets = [0, 256], sizes = [16, 128], strides = [1, 1]} : vector<16x896xf32> to vector<16x128xf32>
    %193 = arith.mulf %191, %192 : vector<16x128xf32>
    %194 = arith.addf %190, %193 : vector<16x128xf32>
    %195 = math.tanh %194 : vector<16x128xf32>
    %196 = vector.extract_strided_slice %189 {offsets = [0, 128], sizes = [16, 128], strides = [1, 1]} : vector<16x256xf32> to vector<16x128xf32>
    %cst_65 = arith.constant 1.000000e+00 : f32
    %197 = vector.broadcast %cst_65 : f32 to vector<16x128xf32>
    %198 = arith.subf %197, %196 : vector<16x128xf32>
    %199 = arith.mulf %198, %195 : vector<16x128xf32>
    %200 = arith.mulf %196, %148 : vector<16x128xf32>
    %201 = arith.addf %199, %200 : vector<16x128xf32>
    %c4_i32 = arith.constant 4 : i32
    %202 = tpu.concatenate %201, %173 in 1 : vector<16x128xf32>, vector<16x128xf32> -> vector<16x256xf32>
    %203 = arith.truncf %202 : vector<16x256xf32> to vector<16x256xbf16>
    %c0_66 = arith.constant 0 : index
    %c0_67 = arith.constant 0 : index
    %204 = vector.load %arg5[%c0_66, %c0_67] : memref<256x896xbf16, #tpu.memory_space<vmem>>, vector<256x896xbf16>
    %cst_68 = arith.constant dense<0.000000e+00> : vector<16x896xf32>
    %205 = tpu.matmul %203, %204, %cst_68 {dimension_numbers = #tpu.dot_dimension_numbers<[1], [0], [0], [1], [0, 0, 1, 1], [], []>} : vector<16x256xbf16>, vector<256x896xbf16>, vector<16x896xf32> -> vector<16x896xf32>
    %c0_69 = arith.constant 0 : index
    %c0_70 = arith.constant 0 : index
    %206 = vector.load %arg14[%c0_69, %c0_70] : memref<16x896xf32, #tpu.memory_space<vmem>>, vector<16x896xf32>
    %207 = arith.addf %205, %206 : vector<16x896xf32>
    %c1_i32_71 = arith.constant 1 : i32
    %208 = arith.subi %c4_i32, %c1_i32_71 : i32
    %209 = vector.extract_strided_slice %207 {offsets = [0, 384], sizes = [16, 256], strides = [1, 1]} : vector<16x896xf32> to vector<16x256xf32>
    %210 = arith.negf %209 : vector<16x256xf32>
    %211 = math.exp %210 : vector<16x256xf32>
    %cst_72 = arith.constant 1.000000e+00 : f32
    %212 = vector.broadcast %cst_72 : f32 to vector<16x256xf32>
    %213 = arith.addf %212, %211 : vector<16x256xf32>
    %214 = arith.divf %212, %213 : vector<16x256xf32>
    %215 = vector.extract_strided_slice %207 {offsets = [0, 640], sizes = [16, 128], strides = [1, 1]} : vector<16x896xf32> to vector<16x128xf32>
    %216 = vector.extract_strided_slice %214 {offsets = [0, 0], sizes = [16, 128], strides = [1, 1]} : vector<16x256xf32> to vector<16x128xf32>
    %217 = vector.extract_strided_slice %207 {offsets = [0, 768], sizes = [16, 128], strides = [1, 1]} : vector<16x896xf32> to vector<16x128xf32>
    %218 = arith.mulf %216, %217 : vector<16x128xf32>
    %219 = arith.addf %215, %218 : vector<16x128xf32>
    %220 = math.tanh %219 : vector<16x128xf32>
    %221 = vector.extract_strided_slice %214 {offsets = [0, 128], sizes = [16, 128], strides = [1, 1]} : vector<16x256xf32> to vector<16x128xf32>
    %cst_73 = arith.constant 1.000000e+00 : f32
    %222 = vector.broadcast %cst_73 : f32 to vector<16x128xf32>
    %223 = arith.subf %222, %221 : vector<16x128xf32>
    %224 = arith.mulf %223, %220 : vector<16x128xf32>
    %225 = arith.mulf %221, %173 : vector<16x128xf32>
    %226 = arith.addf %224, %225 : vector<16x128xf32>
    %c16_i32_74 = arith.constant 16 : i32
    %227 = arith.muli %208, %c16_i32_74 : i32
    %228 = tpu.assume_multiple %227, 16 : i32
    %229 = arith.index_cast %228 : i32 to index
    %c0_75 = arith.constant 0 : index
    %230 = vector.load %arg13[%229, %c0_75] : memref<96x128xf32, #tpu.memory_space<vmem>>, vector<16x128xf32>
    tpu.vector_store %arg13[%229, %c0_75], %226 {strides = array<i32>} : memref<96x128xf32, #tpu.memory_space<vmem>>, vector<16x128xf32>,
    %c16_i32_76 = arith.constant 16 : i32
    %231 = arith.muli %c4_i32, %c16_i32_76 : i32
    %232 = tpu.assume_multiple %231, 16 : i32
    %233 = arith.index_cast %232 : i32 to index
    %c0_77 = arith.constant 0 : index
    %234 = vector.load %arg12[%233, %c0_77] : memref<96x384xf32, #tpu.memory_space<vmem>>, vector<16x384xf32>
    %235 = vector.extract_strided_slice %234 {offsets = [0, 0], sizes = [16, 256], strides = [1, 1]} : vector<16x384xf32> to vector<16x256xf32>
    %236 = vector.extract_strided_slice %207 {offsets = [0, 0], sizes = [16, 256], strides = [1, 1]} : vector<16x896xf32> to vector<16x256xf32>
    %237 = arith.addf %235, %236 : vector<16x256xf32>
    %238 = arith.negf %237 : vector<16x256xf32>
    %239 = math.exp %238 : vector<16x256xf32>
    %cst_78 = arith.constant 1.000000e+00 : f32
    %240 = vector.broadcast %cst_78 : f32 to vector<16x256xf32>
    %241 = arith.addf %240, %239 : vector<16x256xf32>
    %242 = arith.divf %240, %241 : vector<16x256xf32>
    %243 = vector.extract_strided_slice %234 {offsets = [0, 256], sizes = [16, 128], strides = [1, 1]} : vector<16x384xf32> to vector<16x128xf32>
    %244 = vector.extract_strided_slice %242 {offsets = [0, 0], sizes = [16, 128], strides = [1, 1]} : vector<16x256xf32> to vector<16x128xf32>
    %245 = vector.extract_strided_slice %207 {offsets = [0, 256], sizes = [16, 128], strides = [1, 1]} : vector<16x896xf32> to vector<16x128xf32>
    %246 = arith.mulf %244, %245 : vector<16x128xf32>
    %247 = arith.addf %243, %246 : vector<16x128xf32>
    %248 = math.tanh %247 : vector<16x128xf32>
    %249 = vector.extract_strided_slice %242 {offsets = [0, 128], sizes = [16, 128], strides = [1, 1]} : vector<16x256xf32> to vector<16x128xf32>
    %cst_79 = arith.constant 1.000000e+00 : f32
    %250 = vector.broadcast %cst_79 : f32 to vector<16x128xf32>
    %251 = arith.subf %250, %249 : vector<16x128xf32>
    %252 = arith.mulf %251, %248 : vector<16x128xf32>
    %253 = arith.mulf %249, %201 : vector<16x128xf32>
    %254 = arith.addf %252, %253 : vector<16x128xf32>
    %c5_i32 = arith.constant 5 : i32
    %255 = tpu.concatenate %254, %226 in 1 : vector<16x128xf32>, vector<16x128xf32> -> vector<16x256xf32>
    %256 = arith.truncf %255 : vector<16x256xf32> to vector<16x256xbf16>
    %c0_80 = arith.constant 0 : index
    %c0_81 = arith.constant 0 : index
    %257 = vector.load %arg5[%c0_80, %c0_81] : memref<256x896xbf16, #tpu.memory_space<vmem>>, vector<256x896xbf16>
    %cst_82 = arith.constant dense<0.000000e+00> : vector<16x896xf32>
    %258 = tpu.matmul %256, %257, %cst_82 {dimension_numbers = #tpu.dot_dimension_numbers<[1], [0], [0], [1], [0, 0, 1, 1], [], []>} : vector<16x256xbf16>, vector<256x896xbf16>, vector<16x896xf32> -> vector<16x896xf32>
    %c0_83 = arith.constant 0 : index
    %c0_84 = arith.constant 0 : index
    %259 = vector.load %arg14[%c0_83, %c0_84] : memref<16x896xf32, #tpu.memory_space<vmem>>, vector<16x896xf32>
    %260 = arith.addf %258, %259 : vector<16x896xf32>
    %c1_i32_85 = arith.constant 1 : i32
    %261 = arith.subi %c5_i32, %c1_i32_85 : i32
    %262 = vector.extract_strided_slice %260 {offsets = [0, 384], sizes = [16, 256], strides = [1, 1]} : vector<16x896xf32> to vector<16x256xf32>
    %263 = arith.negf %262 : vector<16x256xf32>
    %264 = math.exp %263 : vector<16x256xf32>
    %cst_86 = arith.constant 1.000000e+00 : f32
    %265 = vector.broadcast %cst_86 : f32 to vector<16x256xf32>
    %266 = arith.addf %265, %264 : vector<16x256xf32>
    %267 = arith.divf %265, %266 : vector<16x256xf32>
    %268 = vector.extract_strided_slice %260 {offsets = [0, 640], sizes = [16, 128], strides = [1, 1]} : vector<16x896xf32> to vector<16x128xf32>
    %269 = vector.extract_strided_slice %267 {offsets = [0, 0], sizes = [16, 128], strides = [1, 1]} : vector<16x256xf32> to vector<16x128xf32>
    %270 = vector.extract_strided_slice %260 {offsets = [0, 768], sizes = [16, 128], strides = [1, 1]} : vector<16x896xf32> to vector<16x128xf32>
    %271 = arith.mulf %269, %270 : vector<16x128xf32>
    %272 = arith.addf %268, %271 : vector<16x128xf32>
    %273 = math.tanh %272 : vector<16x128xf32>
    %274 = vector.extract_strided_slice %267 {offsets = [0, 128], sizes = [16, 128], strides = [1, 1]} : vector<16x256xf32> to vector<16x128xf32>
    %cst_87 = arith.constant 1.000000e+00 : f32
    %275 = vector.broadcast %cst_87 : f32 to vector<16x128xf32>
    %276 = arith.subf %275, %274 : vector<16x128xf32>
    %277 = arith.mulf %276, %273 : vector<16x128xf32>
    %278 = arith.mulf %274, %226 : vector<16x128xf32>
    %279 = arith.addf %277, %278 : vector<16x128xf32>
    %c16_i32_88 = arith.constant 16 : i32
    %280 = arith.muli %261, %c16_i32_88 : i32
    %281 = tpu.assume_multiple %280, 16 : i32
    %282 = arith.index_cast %281 : i32 to index
    %c0_89 = arith.constant 0 : index
    %283 = vector.load %arg13[%282, %c0_89] : memref<96x128xf32, #tpu.memory_space<vmem>>, vector<16x128xf32>
    tpu.vector_store %arg13[%282, %c0_89], %279 {strides = array<i32>} : memref<96x128xf32, #tpu.memory_space<vmem>>, vector<16x128xf32>,
    %c16_i32_90 = arith.constant 16 : i32
    %284 = arith.muli %c5_i32, %c16_i32_90 : i32
    %285 = tpu.assume_multiple %284, 16 : i32
    %286 = arith.index_cast %285 : i32 to index
    %c0_91 = arith.constant 0 : index
    %287 = vector.load %arg12[%286, %c0_91] : memref<96x384xf32, #tpu.memory_space<vmem>>, vector<16x384xf32>
    %288 = vector.extract_strided_slice %287 {offsets = [0, 0], sizes = [16, 256], strides = [1, 1]} : vector<16x384xf32> to vector<16x256xf32>
    %289 = vector.extract_strided_slice %260 {offsets = [0, 0], sizes = [16, 256], strides = [1, 1]} : vector<16x896xf32> to vector<16x256xf32>
    %290 = arith.addf %288, %289 : vector<16x256xf32>
    %291 = arith.negf %290 : vector<16x256xf32>
    %292 = math.exp %291 : vector<16x256xf32>
    %cst_92 = arith.constant 1.000000e+00 : f32
    %293 = vector.broadcast %cst_92 : f32 to vector<16x256xf32>
    %294 = arith.addf %293, %292 : vector<16x256xf32>
    %295 = arith.divf %293, %294 : vector<16x256xf32>
    %296 = vector.extract_strided_slice %287 {offsets = [0, 256], sizes = [16, 128], strides = [1, 1]} : vector<16x384xf32> to vector<16x128xf32>
    %297 = vector.extract_strided_slice %295 {offsets = [0, 0], sizes = [16, 128], strides = [1, 1]} : vector<16x256xf32> to vector<16x128xf32>
    %298 = vector.extract_strided_slice %260 {offsets = [0, 256], sizes = [16, 128], strides = [1, 1]} : vector<16x896xf32> to vector<16x128xf32>
    %299 = arith.mulf %297, %298 : vector<16x128xf32>
    %300 = arith.addf %296, %299 : vector<16x128xf32>
    %301 = math.tanh %300 : vector<16x128xf32>
    %302 = vector.extract_strided_slice %295 {offsets = [0, 128], sizes = [16, 128], strides = [1, 1]} : vector<16x256xf32> to vector<16x128xf32>
    %cst_93 = arith.constant 1.000000e+00 : f32
    %303 = vector.broadcast %cst_93 : f32 to vector<16x128xf32>
    %304 = arith.subf %303, %302 : vector<16x128xf32>
    %305 = arith.mulf %304, %301 : vector<16x128xf32>
    %306 = arith.mulf %302, %254 : vector<16x128xf32>
    %307 = arith.addf %305, %306 : vector<16x128xf32>
    %c5_i32_94 = arith.constant 5 : i32
    %308 = tpu.concatenate %307, %279 in 1 : vector<16x128xf32>, vector<16x128xf32> -> vector<16x256xf32>
    %309 = arith.truncf %308 : vector<16x256xf32> to vector<16x256xbf16>
    %c0_95 = arith.constant 0 : index
    %c0_96 = arith.constant 0 : index
    %310 = vector.load %arg5[%c0_95, %c0_96] : memref<256x896xbf16, #tpu.memory_space<vmem>>, vector<256x896xbf16>
    %cst_97 = arith.constant dense<0.000000e+00> : vector<16x896xf32>
    %311 = tpu.matmul %309, %310, %cst_97 {dimension_numbers = #tpu.dot_dimension_numbers<[1], [0], [0], [1], [0, 0, 1, 1], [], []>} : vector<16x256xbf16>, vector<256x896xbf16>, vector<16x896xf32> -> vector<16x896xf32>
    %c0_98 = arith.constant 0 : index
    %c0_99 = arith.constant 0 : index
    %312 = vector.load %arg14[%c0_98, %c0_99] : memref<16x896xf32, #tpu.memory_space<vmem>>, vector<16x896xf32>
    %313 = arith.addf %311, %312 : vector<16x896xf32>
    %314 = vector.extract_strided_slice %313 {offsets = [0, 384], sizes = [16, 256], strides = [1, 1]} : vector<16x896xf32> to vector<16x256xf32>
    %315 = arith.negf %314 : vector<16x256xf32>
    %316 = math.exp %315 : vector<16x256xf32>
    %cst_100 = arith.constant 1.000000e+00 : f32
    %317 = vector.broadcast %cst_100 : f32 to vector<16x256xf32>
    %318 = arith.addf %317, %316 : vector<16x256xf32>
    %319 = arith.divf %317, %318 : vector<16x256xf32>
    %320 = vector.extract_strided_slice %313 {offsets = [0, 640], sizes = [16, 128], strides = [1, 1]} : vector<16x896xf32> to vector<16x128xf32>
    %321 = vector.extract_strided_slice %319 {offsets = [0, 0], sizes = [16, 128], strides = [1, 1]} : vector<16x256xf32> to vector<16x128xf32>
    %322 = vector.extract_strided_slice %313 {offsets = [0, 768], sizes = [16, 128], strides = [1, 1]} : vector<16x896xf32> to vector<16x128xf32>
    %323 = arith.mulf %321, %322 : vector<16x128xf32>
    %324 = arith.addf %320, %323 : vector<16x128xf32>
    %325 = math.tanh %324 : vector<16x128xf32>
    %326 = vector.extract_strided_slice %319 {offsets = [0, 128], sizes = [16, 128], strides = [1, 1]} : vector<16x256xf32> to vector<16x128xf32>
    %cst_101 = arith.constant 1.000000e+00 : f32
    %327 = vector.broadcast %cst_101 : f32 to vector<16x128xf32>
    %328 = arith.subf %327, %326 : vector<16x128xf32>
    %329 = arith.mulf %328, %325 : vector<16x128xf32>
    %330 = arith.mulf %326, %279 : vector<16x128xf32>
    %331 = arith.addf %329, %330 : vector<16x128xf32>
    %c80 = arith.constant 80 : index
    %c0_102 = arith.constant 0 : index
    %332 = vector.load %arg13[%c80, %c0_102] : memref<96x128xf32, #tpu.memory_space<vmem>>, vector<16x128xf32>
    tpu.vector_store %arg13[%c80, %c0_102], %331 {strides = array<i32>} : memref<96x128xf32, #tpu.memory_space<vmem>>, vector<16x128xf32>,
    %c0_103 = arith.constant 0 : index
    %c0_104 = arith.constant 0 : index
    %333 = vector.load %arg10[%c0_103, %c0_104] : memref<16x128xf32, #tpu.memory_space<vmem>>, vector<16x128xf32>
    tpu.vector_store %arg10[%c0_103, %c0_104], %307 {strides = array<i32>} : memref<16x128xf32, #tpu.memory_space<vmem>>, vector<16x128xf32>,
    %c0_105 = arith.constant 0 : index
    %c0_106 = arith.constant 0 : index
    %334 = vector.load %arg11[%c0_105, %c0_106] : memref<16x128xf32, #tpu.memory_space<vmem>>, vector<16x128xf32>
    tpu.vector_store %arg11[%c0_105, %c0_106], %331 {strides = array<i32>} : memref<16x128xf32, #tpu.memory_space<vmem>>, vector<16x128xf32>,
    %c0_107 = arith.constant 0 : index
    %c0_108 = arith.constant 0 : index
    %335 = vector.load %arg13[%c0_107, %c0_108] : memref<96x128xf32, #tpu.memory_space<vmem>>, vector<96x128xf32>
    %336 = arith.truncf %335 : vector<96x128xf32> to vector<96x128xbf16>
    %c0_109 = arith.constant 0 : index
    %c0_110 = arith.constant 0 : index
    %337 = vector.load %arg7[%c0_109, %c0_110] : memref<128x128xbf16, #tpu.memory_space<vmem>>, vector<128x128xbf16>
    %cst_111 = arith.constant dense<0.000000e+00> : vector<96x128xf32>
    %338 = tpu.matmul %336, %337, %cst_111 {dimension_numbers = #tpu.dot_dimension_numbers<[1], [0], [0], [1], [0, 0, 1, 1], [], []>} : vector<96x128xbf16>, vector<128x128xbf16>, vector<96x128xf32> -> vector<96x128xf32>
    %c0_112 = arith.constant 0 : index
    %c0_113 = arith.constant 0 : index
    %339 = vector.load %arg8[%c0_112, %c0_113] : memref<1x128xf32, #tpu.memory_space<vmem>>, vector<1x128xf32>
    %340 = vector.broadcast %339 : vector<1x128xf32> to vector<96x128xf32>
    %341 = arith.addf %338, %340 : vector<96x128xf32>
    %342 = arith.negf %341 : vector<96x128xf32>
    %343 = math.exp %342 : vector<96x128xf32>
    %cst_114 = arith.constant 1.000000e+00 : f32
    %344 = vector.broadcast %cst_114 : f32 to vector<96x128xf32>
    %345 = arith.addf %344, %343 : vector<96x128xf32>
    %346 = arith.divf %344, %345 : vector<96x128xf32>
    %c0_115 = arith.constant 0 : index
    %c0_116 = arith.constant 0 : index
    %347 = vector.load %arg9[%c0_115, %c0_116] : memref<96x128xf32, #tpu.memory_space<vmem>>, vector<96x128xf32>
    tpu.vector_store %arg9[%c0_115, %c0_116], %346 {strides = array<i32>} : memref<96x128xf32, #tpu.memory_space<vmem>>, vector<96x128xf32>,
    return
  }
}

</mosaic_0001>

<llo_original>
// kernel: tpu_custom_call.1
$region0: #{tpu_custom_call.1}
  #allocation0 [shape = 'u32[]', space=smem, size = 0x4, offset = 0x4, fixed_abs, tag = 'smem constant byte address 0x4 - core index']
  #allocation1 [shape = 'u32[144,128]{1,0:T(1,128)}', space=vmem, size = 0x12000, scoped, tag = 'internal scratch']
  #allocation2 [shape = 'f32[96,384]{1,0:T(8,128)}', space=vmem, size = 0x24000, scoped, tag = 'scratch operand']
  #allocation3 [shape = 'f32[96,128]{1,0:T(8,128)}', space=vmem, size = 0xc000, scoped, tag = 'scratch operand']
  #allocation4 [shape = 'f32[16,896]{1,0:T(8,128)}', space=vmem, size = 0xe000, scoped, tag = 'scratch operand']
  %s0 = inlined_call_operand.hbm [shape: f32[96,128], index: 0, kind: input, shape index: {}]
  %s1 = inlined_call_operand.hbm [shape: f32[16,128], index: 1, kind: input, shape index: {}]
  %s2 = inlined_call_operand.hbm [shape: f32[16,128], index: 2, kind: input, shape index: {}]
  %s3 = inlined_call_operand.hbm [shape: bf16[128,384], index: 3, kind: input, shape index: {}]
  %s4 = inlined_call_operand.vmem [shape: f32[1,384], index: 4, kind: input, shape index: {}]
  %s5 = inlined_call_operand.hbm [shape: bf16[256,896], index: 5, kind: input, shape index: {}]
  %s6 = inlined_call_operand.vmem [shape: f32[1,896], index: 6, kind: input, shape index: {}]
  %s7 = inlined_call_operand.hbm [shape: bf16[128,128], index: 7, kind: input, shape index: {}]
  %s8 = inlined_call_operand.vmem [shape: f32[1,128], index: 8, kind: input, shape index: {}]
  %s9 = inlined_call_operand.hbm [shape: f32[96,128], index: 9, kind: output, shape index: {0}]
  %s10 = inlined_call_operand.hbm [shape: f32[16,128], index: 10, kind: output, shape index: {1}]
  %s11 = inlined_call_operand.hbm [shape: f32[16,128], index: 11, kind: output, shape index: {2}]
  %12 = xla_tuple %s9, %s10, %s11
  %s13 = sld [smem:[#allocation0]]
  $region86: #{tpu_custom_call.1} parent=0
    _
  %s15 = ssub.s32 1, %s13
  %s16 = scalar_select 0, %s15, %s13
  $region1: #{tpu_custom_call.1} parent=0
    #allocation5 [shape = 'u8[49152]{0}', space=vmem, size = 0xc000, scoped, tag = 'input window, operand 0, single buffered']
    #allocation6 [shape = 's32[1]{0}', space=sflag, size = 0x4, scoped, tag = 'scoped memory for tpu_custom_call.1']
    #allocation7 [shape = 's32[1]{0}', space=sflag, size = 0x4, scoped, tag = 'scoped memory for tpu_custom_call.1']
    #allocation8 [shape = 'u8[8192]{0}', space=vmem, size = 0x2000, scoped, tag = 'input window, operand 1, single buffered']
    #allocation9 [shape = 's32[1]{0}', space=sflag, size = 0x4, scoped, tag = 'scoped memory for tpu_custom_call.1']
    #allocation10 [shape = 'u8[8192]{0}', space=vmem, size = 0x2000, scoped, tag = 'input window, operand 2, single buffered']
    #allocation11 [shape = 'u8[98304]{0}', space=vmem, size = 0x18000, scoped, tag = 'input window, operand 3, single buffered']
    #allocation12 [shape = 's32[1]{0}', space=sflag, size = 0x4, scoped, tag = 'scoped memory for tpu_custom_call.1']
    #allocation13 [shape = 'u8[458752]{0}', space=vmem, size = 0x70000, scoped, tag = 'input window, operand 5, single buffered']
    #allocation14 [shape = 'u8[32768]{0}', space=vmem, size = 0x8000, scoped, tag = 'input window, operand 7, single buffered']
    #allocation15 [shape = 's32[1]{0}', space=sflag, size = 0x4, scoped, tag = 'scoped memory for tpu_custom_call.1']
    #allocation16 [shape = 'u8[49152]{0}', space=vmem, size = 0xc000, scoped, tag = 'output window, operand 0, single buffered']
    #allocation17 [shape = 'u8[8192]{0}', space=vmem, size = 0x2000, scoped, tag = 'output window, operand 1, single buffered']
    #allocation18 [shape = 's32[1]{0}', space=sflag, size = 0x4, scoped, tag = 'scoped memory for tpu_custom_call.1']
    #allocation19 [shape = 'u8[8192]{0}', space=vmem, size = 0x2000, scoped, tag = 'output window, operand 2, single buffered']
    %17 = vsyncpa [#allocation6], 0
    %18 = vsyncpa [#allocation9], 0
    %19 = vsyncpa [#allocation12], 0
    %20 = vsyncpa [#allocation15], 0
    %21 = vsyncpa [#allocation7], 0
    %22 = vsyncpa [#allocation18], 0
    // Predicated region
    $region2: #{tpu_custom_call.1} parent=1 // pred_check
      _
    $region3: #{tpu_custom_call.1} parent=1 // pred_check_branch
      %24 = sbr.rel (0) target = $region5
    $region4: #{tpu_custom_call.1} parent=1 // pred_region
      %s26 = ssub.s32 1536, 1536
      %27 = vsyncadd [#allocation6], %s26
      %s28 = sshll.u32 [#allocation5], 4
      %s29 = int_to_ptr.vmem [resolvable:$true] %s28
      %34 = dma.hbm_to_vmem [thread:$0]  %s0, 1536, %s29, [#allocation6], 128, 128, 8
    $region5: #{tpu_custom_call.1} parent=1 // pred_fallthru
      _
    // Predicated region
    $region6: #{tpu_custom_call.1} parent=1 // pred_check
      _
    $region7: #{tpu_custom_call.1} parent=1 // pred_check_branch
      %36 = sbr.rel (0) target = $region9
    $region8: #{tpu_custom_call.1} parent=1 // pred_region
      %s38 = ssub.s32 256, 256
      %39 = vsyncadd [#allocation9], %s38
      %s40 = sshll.u32 [#allocation8], 4
      %s41 = int_to_ptr.vmem [resolvable:$true] %s40
      %46 = dma.hbm_to_vmem [thread:$0]  %s1, 256, %s41, [#allocation9], 128, 128, 8
    $region9: #{tpu_custom_call.1} parent=1 // pred_fallthru
      _
    // Predicated region
    $region10: #{tpu_custom_call.1} parent=1 // pred_check
      _
    $region11: #{tpu_custom_call.1} parent=1 // pred_check_branch
      %48 = sbr.rel (0) target = $region13
    $region12: #{tpu_custom_call.1} parent=1 // pred_region
      %s50 = ssub.s32 256, 256
      %51 = vsyncadd [#allocation9], %s50
      %s52 = sshll.u32 [#allocation10], 4
      %s53 = int_to_ptr.vmem [resolvable:$true] %s52
      %58 = dma.hbm_to_vmem [thread:$0]  %s2, 256, %s53, [#allocation9], 128, 128, 8
    $region13: #{tpu_custom_call.1} parent=1 // pred_fallthru
      _
    // Predicated region
    $region14: #{tpu_custom_call.1} parent=1 // pred_check
      _
    $region15: #{tpu_custom_call.1} parent=1 // pred_check_branch
      %60 = sbr.rel (0) target = $region17
    $region16: #{tpu_custom_call.1} parent=1 // pred_region
      %s62 = ssub.s32 3072, 3072
      %63 = vsyncadd [#allocation12], %s62
      %s64 = sshll.u32 [#allocation11], 4
      %s65 = int_to_ptr.vmem [resolvable:$true] %s64
      %70 = dma.hbm_to_vmem [thread:$0]  %s3, 3072, %s65, [#allocation12], 192, 192, 12
    $region17: #{tpu_custom_call.1} parent=1 // pred_fallthru
      _
    // Predicated region
    $region18: #{tpu_custom_call.1} parent=1 // pred_check
      _
    $region19: #{tpu_custom_call.1} parent=1 // pred_check_branch
      %72 = sbr.rel (0) target = $region21
    $region20: #{tpu_custom_call.1} parent=1 // pred_region
      _
    $region21: #{tpu_custom_call.1} parent=1 // pred_fallthru
      _
    // Predicated region
    $region22: #{tpu_custom_call.1} parent=1 // pred_check
      _
    $region23: #{tpu_custom_call.1} parent=1 // pred_check_branch
      %74 = sbr.rel (0) target = $region25
    $region24: #{tpu_custom_call.1} parent=1 // pred_region
      %s76 = ssub.s32 14336, 14336
      %77 = vsyncadd [#allocation12], %s76
      %s78 = sshll.u32 [#allocation13], 4
      %s79 = int_to_ptr.vmem [resolvable:$true] %s78
      %84 = dma.hbm_to_vmem [thread:$0]  %s5, 14336, %s79, [#allocation12], 448, 448, 28
    $region25: #{tpu_custom_call.1} parent=1 // pred_fallthru
      _
    // Predicated region
    $region26: #{tpu_custom_call.1} parent=1 // pred_check
      _
    $region27: #{tpu_custom_call.1} parent=1 // pred_check_branch
      %86 = sbr.rel (0) target = $region29
    $region28: #{tpu_custom_call.1} parent=1 // pred_region
      _
    $region29: #{tpu_custom_call.1} parent=1 // pred_fallthru
      _
    // Predicated region
    $region30: #{tpu_custom_call.1} parent=1 // pred_check
      _
    $region31: #{tpu_custom_call.1} parent=1 // pred_check_branch
      %88 = sbr.rel (0) target = $region33
    $region32: #{tpu_custom_call.1} parent=1 // pred_region
      %s90 = ssub.s32 1024, 1024
      %91 = vsyncadd [#allocation15], %s90
      %s92 = sshll.u32 [#allocation14], 4
      %s93 = int_to_ptr.vmem [resolvable:$true] %s92
      %98 = dma.hbm_to_vmem [thread:$0]  %s7, 1024, %s93, [#allocation15], 64, 64, 4
    $region33: #{tpu_custom_call.1} parent=1 // pred_fallthru
      _
    // Predicated region
    $region34: #{tpu_custom_call.1} parent=1 // pred_check
      _
    $region35: #{tpu_custom_call.1} parent=1 // pred_check_branch
      %100 = sbr.rel (0) target = $region37
    $region36: #{tpu_custom_call.1} parent=1 // pred_region
      _
    $region37: #{tpu_custom_call.1} parent=1 // pred_fallthru
      _
    // Predicated region
    $region38: #{tpu_custom_call.1} parent=1 // pred_check
      _
    $region39: #{tpu_custom_call.1} parent=1 // pred_check_branch
      %102 = sbr.rel (0) target = $region41
    $region40: #{tpu_custom_call.1} parent=1 // pred_region
      %103 = dma.done [#allocation6], 1536
    $region41: #{tpu_custom_call.1} parent=1 // pred_fallthru
      _
    // Predicated region
    $region42: #{tpu_custom_call.1} parent=1 // pred_check
      _
    $region43: #{tpu_custom_call.1} parent=1 // pred_check_branch
      %105 = sbr.rel (0) target = $region45
    $region44: #{tpu_custom_call.1} parent=1 // pred_region
      %106 = dma.done [#allocation9], 256
    $region45: #{tpu_custom_call.1} parent=1 // pred_fallthru
      _
    // Predicated region
    $region46: #{tpu_custom_call.1} parent=1 // pred_check
      _
    $region47: #{tpu_custom_call.1} parent=1 // pred_check_branch
      %108 = sbr.rel (0) target = $region49
    $region48: #{tpu_custom_call.1} parent=1 // pred_region
      %109 = dma.done [#allocation9], 256
    $region49: #{tpu_custom_call.1} parent=1 // pred_fallthru
      _
    // Predicated region
    $region50: #{tpu_custom_call.1} parent=1 // pred_check
      _
    $region51: #{tpu_custom_call.1} parent=1 // pred_check_branch
      %111 = sbr.rel (0) target = $region53
    $region52: #{tpu_custom_call.1} parent=1 // pred_region
      %112 = dma.done [#allocation12], 3072
    $region53: #{tpu_custom_call.1} parent=1 // pred_fallthru
      _
    // Predicated region
    $region54: #{tpu_custom_call.1} parent=1 // pred_check
      _
    $region55: #{tpu_custom_call.1} parent=1 // pred_check_branch
      %114 = sbr.rel (0) target = $region57
    $region56: #{tpu_custom_call.1} parent=1 // pred_region
      %115 = dma.done [#allocation12], 14336
    $region57: #{tpu_custom_call.1} parent=1 // pred_fallthru
      _
    // Predicated region
    $region58: #{tpu_custom_call.1} parent=1 // pred_check
      _
    $region59: #{tpu_custom_call.1} parent=1 // pred_check_branch
      %117 = sbr.rel (0) target = $region61
    $region60: #{tpu_custom_call.1} parent=1 // pred_region
      %118 = dma.done [#allocation15], 1024
    $region61: #{tpu_custom_call.1} parent=1 // pred_fallthru
      _
    %v120 = vld [vmem:[#allocation5] sm:$0xff]
    %v121 = vld [vmem:[#allocation5 + $0x8] sm:$0xff]
    %v122 = vld [vmem:[#allocation5 + $0x10] sm:$0xff]
    %v123 = vld [vmem:[#allocation5 + $0x18] sm:$0xff]
    %v124 = vld [vmem:[#allocation5 + $0x20] sm:$0xff]
    %v125 = vld [vmem:[#allocation5 + $0x28] sm:$0xff]
    %v126 = vld [vmem:[#allocation5 + $0x30] sm:$0xff]
    %v127 = vld [vmem:[#allocation5 + $0x38] sm:$0xff]
    %v128 = vld [vmem:[#allocation5 + $0x40] sm:$0xff]
    %v129 = vld [vmem:[#allocation5 + $0x48] sm:$0xff]
    %v130 = vld [vmem:[#allocation5 + $0x50] sm:$0xff]
    %v131 = vld [vmem:[#allocation5 + $0x58] sm:$0xff]
    %v132 = vmax.f32 %v120, 0.0
    %v133 = vmax.f32 %v121, 0.0
    %v134 = vmax.f32 %v122, 0.0
    %v135 = vmax.f32 %v123, 0.0
    %v136 = vmax.f32 %v124, 0.0
    %v137 = vmax.f32 %v125, 0.0
    %v138 = vmax.f32 %v126, 0.0
    %v139 = vmax.f32 %v127, 0.0
    %v140 = vmax.f32 %v128, 0.0
    %v141 = vmax.f32 %v129, 0.0
    %v142 = vmax.f32 %v130, 0.0
    %v143 = vmax.f32 %v131, 0.0
    %v144 = vpack.c.bf16 %v133, %v132
    %v145 = vpack.c.bf16 %v135, %v134
    %v146 = vpack.c.bf16 %v137, %v136
    %v147 = vpack.c.bf16 %v139, %v138
    %v148 = vpack.c.bf16 %v141, %v140
    %v149 = vpack.c.bf16 %v143, %v142
    %v150 = vld [vmem:[#allocation11] sm:$0xff]
    %v151 = vld [vmem:[#allocation11 + $0x8] sm:$0xf]
    %v152 = vld [vmem:[#allocation11 + $0xc] sm:$0xff]
    %v153 = vld [vmem:[#allocation11 + $0x14] sm:$0xf]
    %v154 = vld [vmem:[#allocation11 + $0x18] sm:$0xff]
    %v155 = vld [vmem:[#allocation11 + $0x20] sm:$0xf]
    %v156 = vld [vmem:[#allocation11 + $0x24] sm:$0xff]
    %v157 = vld [vmem:[#allocation11 + $0x2c] sm:$0xf]
    %v158 = vld [vmem:[#allocation11 + $0x30] sm:$0xff]
    %v159 = vld [vmem:[#allocation11 + $0x38] sm:$0xf]
    %v160 = vld [vmem:[#allocation11 + $0x3c] sm:$0xff]
    %v161 = vld [vmem:[#allocation11 + $0x44] sm:$0xf]
    %v162 = vld [vmem:[#allocation11 + $0x48] sm:$0xff]
    %v163 = vld [vmem:[#allocation11 + $0x50] sm:$0xf]
    %v164 = vld [vmem:[#allocation11 + $0x54] sm:$0xff]
    %v165 = vld [vmem:[#allocation11 + $0x5c] sm:$0xf]
    %v166 = vld [vmem:[#allocation11 + $0x60] sm:$0xff]
    %v167 = vld [vmem:[#allocation11 + $0x68] sm:$0xf]
    %v168 = vld [vmem:[#allocation11 + $0x6c] sm:$0xff]
    %v169 = vld [vmem:[#allocation11 + $0x74] sm:$0xf]
    %v170 = vld [vmem:[#allocation11 + $0x78] sm:$0xff]
    %v171 = vld [vmem:[#allocation11 + $0x80] sm:$0xf]
    %v172 = vld [vmem:[#allocation11 + $0x84] sm:$0xff]
    %v173 = vld [vmem:[#allocation11 + $0x8c] sm:$0xf]
    %v174 = vld [vmem:[#allocation11 + $0x90] sm:$0xff]
    %v175 = vld [vmem:[#allocation11 + $0x98] sm:$0xf]
    %v176 = vld [vmem:[#allocation11 + $0x9c] sm:$0xff]
    %v177 = vld [vmem:[#allocation11 + $0xa4] sm:$0xf]
    %v178 = vld [vmem:[#allocation11 + $0xa8] sm:$0xff]
    %v179 = vld [vmem:[#allocation11 + $0xb0] sm:$0xf]
    %v180 = vld [vmem:[#allocation11 + $0xb4] sm:$0xff]
    %v181 = vld [vmem:[#allocation11 + $0xbc] sm:$0xf]
    %v182 = vld [vmem:[%s4] sm:$0x7]
    %v184 = vlaneseq
    %v185 = vshrl.u32 %v184, 7
    %v186 = vsub.s32 0, %v185
    %v187 = vrot.slane %v182, %v186
    %v188 = vlaneseq
    %v189 = vshrl.u32 %v188, 7
    %v190 = vsub.s32 1, %v189
    %v191 = vrot.slane %v182, %v190
    %v192 = vlaneseq
    %v193 = vshrl.u32 %v192, 7
    %v194 = vsub.s32 2, %v193
    %v195 = vrot.slane %v182, %v194
    %v231 = vunpack.c.l.b16 %v150
    %v232 = vunpack.c.h.b16 %v150
    %v233 = vunpack.c.l.b16 %v151
    %v234 = vunpack.c.l.b16 %v152
    %v235 = vunpack.c.h.b16 %v152
    %v236 = vunpack.c.l.b16 %v153
    %v237 = vunpack.c.l.b16 %v154
    %v238 = vunpack.c.h.b16 %v154
    %v239 = vunpack.c.l.b16 %v155
    %v240 = vunpack.c.l.b16 %v156
    %v241 = vunpack.c.h.b16 %v156
    %v242 = vunpack.c.l.b16 %v157
    %v243 = vunpack.c.l.b16 %v158
    %v244 = vunpack.c.h.b16 %v158
    %v245 = vunpack.c.l.b16 %v159
    %v246 = vunpack.c.l.b16 %v160
    %v247 = vunpack.c.h.b16 %v160
    %v248 = vunpack.c.l.b16 %v161
    %v249 = vunpack.c.l.b16 %v162
    %v250 = vunpack.c.h.b16 %v162
    %v251 = vunpack.c.l.b16 %v163
    %v252 = vunpack.c.l.b16 %v164
    %v253 = vunpack.c.h.b16 %v164
    %v254 = vunpack.c.l.b16 %v165
    %v255 = vunpack.c.l.b16 %v166
    %v256 = vunpack.c.h.b16 %v166
    %v257 = vunpack.c.l.b16 %v167
    %v258 = vunpack.c.l.b16 %v168
    %v259 = vunpack.c.h.b16 %v168
    %v260 = vunpack.c.l.b16 %v169
    %v261 = vunpack.c.l.b16 %v170
    %v262 = vunpack.c.h.b16 %v170
    %v263 = vunpack.c.l.b16 %v171
    %v264 = vunpack.c.l.b16 %v172
    %v265 = vunpack.c.h.b16 %v172
    %v266 = vunpack.c.l.b16 %v173
    %v267 = vunpack.c.l.b16 %v174
    %v268 = vunpack.c.h.b16 %v174
    %v269 = vunpack.c.l.b16 %v175
    %v270 = vunpack.c.l.b16 %v176
    %v271 = vunpack.c.h.b16 %v176
    %v272 = vunpack.c.l.b16 %v177
    %v273 = vunpack.c.l.b16 %v178
    %v274 = vunpack.c.h.b16 %v178
    %v275 = vunpack.c.l.b16 %v179
    %v276 = vunpack.c.l.b16 %v180
    %v277 = vunpack.c.h.b16 %v180
    %v278 = vunpack.c.l.b16 %v181
    %v279 = vpack.c.b16 %v234, %v231
    %v280 = vpack.c.b16 %v235, %v232
    %v281 = vpack.c.b16 %v236, %v233
    %v282 = vpack.c.b16 %v240, %v237
    %v283 = vpack.c.b16 %v241, %v238
    %v284 = vpack.c.b16 %v242, %v239
    %v285 = vpack.c.b16 %v246, %v243
    %v286 = vpack.c.b16 %v247, %v244
    %v287 = vpack.c.b16 %v248, %v245
    %v288 = vpack.c.b16 %v252, %v249
    %v289 = vpack.c.b16 %v253, %v250
    %v290 = vpack.c.b16 %v254, %v251
    %v291 = vpack.c.b16 %v258, %v255
    %v292 = vpack.c.b16 %v259, %v256
    %v293 = vpack.c.b16 %v260, %v257
    %v294 = vpack.c.b16 %v264, %v261
    %v295 = vpack.c.b16 %v265, %v262
    %v296 = vpack.c.b16 %v266, %v263
    %v297 = vpack.c.b16 %v270, %v267
    %v298 = vpack.c.b16 %v271, %v268
    %v299 = vpack.c.b16 %v272, %v269
    %v300 = vpack.c.b16 %v276, %v273
    %v301 = vpack.c.b16 %v277, %v274
    %v302 = vpack.c.b16 %v278, %v275
    %327 = vmatprep.subr.bf16.mxu0 %v301
    %328 = vmatpush1.bf16.msra.mxu0 %v300
    %329 = vmatprep.subr.bf16.mxu0 %v298
    %330 = vmatpush1.bf16.msra.mxu0 %v297
    %331 = vmatprep.subr.bf16.mxu0 %v295
    %332 = vmatpush1.bf16.msra.mxu0 %v294
    %333 = vmatprep.subr.bf16.mxu0 %v292
    %334 = vmatpush1.bf16.msra.mxu0 %v291
    %335 = vmatprep.subr.bf16.mxu0 %v289
    %336 = vmatpush1.bf16.msra.mxu0 %v288
    %337 = vmatprep.subr.bf16.mxu0 %v286
    %338 = vmatpush1.bf16.msra.mxu0 %v285
    %339 = vmatprep.subr.bf16.mxu0 %v283
    %340 = vmatpush1.bf16.msra.mxu0 %v282
    %341 = vmatprep.subr.bf16.mxu0 %v280
    %342 = vmatpush1.bf16.msra.mxu0 %v279
    %343 = vmatprep.subr.bf16.mxu0 0
    %344 = vmatpush2.bf16.msra.mxu0 0
    %345 = vmatprep.subr.bf16.mxu0 0
    %346 = vmatpush2.bf16.msra.mxu0 0
    %347 = vmatprep.subr.bf16.mxu0 0
    %348 = vmatpush2.bf16.msra.mxu0 0
    %349 = vmatprep.subr.bf16.mxu0 0
    %350 = vmatpush2.bf16.msra.mxu0 0
    %351 = vmatprep.subr.bf16.mxu0 0
    %352 = vmatpush2.bf16.msra.mxu0 0
    %353 = vmatprep.subr.bf16.mxu0 0
    %354 = vmatpush2.bf16.msra.mxu0 0
    %355 = vmatprep.subr.bf16.mxu0 0
    %356 = vmatpush2.bf16.msra.mxu0 0
    %357 = vmatprep.subr.bf16.mxu0 0
    %358 = vmatpush2.bf16.msra.mxu0 0
    %359 = vmatprep.mubr.bf16.mxu0 0
    %360 = vmatmul.mubr.bf16.gmra.mxu0 %v144
    %v361 = vpop.f32.mrf.mxu0
    %v362 = vadd.f32 %v187, %v361
    %v363 = vpop.f32.mrf.mxu0
    %v364 = vadd.f32 %v191, %v363
    %v365 = vpop.f32.mrf.mxu0
    %v366 = vadd.f32 %v187, %v365
    %v367 = vpop.f32.mrf.mxu0
    %v368 = vadd.f32 %v191, %v367
    %369 = vmatprep.mubr.bf16.mxu0 0
    %370 = vmatmul.mubr.bf16.gmra.mxu0 %v145
    %v371 = vpop.f32.mrf.mxu0
    %v372 = vadd.f32 %v187, %v371
    %v373 = vpop.f32.mrf.mxu0
    %v374 = vadd.f32 %v191, %v373
    %v375 = vpop.f32.mrf.mxu0
    %v376 = vadd.f32 %v187, %v375
    %v377 = vpop.f32.mrf.mxu0
    %v378 = vadd.f32 %v191, %v377
    %379 = vmatprep.mubr.bf16.mxu0 0
    %380 = vmatmul.mubr.bf16.gmra.mxu0 %v146
    %v381 = vpop.f32.mrf.mxu0
    %v382 = vadd.f32 %v187, %v381
    %v383 = vpop.f32.mrf.mxu0
    %v384 = vadd.f32 %v191, %v383
    %v385 = vpop.f32.mrf.mxu0
    %v386 = vadd.f32 %v187, %v385
    %v387 = vpop.f32.mrf.mxu0
    %v388 = vadd.f32 %v191, %v387
    %389 = vmatprep.mubr.bf16.mxu0 0
    %390 = vmatmul.mubr.bf16.gmra.mxu0 %v147
    %v391 = vpop.f32.mrf.mxu0
    %v392 = vadd.f32 %v187, %v391
    %v393 = vpop.f32.mrf.mxu0
    %v394 = vadd.f32 %v191, %v393
    %v395 = vpop.f32.mrf.mxu0
    %v396 = vadd.f32 %v187, %v395
    %v397 = vpop.f32.mrf.mxu0
    %v398 = vadd.f32 %v191, %v397
    %399 = vmatprep.mubr.bf16.mxu0 0
    %400 = vmatmul.mubr.bf16.gmra.mxu0 %v148
    %v401 = vpop.f32.mrf.mxu0
    %v402 = vadd.f32 %v187, %v401
    %v403 = vpop.f32.mrf.mxu0
    %v404 = vadd.f32 %v191, %v403
    %v405 = vpop.f32.mrf.mxu0
    %v406 = vadd.f32 %v187, %v405
    %v407 = vpop.f32.mrf.mxu0
    %v408 = vadd.f32 %v191, %v407
    %409 = vmatprep.mubr.bf16.mxu0 0
    %410 = vmatmul.mubr.bf16.gmra.mxu0 %v149
    %v411 = vpop.f32.mrf.mxu0
    %v412 = vadd.f32 %v187, %v411
    %v413 = vpop.f32.mrf.mxu0
    %v414 = vadd.f32 %v191, %v413
    %v415 = vpop.f32.mrf.mxu0
    %v416 = vadd.f32 %v187, %v415
    %v417 = vpop.f32.mrf.mxu0
    %v418 = vadd.f32 %v191, %v417
    %419 = vdwg.mxu0
    %420 = vmatprep.subr.bf16.mxu0 0
    %421 = vmatpush1.bf16.msra.mxu0 %v302
    %422 = vmatprep.subr.bf16.mxu0 0
    %423 = vmatpush1.bf16.msra.mxu0 %v299
    %424 = vmatprep.subr.bf16.mxu0 0
    %425 = vmatpush1.bf16.msra.mxu0 %v296
    %426 = vmatprep.subr.bf16.mxu0 0
    %427 = vmatpush1.bf16.msra.mxu0 %v293
    %428 = vmatprep.subr.bf16.mxu0 0
    %429 = vmatpush1.bf16.msra.mxu0 %v290
    %430 = vmatprep.subr.bf16.mxu0 0
    %431 = vmatpush1.bf16.msra.mxu0 %v287
    %432 = vmatprep.subr.bf16.mxu0 0
    %433 = vmatpush1.bf16.msra.mxu0 %v284
    %434 = vmatprep.subr.bf16.mxu0 0
    %435 = vmatpush1.bf16.msra.mxu0 %v281
    %436 = vmatprep.subr.bf16.mxu0 0
    %437 = vmatpush2.bf16.msra.mxu0 0
    %438 = vmatprep.subr.bf16.mxu0 0
    %439 = vmatpush2.bf16.msra.mxu0 0
    %440 = vmatprep.subr.bf16.mxu0 0
    %441 = vmatpush2.bf16.msra.mxu0 0
    %442 = vmatprep.subr.bf16.mxu0 0
    %443 = vmatpush2.bf16.msra.mxu0 0
    %444 = vmatprep.subr.bf16.mxu0 0
    %445 = vmatpush2.bf16.msra.mxu0 0
    %446 = vmatprep.subr.bf16.mxu0 0
    %447 = vmatpush2.bf16.msra.mxu0 0
    %448 = vmatprep.subr.bf16.mxu0 0
    %449 = vmatpush2.bf16.msra.mxu0 0
    %450 = vmatprep.subr.bf16.mxu0 0
    %451 = vmatpush2.bf16.msra.mxu0 0
    %452 = vmatprep.mubr.bf16.mxu0 0
    %453 = vmatmul.mubr.bf16.gmra.mxu0 %v144
    %v454 = vpop.f32.mrf.mxu0
    %v455 = vadd.f32 %v195, %v454
    %v456 = vpop.f32.mrf.mxu0
    %v457 = vpop.f32.mrf.mxu0
    %v458 = vadd.f32 %v195, %v457
    %v459 = vpop.f32.mrf.mxu0
    %460 = vmatprep.mubr.bf16.mxu0 0
    %461 = vmatmul.mubr.bf16.gmra.mxu0 %v145
    %v462 = vpop.f32.mrf.mxu0
    %v463 = vadd.f32 %v195, %v462
    %v464 = vpop.f32.mrf.mxu0
    %v465 = vpop.f32.mrf.mxu0
    %v466 = vadd.f32 %v195, %v465
    %v467 = vpop.f32.mrf.mxu0
    %468 = vmatprep.mubr.bf16.mxu0 0
    %469 = vmatmul.mubr.bf16.gmra.mxu0 %v146
    %v470 = vpop.f32.mrf.mxu0
    %v471 = vadd.f32 %v195, %v470
    %v472 = vpop.f32.mrf.mxu0
    %v473 = vpop.f32.mrf.mxu0
    %v474 = vadd.f32 %v195, %v473
    %v475 = vpop.f32.mrf.mxu0
    %476 = vmatprep.mubr.bf16.mxu0 0
    %477 = vmatmul.mubr.bf16.gmra.mxu0 %v147
    %v478 = vpop.f32.mrf.mxu0
    %v479 = vadd.f32 %v195, %v478
    %v480 = vpop.f32.mrf.mxu0
    %v481 = vpop.f32.mrf.mxu0
    %v482 = vadd.f32 %v195, %v481
    %v483 = vpop.f32.mrf.mxu0
    %484 = vmatprep.mubr.bf16.mxu0 0
    %485 = vmatmul.mubr.bf16.gmra.mxu0 %v148
    %v486 = vpop.f32.mrf.mxu0
    %v487 = vadd.f32 %v195, %v486
    %v488 = vpop.f32.mrf.mxu0
    %v489 = vpop.f32.mrf.mxu0
    %v490 = vadd.f32 %v195, %v489
    %v491 = vpop.f32.mrf.mxu0
    %492 = vmatprep.mubr.bf16.mxu0 0
    %493 = vmatmul.mubr.bf16.gmra.mxu0 %v149
    %v494 = vpop.f32.mrf.mxu0
    %v495 = vadd.f32 %v195, %v494
    %v496 = vpop.f32.mrf.mxu0
    %v497 = vpop.f32.mrf.mxu0
    %v498 = vadd.f32 %v195, %v497
    %v499 = vpop.f32.mrf.mxu0
    %500 = vdwg.mxu0
    %501 = vst [vmem:[#allocation2] sm:$0xff] %v362
    %502 = vst [vmem:[#allocation2 + $0x8] sm:$0xff] %v364
    %503 = vst [vmem:[#allocation2 + $0x10] sm:$0xff] %v455
    %504 = vst [vmem:[#allocation2 + $0x18] sm:$0xff] %v366
    %505 = vst [vmem:[#allocation2 + $0x20] sm:$0xff] %v368
    %506 = vst [vmem:[#allocation2 + $0x28] sm:$0xff] %v458
    %507 = vst [vmem:[#allocation2 + $0x30] sm:$0xff] %v372
    %508 = vst [vmem:[#allocation2 + $0x38] sm:$0xff] %v374
    %509 = vst [vmem:[#allocation2 + $0x40] sm:$0xff] %v463
    %510 = vst [vmem:[#allocation2 + $0x48] sm:$0xff] %v376
    %511 = vst [vmem:[#allocation2 + $0x50] sm:$0xff] %v378
    %512 = vst [vmem:[#allocation2 + $0x58] sm:$0xff] %v466
    %513 = vst [vmem:[#allocation2 + $0x60] sm:$0xff] %v382
    %514 = vst [vmem:[#allocation2 + $0x68] sm:$0xff] %v384
    %515 = vst [vmem:[#allocation2 + $0x70] sm:$0xff] %v471
    %516 = vst [vmem:[#allocation2 + $0x78] sm:$0xff] %v386
    %517 = vst [vmem:[#allocation2 + $0x80] sm:$0xff] %v388
    %518 = vst [vmem:[#allocation2 + $0x88] sm:$0xff] %v474
    %519 = vst [vmem:[#allocation2 + $0x90] sm:$0xff] %v392
    %520 = vst [vmem:[#allocation2 + $0x98] sm:$0xff] %v394
    %521 = vst [vmem:[#allocation2 + $0xa0] sm:$0xff] %v479
    %522 = vst [vmem:[#allocation2 + $0xa8] sm:$0xff] %v396
    %523 = vst [vmem:[#allocation2 + $0xb0] sm:$0xff] %v398
    %524 = vst [vmem:[#allocation2 + $0xb8] sm:$0xff] %v482
    %525 = vst [vmem:[#allocation2 + $0xc0] sm:$0xff] %v402
    %526 = vst [vmem:[#allocation2 + $0xc8] sm:$0xff] %v404
    %527 = vst [vmem:[#allocation2 + $0xd0] sm:$0xff] %v487
    %528 = vst [vmem:[#allocation2 + $0xd8] sm:$0xff] %v406
    %529 = vst [vmem:[#allocation2 + $0xe0] sm:$0xff] %v408
    %530 = vst [vmem:[#allocation2 + $0xe8] sm:$0xff] %v490
    %531 = vst [vmem:[#allocation2 + $0xf0] sm:$0xff] %v412
    %532 = vst [vmem:[#allocation2 + $0xf8] sm:$0xff] %v414
    %533 = vst [vmem:[#allocation2 + $0x100] sm:$0xff] %v495
    %534 = vst [vmem:[#allocation2 + $0x108] sm:$0xff] %v416
    %535 = vst [vmem:[#allocation2 + $0x110] sm:$0xff] %v418
    %536 = vst [vmem:[#allocation2 + $0x118] sm:$0xff] %v498
    %v537 = vld [vmem:[%s6] sm:$0xff]
    %v539 = vlaneseq
    %v540 = vshrl.u32 %v539, 7
    %v541 = vsub.s32 0, %v540
    %v542 = vrot.slane %v537, %v541
    %v543 = vlaneseq
    %v544 = vshrl.u32 %v543, 7
    %v545 = vsub.s32 1, %v544
    %v546 = vrot.slane %v537, %v545
    %v547 = vlaneseq
    %v548 = vshrl.u32 %v547, 7
    %v549 = vsub.s32 2, %v548
    %v550 = vrot.slane %v537, %v549
    %v551 = vlaneseq
    %v552 = vshrl.u32 %v551, 7
    %v553 = vsub.s32 3, %v552
    %v554 = vrot.slane %v537, %v553
    %v555 = vlaneseq
    %v556 = vshrl.u32 %v555, 7
    %v557 = vsub.s32 4, %v556
    %v558 = vrot.slane %v537, %v557
    %v559 = vlaneseq
    %v560 = vshrl.u32 %v559, 7
    %v561 = vsub.s32 5, %v560
    %v562 = vrot.slane %v537, %v561
    %v563 = vlaneseq
    %v564 = vshrl.u32 %v563, 7
    %v565 = vsub.s32 6, %v564
    %v566 = vrot.slane %v537, %v565
    %574 = vst [vmem:[#allocation4] sm:$0xff] %v542
    %575 = vst [vmem:[#allocation4 + $0x8] sm:$0xff] %v546
    %576 = vst [vmem:[#allocation4 + $0x10] sm:$0xff] %v550
    %577 = vst [vmem:[#allocation4 + $0x18] sm:$0xff] %v554
    %578 = vst [vmem:[#allocation4 + $0x20] sm:$0xff] %v558
    %579 = vst [vmem:[#allocation4 + $0x28] sm:$0xff] %v562
    %580 = vst [vmem:[#allocation4 + $0x30] sm:$0xff] %v566
    %581 = vst [vmem:[#allocation4 + $0x38] sm:$0xff] %v542
    %582 = vst [vmem:[#allocation4 + $0x40] sm:$0xff] %v546
    %583 = vst [vmem:[#allocation4 + $0x48] sm:$0xff] %v550
    %584 = vst [vmem:[#allocation4 + $0x50] sm:$0xff] %v554
    %585 = vst [vmem:[#allocation4 + $0x58] sm:$0xff] %v558
    %586 = vst [vmem:[#allocation4 + $0x60] sm:$0xff] %v562
    %587 = vst [vmem:[#allocation4 + $0x68] sm:$0xff] %v566
    %v588 = vld [vmem:[#allocation8] sm:$0xff]
    %v589 = vld [vmem:[#allocation8 + $0x8] sm:$0xff]
    %v590 = vld [vmem:[#allocation10] sm:$0xff]
    %v591 = vld [vmem:[#allocation10 + $0x8] sm:$0xff]
    %v592 = vpack.c.bf16 %v589, %v588
    %v593 = vpack.c.bf16 %v591, %v590
    %v594 = vld [vmem:[#allocation13] sm:$0xff]
    %v595 = vld [vmem:[#allocation13 + $0x8] sm:$0xff]
    %v596 = vld [vmem:[#allocation13 + $0x10] sm:$0xff]
    %v597 = vld [vmem:[#allocation13 + $0x18] sm:$0xf]
    %v598 = vld [vmem:[#allocation13 + $0x1c] sm:$0xff]
    %v599 = vld [vmem:[#allocation13 + $0x24] sm:$0xff]
    %v600 = vld [vmem:[#allocation13 + $0x2c] sm:$0xff]
    %v601 = vld [vmem:[#allocation13 + $0x34] sm:$0xf]
    %v602 = vld [vmem:[#allocation13 + $0x38] sm:$0xff]
    %v603 = vld [vmem:[#allocation13 + $0x40] sm:$0xff]
    %v604 = vld [vmem:[#allocation13 + $0x48] sm:$0xff]
    %v605 = vld [vmem:[#allocation13 + $0x50] sm:$0xf]
    %v606 = vld [vmem:[#allocation13 + $0x54] sm:$0xff]
    %v607 = vld [vmem:[#allocation13 + $0x5c] sm:$0xff]
    %v608 = vld [vmem:[#allocation13 + $0x64] sm:$0xff]
    %v609 = vld [vmem:[#allocation13 + $0x6c] sm:$0xf]
    %v610 = vld [vmem:[#allocation13 + $0x70] sm:$0xff]
    %v611 = vld [vmem:[#allocation13 + $0x78] sm:$0xff]
    %v612 = vld [vmem:[#allocation13 + $0x80] sm:$0xff]
    %v613 = vld [vmem:[#allocation13 + $0x88] sm:$0xf]
    %v614 = vld [vmem:[#allocation13 + $0x8c] sm:$0xff]
    %v615 = vld [vmem:[#allocation13 + $0x94] sm:$0xff]
    %v616 = vld [vmem:[#allocation13 + $0x9c] sm:$0xff]
    %v617 = vld [vmem:[#allocation13 + $0xa4] sm:$0xf]
    %v618 = vld [vmem:[#allocation13 + $0xa8] sm:$0xff]
    %v619 = vld [vmem:[#allocation13 + $0xb0] sm:$0xff]
    %v620 = vld [vmem:[#allocation13 + $0xb8] sm:$0xff]
    %v621 = vld [vmem:[#allocation13 + $0xc0] sm:$0xf]
    %v622 = vld [vmem:[#allocation13 + $0xc4] sm:$0xff]
    %v623 = vld [vmem:[#allocation13 + $0xcc] sm:$0xff]
    %v624 = vld [vmem:[#allocation13 + $0xd4] sm:$0xff]
    %v625 = vld [vmem:[#allocation13 + $0xdc] sm:$0xf]
    %v626 = vld [vmem:[#allocation13 + $0xe0] sm:$0xff]
    %v627 = vld [vmem:[#allocation13 + $0xe8] sm:$0xff]
    %v628 = vld [vmem:[#allocation13 + $0xf0] sm:$0xff]
    %v629 = vld [vmem:[#allocation13 + $0xf8] sm:$0xf]
    %v630 = vld [vmem:[#allocation13 + $0xfc] sm:$0xff]
    %v631 = vld [vmem:[#allocation13 + $0x104] sm:$0xff]
    %v632 = vld [vmem:[#allocation13 + $0x10c] sm:$0xff]
    %v633 = vld [vmem:[#allocation13 + $0x114] sm:$0xf]
    %v634 = vld [vmem:[#allocation13 + $0x118] sm:$0xff]
    %v635 = vld [vmem:[#allocation13 + $0x120] sm:$0xff]
    %v636 = vld [vmem:[#allocation13 + $0x128] sm:$0xff]
    %v637 = vld [vmem:[#allocation13 + $0x130] sm:$0xf]
    %v638 = vld [vmem:[#allocation13 + $0x134] sm:$0xff]
    %v639 = vld [vmem:[#allocation13 + $0x13c] sm:$0xff]
    %v640 = vld [vmem:[#allocation13 + $0x144] sm:$0xff]
    %v641 = vld [vmem:[#allocation13 + $0x14c] sm:$0xf]
    %v642 = vld [vmem:[#allocation13 + $0x150] sm:$0xff]
    %v643 = vld [vmem:[#allocation13 + $0x158] sm:$0xff]
    %v644 = vld [vmem:[#allocation13 + $0x160] sm:$0xff]
    %v645 = vld [vmem:[#allocation13 + $0x168] sm:$0xf]
    %v646 = vld [vmem:[#allocation13 + $0x16c] sm:$0xff]
    %v647 = vld [vmem:[#allocation13 + $0x174] sm:$0xff]
    %v648 = vld [vmem:[#allocation13 + $0x17c] sm:$0xff]
    %v649 = vld [vmem:[#allocation13 + $0x184] sm:$0xf]
    %v650 = vld [vmem:[#allocation13 + $0x188] sm:$0xff]
    %v651 = vld [vmem:[#allocation13 + $0x190] sm:$0xff]
    %v652 = vld [vmem:[#allocation13 + $0x198] sm:$0xff]
    %v653 = vld [vmem:[#allocation13 + $0x1a0] sm:$0xf]
    %v654 = vld [vmem:[#allocation13 + $0x1a4] sm:$0xff]
    %v655 = vld [vmem:[#allocation13 + $0x1ac] sm:$0xff]
    %v656 = vld [vmem:[#allocation13 + $0x1b4] sm:$0xff]
    %v657 = vld [vmem:[#allocation13 + $0x1bc] sm:$0xf]
    %v658 = vld [vmem:[#allocation13 + $0x1c0] sm:$0xff]
    %v659 = vld [vmem:[#allocation13 + $0x1c8] sm:$0xff]
    %v660 = vld [vmem:[#allocation13 + $0x1d0] sm:$0xff]
    %v661 = vld [vmem:[#allocation13 + $0x1d8] sm:$0xf]
    %v662 = vld [vmem:[#allocation13 + $0x1dc] sm:$0xff]
    %v663 = vld [vmem:[#allocation13 + $0x1e4] sm:$0xff]
    %v664 = vld [vmem:[#allocation13 + $0x1ec] sm:$0xff]
    %v665 = vld [vmem:[#allocation13 + $0x1f4] sm:$0xf]
    %v666 = vld [vmem:[#allocation13 + $0x1f8] sm:$0xff]
    %v667 = vld [vmem:[#allocation13 + $0x200] sm:$0xff]
    %v668 = vld [vmem:[#allocation13 + $0x208] sm:$0xff]
    %v669 = vld [vmem:[#allocation13 + $0x210] sm:$0xf]
    %v670 = vld [vmem:[#allocation13 + $0x214] sm:$0xff]
    %v671 = vld [vmem:[#allocation13 + $0x21c] sm:$0xff]
    %v672 = vld [vmem:[#allocation13 + $0x224] sm:$0xff]
    %v673 = vld [vmem:[#allocation13 + $0x22c] sm:$0xf]
    %v674 = vld [vmem:[#allocation13 + $0x230] sm:$0xff]
    %v675 = vld [vmem:[#allocation13 + $0x238] sm:$0xff]
    %v676 = vld [vmem:[#allocation13 + $0x240] sm:$0xff]
    %v677 = vld [vmem:[#allocation13 + $0x248] sm:$0xf]
    %v678 = vld [vmem:[#allocation13 + $0x24c] sm:$0xff]
    %v679 = vld [vmem:[#allocation13 + $0x254] sm:$0xff]
    %v680 = vld [vmem:[#allocation13 + $0x25c] sm:$0xff]
    %v681 = vld [vmem:[#allocation13 + $0x264] sm:$0xf]
    %v682 = vld [vmem:[#allocation13 + $0x268] sm:$0xff]
    %v683 = vld [vmem:[#allocation13 + $0x270] sm:$0xff]
    %v684 = vld [vmem:[#allocation13 + $0x278] sm:$0xff]
    %v685 = vld [vmem:[#allocation13 + $0x280] sm:$0xf]
    %v686 = vld [vmem:[#allocation13 + $0x284] sm:$0xff]
    %v687 = vld [vmem:[#allocation13 + $0x28c] sm:$0xff]
    %v688 = vld [vmem:[#allocation13 + $0x294] sm:$0xff]
    %v689 = vld [vmem:[#allocation13 + $0x29c] sm:$0xf]
    %v690 = vld [vmem:[#allocation13 + $0x2a0] sm:$0xff]
    %v691 = vld [vmem:[#allocation13 + $0x2a8] sm:$0xff]
    %v692 = vld [vmem:[#allocation13 + $0x2b0] sm:$0xff]
    %v693 = vld [vmem:[#allocation13 + $0x2b8] sm:$0xf]
    %v694 = vld [vmem:[#allocation13 + $0x2bc] sm:$0xff]
    %v695 = vld [vmem:[#allocation13 + $0x2c4] sm:$0xff]
    %v696 = vld [vmem:[#allocation13 + $0x2cc] sm:$0xff]
    %v697 = vld [vmem:[#allocation13 + $0x2d4] sm:$0xf]
    %v698 = vld [vmem:[#allocation13 + $0x2d8] sm:$0xff]
    %v699 = vld [vmem:[#allocation13 + $0x2e0] sm:$0xff]
    %v700 = vld [vmem:[#allocation13 + $0x2e8] sm:$0xff]
    %v701 = vld [vmem:[#allocation13 + $0x2f0] sm:$0xf]
    %v702 = vld [vmem:[#allocation13 + $0x2f4] sm:$0xff]
    %v703 = vld [vmem:[#allocation13 + $0x2fc] sm:$0xff]
    %v704 = vld [vmem:[#allocation13 + $0x304] sm:$0xff]
    %v705 = vld [vmem:[#allocation13 + $0x30c] sm:$0xf]
    %v706 = vld [vmem:[#allocation13 + $0x310] sm:$0xff]
    %v707 = vld [vmem:[#allocation13 + $0x318] sm:$0xff]
    %v708 = vld [vmem:[#allocation13 + $0x320] sm:$0xff]
    %v709 = vld [vmem:[#allocation13 + $0x328] sm:$0xf]
    %v710 = vld [vmem:[#allocation13 + $0x32c] sm:$0xff]
    %v711 = vld [vmem:[#allocation13 + $0x334] sm:$0xff]
    %v712 = vld [vmem:[#allocation13 + $0x33c] sm:$0xff]
    %v713 = vld [vmem:[#allocation13 + $0x344] sm:$0xf]
    %v714 = vld [vmem:[#allocation13 + $0x348] sm:$0xff]
    %v715 = vld [vmem:[#allocation13 + $0x350] sm:$0xff]
    %v716 = vld [vmem:[#allocation13 + $0x358] sm:$0xff]
    %v717 = vld [vmem:[#allocation13 + $0x360] sm:$0xf]
    %v718 = vld [vmem:[#allocation13 + $0x364] sm:$0xff]
    %v719 = vld [vmem:[#allocation13 + $0x36c] sm:$0xff]
    %v720 = vld [vmem:[#allocation13 + $0x374] sm:$0xff]
    %v721 = vld [vmem:[#allocation13 + $0x37c] sm:$0xf]
    %v722 = vld [vmem:[#allocation4] sm:$0xff]
    %v723 = vld [vmem:[#allocation4 + $0x8] sm:$0xff]
    %v724 = vld [vmem:[#allocation4 + $0x10] sm:$0xff]
    %v725 = vld [vmem:[#allocation4 + $0x18] sm:$0xff]
    %v726 = vld [vmem:[#allocation4 + $0x20] sm:$0xff]
    %v727 = vld [vmem:[#allocation4 + $0x28] sm:$0xff]
    %v728 = vld [vmem:[#allocation4 + $0x30] sm:$0xff]
    %v729 = vld [vmem:[#allocation4 + $0x38] sm:$0xff]
    %v730 = vld [vmem:[#allocation4 + $0x40] sm:$0xff]
    %v731 = vld [vmem:[#allocation4 + $0x48] sm:$0xff]
    %v732 = vld [vmem:[#allocation4 + $0x50] sm:$0xff]
    %v733 = vld [vmem:[#allocation4 + $0x58] sm:$0xff]
    %v734 = vld [vmem:[#allocation4 + $0x60] sm:$0xff]
    %v735 = vld [vmem:[#allocation4 + $0x68] sm:$0xff]
    %v800 = vunpack.c.l.b16 %v594
    %v801 = vunpack.c.h.b16 %v594
    %v802 = vunpack.c.l.b16 %v595
    %v803 = vunpack.c.h.b16 %v595
    %v804 = vunpack.c.l.b16 %v598
    %v805 = vunpack.c.h.b16 %v598
    %v806 = vunpack.c.l.b16 %v599
    %v807 = vunpack.c.h.b16 %v599
    %v808 = vunpack.c.l.b16 %v602
    %v809 = vunpack.c.h.b16 %v602
    %v810 = vunpack.c.l.b16 %v603
    %v811 = vunpack.c.h.b16 %v603
    %v812 = vunpack.c.l.b16 %v606
    %v813 = vunpack.c.h.b16 %v606
    %v814 = vunpack.c.l.b16 %v607
    %v815 = vunpack.c.h.b16 %v607
    %v816 = vunpack.c.l.b16 %v610
    %v817 = vunpack.c.h.b16 %v610
    %v818 = vunpack.c.l.b16 %v611
    %v819 = vunpack.c.h.b16 %v611
    %v820 = vunpack.c.l.b16 %v614
    %v821 = vunpack.c.h.b16 %v614
    %v822 = vunpack.c.l.b16 %v615
    %v823 = vunpack.c.h.b16 %v615
    %v824 = vunpack.c.l.b16 %v618
    %v825 = vunpack.c.h.b16 %v618
    %v826 = vunpack.c.l.b16 %v619
    %v827 = vunpack.c.h.b16 %v619
    %v828 = vunpack.c.l.b16 %v622
    %v829 = vunpack.c.h.b16 %v622
    %v830 = vunpack.c.l.b16 %v623
    %v831 = vunpack.c.h.b16 %v623
    %v832 = vunpack.c.l.b16 %v626
    %v833 = vunpack.c.h.b16 %v626
    %v834 = vunpack.c.l.b16 %v627
    %v835 = vunpack.c.h.b16 %v627
    %v836 = vunpack.c.l.b16 %v630
    %v837 = vunpack.c.h.b16 %v630
    %v838 = vunpack.c.l.b16 %v631
    %v839 = vunpack.c.h.b16 %v631
    %v840 = vunpack.c.l.b16 %v634
    %v841 = vunpack.c.h.b16 %v634
    %v842 = vunpack.c.l.b16 %v635
    %v843 = vunpack.c.h.b16 %v635
    %v844 = vunpack.c.l.b16 %v638
    %v845 = vunpack.c.h.b16 %v638
    %v846 = vunpack.c.l.b16 %v639
    %v847 = vunpack.c.h.b16 %v639
    %v848 = vunpack.c.l.b16 %v642
    %v849 = vunpack.c.h.b16 %v642
    %v850 = vunpack.c.l.b16 %v643
    %v851 = vunpack.c.h.b16 %v643
    %v852 = vunpack.c.l.b16 %v646
    %v853 = vunpack.c.h.b16 %v646
    %v854 = vunpack.c.l.b16 %v647
    %v855 = vunpack.c.h.b16 %v647
    %v856 = vunpack.c.l.b16 %v650
    %v857 = vunpack.c.h.b16 %v650
    %v858 = vunpack.c.l.b16 %v651
    %v859 = vunpack.c.h.b16 %v651
    %v860 = vunpack.c.l.b16 %v654
    %v861 = vunpack.c.h.b16 %v654
    %v862 = vunpack.c.l.b16 %v655
    %v863 = vunpack.c.h.b16 %v655
    %v864 = vunpack.c.l.b16 %v658
    %v865 = vunpack.c.h.b16 %v658
    %v866 = vunpack.c.l.b16 %v659
    %v867 = vunpack.c.h.b16 %v659
    %v868 = vunpack.c.l.b16 %v662
    %v869 = vunpack.c.h.b16 %v662
    %v870 = vunpack.c.l.b16 %v663
    %v871 = vunpack.c.h.b16 %v663
    %v872 = vunpack.c.l.b16 %v666
    %v873 = vunpack.c.h.b16 %v666
    %v874 = vunpack.c.l.b16 %v667
    %v875 = vunpack.c.h.b16 %v667
    %v876 = vunpack.c.l.b16 %v670
    %v877 = vunpack.c.h.b16 %v670
    %v878 = vunpack.c.l.b16 %v671
    %v879 = vunpack.c.h.b16 %v671
    %v880 = vunpack.c.l.b16 %v674
    %v881 = vunpack.c.h.b16 %v674
    %v882 = vunpack.c.l.b16 %v675
    %v883 = vunpack.c.h.b16 %v675
    %v884 = vunpack.c.l.b16 %v678
    %v885 = vunpack.c.h.b16 %v678
    %v886 = vunpack.c.l.b16 %v679
    %v887 = vunpack.c.h.b16 %v679
    %v888 = vunpack.c.l.b16 %v682
    %v889 = vunpack.c.h.b16 %v682
    %v890 = vunpack.c.l.b16 %v683
    %v891 = vunpack.c.h.b16 %v683
    %v892 = vunpack.c.l.b16 %v686
    %v893 = vunpack.c.h.b16 %v686
    %v894 = vunpack.c.l.b16 %v687
    %v895 = vunpack.c.h.b16 %v687
    %v896 = vunpack.c.l.b16 %v690
    %v897 = vunpack.c.h.b16 %v690
    %v898 = vunpack.c.l.b16 %v691
    %v899 = vunpack.c.h.b16 %v691
    %v900 = vunpack.c.l.b16 %v694
    %v901 = vunpack.c.h.b16 %v694
    %v902 = vunpack.c.l.b16 %v695
    %v903 = vunpack.c.h.b16 %v695
    %v904 = vunpack.c.l.b16 %v698
    %v905 = vunpack.c.h.b16 %v698
    %v906 = vunpack.c.l.b16 %v699
    %v907 = vunpack.c.h.b16 %v699
    %v908 = vunpack.c.l.b16 %v702
    %v909 = vunpack.c.h.b16 %v702
    %v910 = vunpack.c.l.b16 %v703
    %v911 = vunpack.c.h.b16 %v703
    %v912 = vunpack.c.l.b16 %v706
    %v913 = vunpack.c.h.b16 %v706
    %v914 = vunpack.c.l.b16 %v707
    %v915 = vunpack.c.h.b16 %v707
    %v916 = vunpack.c.l.b16 %v710
    %v917 = vunpack.c.h.b16 %v710
    %v918 = vunpack.c.l.b16 %v711
    %v919 = vunpack.c.h.b16 %v711
    %v920 = vunpack.c.l.b16 %v714
    %v921 = vunpack.c.h.b16 %v714
    %v922 = vunpack.c.l.b16 %v715
    %v923 = vunpack.c.h.b16 %v715
    %v924 = vunpack.c.l.b16 %v718
    %v925 = vunpack.c.h.b16 %v718
    %v926 = vunpack.c.l.b16 %v719
    %v927 = vunpack.c.h.b16 %v719
    %v928 = vpack.c.b16 %v804, %v800
    %v929 = vpack.c.b16 %v805, %v801
    %v930 = vpack.c.b16 %v806, %v802
    %v931 = vpack.c.b16 %v807, %v803
    %v932 = vpack.c.b16 %v812, %v808
    %v933 = vpack.c.b16 %v813, %v809
    %v934 = vpack.c.b16 %v814, %v810
    %v935 = vpack.c.b16 %v815, %v811
    %v936 = vpack.c.b16 %v820, %v816
    %v937 = vpack.c.b16 %v821, %v817
    %v938 = vpack.c.b16 %v822, %v818
    %v939 = vpack.c.b16 %v823, %v819
    %v940 = vpack.c.b16 %v828, %v824
    %v941 = vpack.c.b16 %v829, %v825
    %v942 = vpack.c.b16 %v830, %v826
    %v943 = vpack.c.b16 %v831, %v827
    %v944 = vpack.c.b16 %v836, %v832
    %v945 = vpack.c.b16 %v837, %v833
    %v946 = vpack.c.b16 %v838, %v834
    %v947 = vpack.c.b16 %v839, %v835
    %v948 = vpack.c.b16 %v844, %v840
    %v949 = vpack.c.b16 %v845, %v841
    %v950 = vpack.c.b16 %v846, %v842
    %v951 = vpack.c.b16 %v847, %v843
    %v952 = vpack.c.b16 %v852, %v848
    %v953 = vpack.c.b16 %v853, %v849
    %v954 = vpack.c.b16 %v854, %v850
    %v955 = vpack.c.b16 %v855, %v851
    %v956 = vpack.c.b16 %v860, %v856
    %v957 = vpack.c.b16 %v861, %v857
    %v958 = vpack.c.b16 %v862, %v858
    %v959 = vpack.c.b16 %v863, %v859
    %v960 = vpack.c.b16 %v868, %v864
    %v961 = vpack.c.b16 %v869, %v865
    %v962 = vpack.c.b16 %v870, %v866
    %v963 = vpack.c.b16 %v871, %v867
    %v964 = vpack.c.b16 %v876, %v872
    %v965 = vpack.c.b16 %v877, %v873
    %v966 = vpack.c.b16 %v878, %v874
    %v967 = vpack.c.b16 %v879, %v875
    %v968 = vpack.c.b16 %v884, %v880
    %v969 = vpack.c.b16 %v885, %v881
    %v970 = vpack.c.b16 %v886, %v882
    %v971 = vpack.c.b16 %v887, %v883
    %v972 = vpack.c.b16 %v892, %v888
    %v973 = vpack.c.b16 %v893, %v889
    %v974 = vpack.c.b16 %v894, %v890
    %v975 = vpack.c.b16 %v895, %v891
    %v976 = vpack.c.b16 %v900, %v896
    %v977 = vpack.c.b16 %v901, %v897
    %v978 = vpack.c.b16 %v902, %v898
    %v979 = vpack.c.b16 %v903, %v899
    %v980 = vpack.c.b16 %v908, %v904
    %v981 = vpack.c.b16 %v909, %v905
    %v982 = vpack.c.b16 %v910, %v906
    %v983 = vpack.c.b16 %v911, %v907
    %v984 = vpack.c.b16 %v916, %v912
    %v985 = vpack.c.b16 %v917, %v913
    %v986 = vpack.c.b16 %v918, %v914
    %v987 = vpack.c.b16 %v919, %v915
    %v988 = vpack.c.b16 %v924, %v920
    %v989 = vpack.c.b16 %v925, %v921
    %v990 = vpack.c.b16 %v926, %v922
    %v991 = vpack.c.b16 %v927, %v923
    %1056 = vmatprep.subr.bf16.mxu0 %v957
    %1057 = vmatpush1.bf16.msra.mxu0 %v956
    %1058 = vmatprep.subr.bf16.mxu0 %v953
    %1059 = vmatpush1.bf16.msra.mxu0 %v952
    %1060 = vmatprep.subr.bf16.mxu0 %v949
    %1061 = vmatpush1.bf16.msra.mxu0 %v948
    %1062 = vmatprep.subr.bf16.mxu0 %v945
    %1063 = vmatpush1.bf16.msra.mxu0 %v944
    %1064 = vmatprep.subr.bf16.mxu0 %v941
    %1065 = vmatpush1.bf16.msra.mxu0 %v940
    %1066 = vmatprep.subr.bf16.mxu0 %v937
    %1067 = vmatpush1.bf16.msra.mxu0 %v936
    %1068 = vmatprep.subr.bf16.mxu0 %v933
    %1069 = vmatpush1.bf16.msra.mxu0 %v932
    %1070 = vmatprep.subr.bf16.mxu0 %v929
    %1071 = vmatpush1.bf16.msra.mxu0 %v928
    %1072 = vmatprep.subr.bf16.mxu0 %v989
    %1073 = vmatpush2.bf16.msra.mxu0 %v988
    %1074 = vmatprep.subr.bf16.mxu0 %v985
    %1075 = vmatpush2.bf16.msra.mxu0 %v984
    %1076 = vmatprep.subr.bf16.mxu0 %v981
    %1077 = vmatpush2.bf16.msra.mxu0 %v980
    %1078 = vmatprep.subr.bf16.mxu0 %v977
    %1079 = vmatpush2.bf16.msra.mxu0 %v976
    %1080 = vmatprep.subr.bf16.mxu0 %v973
    %1081 = vmatpush2.bf16.msra.mxu0 %v972
    %1082 = vmatprep.subr.bf16.mxu0 %v969
    %1083 = vmatpush2.bf16.msra.mxu0 %v968
    %1084 = vmatprep.subr.bf16.mxu0 %v965
    %1085 = vmatpush2.bf16.msra.mxu0 %v964
    %1086 = vmatprep.subr.bf16.mxu0 %v961
    %1087 = vmatpush2.bf16.msra.mxu0 %v960
    %1088 = vmatprep.mubr.bf16.mxu0 %v593
    %1089 = vmatmul.mubr.bf16.gmra.mxu0 %v592
    %v1090 = vpop.f32.mrf.mxu0
    %v1091 = vadd.f32 %v722, %v1090
    %v1092 = vpop.f32.mrf.mxu0
    %v1093 = vadd.f32 %v723, %v1092
    %v1094 = vpop.f32.mrf.mxu0
    %v1095 = vadd.f32 %v729, %v1094
    %v1096 = vpop.f32.mrf.mxu0
    %v1097 = vadd.f32 %v730, %v1096
    %1098 = vdwg.mxu0
    %1099 = vmatprep.subr.bf16.mxu0 %v959
    %1100 = vmatpush1.bf16.msra.mxu0 %v958
    %1101 = vmatprep.subr.bf16.mxu0 %v955
    %1102 = vmatpush1.bf16.msra.mxu0 %v954
    %1103 = vmatprep.subr.bf16.mxu0 %v951
    %1104 = vmatpush1.bf16.msra.mxu0 %v950
    %1105 = vmatprep.subr.bf16.mxu0 %v947
    %1106 = vmatpush1.bf16.msra.mxu0 %v946
    %1107 = vmatprep.subr.bf16.mxu0 %v943
    %1108 = vmatpush1.bf16.msra.mxu0 %v942
    %1109 = vmatprep.subr.bf16.mxu0 %v939
    %1110 = vmatpush1.bf16.msra.mxu0 %v938
    %1111 = vmatprep.subr.bf16.mxu0 %v935
    %1112 = vmatpush1.bf16.msra.mxu0 %v934
    %1113 = vmatprep.subr.bf16.mxu0 %v931
    %1114 = vmatpush1.bf16.msra.mxu0 %v930
    %1115 = vmatprep.subr.bf16.mxu0 %v991
    %1116 = vmatpush2.bf16.msra.mxu0 %v990
    %1117 = vmatprep.subr.bf16.mxu0 %v987
    %1118 = vmatpush2.bf16.msra.mxu0 %v986
    %1119 = vmatprep.subr.bf16.mxu0 %v983
    %1120 = vmatpush2.bf16.msra.mxu0 %v982
    %1121 = vmatprep.subr.bf16.mxu0 %v979
    %1122 = vmatpush2.bf16.msra.mxu0 %v978
    %1123 = vmatprep.subr.bf16.mxu0 %v975
    %1124 = vmatpush2.bf16.msra.mxu0 %v974
    %1125 = vmatprep.subr.bf16.mxu0 %v971
    %1126 = vmatpush2.bf16.msra.mxu0 %v970
    %1127 = vmatprep.subr.bf16.mxu0 %v967
    %1128 = vmatpush2.bf16.msra.mxu0 %v966
    %1129 = vmatprep.subr.bf16.mxu0 %v963
    %1130 = vmatpush2.bf16.msra.mxu0 %v962
    %1131 = vmatprep.mubr.bf16.mxu0 %v593
    %1132 = vmatmul.mubr.bf16.gmra.mxu0 %v592
    %v1133 = vpop.f32.mrf.mxu0
    %v1134 = vadd.f32 %v724, %v1133
    %v1135 = vpop.f32.mrf.mxu0
    %v1136 = vpop.f32.mrf.mxu0
    %v1137 = vadd.f32 %v731, %v1136
    %v1138 = vpop.f32.mrf.mxu0
    %1139 = vdwg.mxu0
    %v1140 = vld [vmem:[#allocation2] sm:$0xff]
    %v1141 = vld [vmem:[#allocation2 + $0x8] sm:$0xff]
    %v1142 = vld [vmem:[#allocation2 + $0x10] sm:$0xff]
    %v1143 = vld [vmem:[#allocation2 + $0x18] sm:$0xff]
    %v1144 = vld [vmem:[#allocation2 + $0x20] sm:$0xff]
    %v1145 = vld [vmem:[#allocation2 + $0x28] sm:$0xff]
    %v1146 = vadd.f32 %v1140, %v1091
    %v1147 = vadd.f32 %v1141, %v1093
    %v1148 = vadd.f32 %v1143, %v1095
    %v1149 = vadd.f32 %v1144, %v1097
    %v1150 = vxor.u32 %v1146, 2147483648
    %v1151 = vxor.u32 %v1147, 2147483648
    %v1152 = vxor.u32 %v1148, 2147483648
    %v1153 = vxor.u32 %v1149, 2147483648
    %v1154 = vmul.f32 %v1150, 1.442695
    %v1155 = vpow.pop %v1154
    %v1156 = vmul.f32 %v1151, 1.442695
    %v1157 = vpow.pop %v1156
    %v1158 = vmul.f32 %v1152, 1.442695
    %v1159 = vpow.pop %v1158
    %v1160 = vmul.f32 %v1153, 1.442695
    %v1161 = vpow.pop %v1160
    %v1162 = vadd.f32 %v1155, 1.0
    %v1163 = vadd.f32 %v1157, 1.0
    %v1164 = vadd.f32 %v1159, 1.0
    %v1165 = vadd.f32 %v1161, 1.0
    %v1166 = vrcp.pop %v1162
    %v1167 = vmul.f32 1.0, %v1166
    %v1168 = vrcp.pop %v1163
    %v1169 = vmul.f32 1.0, %v1168
    %v1170 = vrcp.pop %v1164
    %v1171 = vmul.f32 1.0, %v1170
    %v1172 = vrcp.pop %v1165
    %v1173 = vmul.f32 1.0, %v1172
    %v1174 = vmul.f32 %v1167, %v1134
    %v1175 = vmul.f32 %v1171, %v1137
    %v1176 = vadd.f32 %v1142, %v1174
    %v1177 = vadd.f32 %v1145, %v1175
    %v1178 = vtanh.pop %v1176
    %v1179 = vtanh.pop %v1177
    %v1180 = vsub.f32 1.0, %v1169
    %v1181 = vsub.f32 1.0, %v1173
    %v1182 = vmul.f32 %v1180, %v1178
    %v1183 = vmul.f32 %v1181, %v1179
    %v1184 = vmul.f32 %v1169, %v588
    %v1185 = vmul.f32 %v1173, %v589
    %v1186 = vadd.f32 %v1182, %v1184
    %v1187 = vadd.f32 %v1183, %v1185
    %v1188 = vpack.c.bf16 %v1187, %v1186
    %v1253 = vunpack.c.l.b16 %v596
    %v1254 = vunpack.c.h.b16 %v596
    %v1255 = vunpack.c.l.b16 %v597
    %v1256 = vunpack.c.l.b16 %v600
    %v1257 = vunpack.c.h.b16 %v600
    %v1258 = vunpack.c.l.b16 %v601
    %v1259 = vunpack.c.l.b16 %v604
    %v1260 = vunpack.c.h.b16 %v604
    %v1261 = vunpack.c.l.b16 %v605
    %v1262 = vunpack.c.l.b16 %v608
    %v1263 = vunpack.c.h.b16 %v608
    %v1264 = vunpack.c.l.b16 %v609
    %v1265 = vunpack.c.l.b16 %v612
    %v1266 = vunpack.c.h.b16 %v612
    %v1267 = vunpack.c.l.b16 %v613
    %v1268 = vunpack.c.l.b16 %v616
    %v1269 = vunpack.c.h.b16 %v616
    %v1270 = vunpack.c.l.b16 %v617
    %v1271 = vunpack.c.l.b16 %v620
    %v1272 = vunpack.c.h.b16 %v620
    %v1273 = vunpack.c.l.b16 %v621
    %v1274 = vunpack.c.l.b16 %v624
    %v1275 = vunpack.c.h.b16 %v624
    %v1276 = vunpack.c.l.b16 %v625
    %v1277 = vunpack.c.l.b16 %v628
    %v1278 = vunpack.c.h.b16 %v628
    %v1279 = vunpack.c.l.b16 %v629
    %v1280 = vunpack.c.l.b16 %v632
    %v1281 = vunpack.c.h.b16 %v632
    %v1282 = vunpack.c.l.b16 %v633
    %v1283 = vunpack.c.l.b16 %v636
    %v1284 = vunpack.c.h.b16 %v636
    %v1285 = vunpack.c.l.b16 %v637
    %v1286 = vunpack.c.l.b16 %v640
    %v1287 = vunpack.c.h.b16 %v640
    %v1288 = vunpack.c.l.b16 %v641
    %v1289 = vunpack.c.l.b16 %v644
    %v1290 = vunpack.c.h.b16 %v644
    %v1291 = vunpack.c.l.b16 %v645
    %v1292 = vunpack.c.l.b16 %v648
    %v1293 = vunpack.c.h.b16 %v648
    %v1294 = vunpack.c.l.b16 %v649
    %v1295 = vunpack.c.l.b16 %v652
    %v1296 = vunpack.c.h.b16 %v652
    %v1297 = vunpack.c.l.b16 %v653
    %v1298 = vunpack.c.l.b16 %v656
    %v1299 = vunpack.c.h.b16 %v656
    %v1300 = vunpack.c.l.b16 %v657
    %v1301 = vunpack.c.l.b16 %v660
    %v1302 = vunpack.c.h.b16 %v660
    %v1303 = vunpack.c.l.b16 %v661
    %v1304 = vunpack.c.l.b16 %v664
    %v1305 = vunpack.c.h.b16 %v664
    %v1306 = vunpack.c.l.b16 %v665
    %v1307 = vunpack.c.l.b16 %v668
    %v1308 = vunpack.c.h.b16 %v668
    %v1309 = vunpack.c.l.b16 %v669
    %v1310 = vunpack.c.l.b16 %v672
    %v1311 = vunpack.c.h.b16 %v672
    %v1312 = vunpack.c.l.b16 %v673
    %v1313 = vunpack.c.l.b16 %v676
    %v1314 = vunpack.c.h.b16 %v676
    %v1315 = vunpack.c.l.b16 %v677
    %v1316 = vunpack.c.l.b16 %v680
    %v1317 = vunpack.c.h.b16 %v680
    %v1318 = vunpack.c.l.b16 %v681
    %v1319 = vunpack.c.l.b16 %v684
    %v1320 = vunpack.c.h.b16 %v684
    %v1321 = vunpack.c.l.b16 %v685
    %v1322 = vunpack.c.l.b16 %v688
    %v1323 = vunpack.c.h.b16 %v688
    %v1324 = vunpack.c.l.b16 %v689
    %v1325 = vunpack.c.l.b16 %v692
    %v1326 = vunpack.c.h.b16 %v692
    %v1327 = vunpack.c.l.b16 %v693
    %v1328 = vunpack.c.l.b16 %v696
    %v1329 = vunpack.c.h.b16 %v696
    %v1330 = vunpack.c.l.b16 %v697
    %v1331 = vunpack.c.l.b16 %v700
    %v1332 = vunpack.c.h.b16 %v700
    %v1333 = vunpack.c.l.b16 %v701
    %v1334 = vunpack.c.l.b16 %v704
    %v1335 = vunpack.c.h.b16 %v704
    %v1336 = vunpack.c.l.b16 %v705
    %v1337 = vunpack.c.l.b16 %v708
    %v1338 = vunpack.c.h.b16 %v708
    %v1339 = vunpack.c.l.b16 %v709
    %v1340 = vunpack.c.l.b16 %v712
    %v1341 = vunpack.c.h.b16 %v712
    %v1342 = vunpack.c.l.b16 %v713
    %v1343 = vunpack.c.l.b16 %v716
    %v1344 = vunpack.c.h.b16 %v716
    %v1345 = vunpack.c.l.b16 %v717
    %v1346 = vunpack.c.l.b16 %v720
    %v1347 = vunpack.c.h.b16 %v720
    %v1348 = vunpack.c.l.b16 %v721
    %v1349 = vpack.c.b16 %v1256, %v1253
    %v1350 = vpack.c.b16 %v1257, %v1254
    %v1351 = vpack.c.b16 %v1258, %v1255
    %v1352 = vpack.c.b16 %v1262, %v1259
    %v1353 = vpack.c.b16 %v1263, %v1260
    %v1354 = vpack.c.b16 %v1264, %v1261
    %v1355 = vpack.c.b16 %v1268, %v1265
    %v1356 = vpack.c.b16 %v1269, %v1266
    %v1357 = vpack.c.b16 %v1270, %v1267
    %v1358 = vpack.c.b16 %v1274, %v1271
    %v1359 = vpack.c.b16 %v1275, %v1272
    %v1360 = vpack.c.b16 %v1276, %v1273
    %v1361 = vpack.c.b16 %v1280, %v1277
    %v1362 = vpack.c.b16 %v1281, %v1278
    %v1363 = vpack.c.b16 %v1282, %v1279
    %v1364 = vpack.c.b16 %v1286, %v1283
    %v1365 = vpack.c.b16 %v1287, %v1284
    %v1366 = vpack.c.b16 %v1288, %v1285
    %v1367 = vpack.c.b16 %v1292, %v1289
    %v1368 = vpack.c.b16 %v1293, %v1290
    %v1369 = vpack.c.b16 %v1294, %v1291
    %v1370 = vpack.c.b16 %v1298, %v1295
    %v1371 = vpack.c.b16 %v1299, %v1296
    %v1372 = vpack.c.b16 %v1300, %v1297
    %v1373 = vpack.c.b16 %v1304, %v1301
    %v1374 = vpack.c.b16 %v1305, %v1302
    %v1375 = vpack.c.b16 %v1306, %v1303
    %v1376 = vpack.c.b16 %v1310, %v1307
    %v1377 = vpack.c.b16 %v1311, %v1308
    %v1378 = vpack.c.b16 %v1312, %v1309
    %v1379 = vpack.c.b16 %v1316, %v1313
    %v1380 = vpack.c.b16 %v1317, %v1314
    %v1381 = vpack.c.b16 %v1318, %v1315
    %v1382 = vpack.c.b16 %v1322, %v1319
    %v1383 = vpack.c.b16 %v1323, %v1320
    %v1384 = vpack.c.b16 %v1324, %v1321
    %v1385 = vpack.c.b16 %v1328, %v1325
    %v1386 = vpack.c.b16 %v1329, %v1326
    %v1387 = vpack.c.b16 %v1330, %v1327
    %v1388 = vpack.c.b16 %v1334, %v1331
    %v1389 = vpack.c.b16 %v1335, %v1332
    %v1390 = vpack.c.b16 %v1336, %v1333
    %v1391 = vpack.c.b16 %v1340, %v1337
    %v1392 = vpack.c.b16 %v1341, %v1338
    %v1393 = vpack.c.b16 %v1342, %v1339
    %v1394 = vpack.c.b16 %v1346, %v1343
    %v1395 = vpack.c.b16 %v1347, %v1344
    %v1396 = vpack.c.b16 %v1348, %v1345
    %1445 = vmatprep.subr.bf16.mxu0 %v957
    %1446 = vmatpush1.bf16.msra.mxu0 %v956
    %1447 = vmatprep.subr.bf16.mxu0 %v953
    %1448 = vmatpush1.bf16.msra.mxu0 %v952
    %1449 = vmatprep.subr.bf16.mxu0 %v949
    %1450 = vmatpush1.bf16.msra.mxu0 %v948
    %1451 = vmatprep.subr.bf16.mxu0 %v945
    %1452 = vmatpush1.bf16.msra.mxu0 %v944
    %1453 = vmatprep.subr.bf16.mxu0 %v941
    %1454 = vmatpush1.bf16.msra.mxu0 %v940
    %1455 = vmatprep.subr.bf16.mxu0 %v937
    %1456 = vmatpush1.bf16.msra.mxu0 %v936
    %1457 = vmatprep.subr.bf16.mxu0 %v933
    %1458 = vmatpush1.bf16.msra.mxu0 %v932
    %1459 = vmatprep.subr.bf16.mxu0 %v929
    %1460 = vmatpush1.bf16.msra.mxu0 %v928
    %1461 = vmatprep.subr.bf16.mxu0 %v989
    %1462 = vmatpush2.bf16.msra.mxu0 %v988
    %1463 = vmatprep.subr.bf16.mxu0 %v985
    %1464 = vmatpush2.bf16.msra.mxu0 %v984
    %1465 = vmatprep.subr.bf16.mxu0 %v981
    %1466 = vmatpush2.bf16.msra.mxu0 %v980
    %1467 = vmatprep.subr.bf16.mxu0 %v977
    %1468 = vmatpush2.bf16.msra.mxu0 %v976
    %1469 = vmatprep.subr.bf16.mxu0 %v973
    %1470 = vmatpush2.bf16.msra.mxu0 %v972
    %1471 = vmatprep.subr.bf16.mxu0 %v969
    %1472 = vmatpush2.bf16.msra.mxu0 %v968
    %1473 = vmatprep.subr.bf16.mxu0 %v965
    %1474 = vmatpush2.bf16.msra.mxu0 %v964
    %1475 = vmatprep.subr.bf16.mxu0 %v961
    %1476 = vmatpush2.bf16.msra.mxu0 %v960
    %1477 = vmatprep.mubr.bf16.mxu0 %v593
    %1478 = vmatmul.mubr.bf16.gmra.mxu0 %v1188
    %v1479 = vpop.f32.mrf.mxu0
    %v1480 = vadd.f32 %v722, %v1479
    %v1481 = vpop.f32.mrf.mxu0
    %v1482 = vadd.f32 %v723, %v1481
    %v1483 = vpop.f32.mrf.mxu0
    %v1484 = vadd.f32 %v729, %v1483
    %v1485 = vpop.f32.mrf.mxu0
    %v1486 = vadd.f32 %v730, %v1485
    %1487 = vdwg.mxu0
    %1488 = vmatprep.subr.bf16.mxu0 %v959
    %1489 = vmatpush1.bf16.msra.mxu0 %v958
    %1490 = vmatprep.subr.bf16.mxu0 %v955
    %1491 = vmatpush1.bf16.msra.mxu0 %v954
    %1492 = vmatprep.subr.bf16.mxu0 %v951
    %1493 = vmatpush1.bf16.msra.mxu0 %v950
    %1494 = vmatprep.subr.bf16.mxu0 %v947
    %1495 = vmatpush1.bf16.msra.mxu0 %v946
    %1496 = vmatprep.subr.bf16.mxu0 %v943
    %1497 = vmatpush1.bf16.msra.mxu0 %v942
    %1498 = vmatprep.subr.bf16.mxu0 %v939
    %1499 = vmatpush1.bf16.msra.mxu0 %v938
    %1500 = vmatprep.subr.bf16.mxu0 %v935
    %1501 = vmatpush1.bf16.msra.mxu0 %v934
    %1502 = vmatprep.subr.bf16.mxu0 %v931
    %1503 = vmatpush1.bf16.msra.mxu0 %v930
    %1504 = vmatprep.subr.bf16.mxu0 %v991
    %1505 = vmatpush2.bf16.msra.mxu0 %v990
    %1506 = vmatprep.subr.bf16.mxu0 %v987
    %1507 = vmatpush2.bf16.msra.mxu0 %v986
    %1508 = vmatprep.subr.bf16.mxu0 %v983
    %1509 = vmatpush2.bf16.msra.mxu0 %v982
    %1510 = vmatprep.subr.bf16.mxu0 %v979
    %1511 = vmatpush2.bf16.msra.mxu0 %v978
    %1512 = vmatprep.subr.bf16.mxu0 %v975
    %1513 = vmatpush2.bf16.msra.mxu0 %v974
    %1514 = vmatprep.subr.bf16.mxu0 %v971
    %1515 = vmatpush2.bf16.msra.mxu0 %v970
    %1516 = vmatprep.subr.bf16.mxu0 %v967
    %1517 = vmatpush2.bf16.msra.mxu0 %v966
    %1518 = vmatprep.subr.bf16.mxu0 %v963
    %1519 = vmatpush2.bf16.msra.mxu0 %v962
    %1520 = vmatprep.mubr.bf16.mxu0 %v593
    %1521 = vmatmul.mubr.bf16.gmra.mxu0 %v1188
    %v1522 = vpop.f32.mrf.mxu0
    %v1523 = vadd.f32 %v724, %v1522
    %v1524 = vpop.f32.mrf.mxu0
    %v1525 = vadd.f32 %v725, %v1524
    %v1526 = vpop.f32.mrf.mxu0
    %v1527 = vadd.f32 %v731, %v1526
    %v1528 = vpop.f32.mrf.mxu0
    %v1529 = vadd.f32 %v732, %v1528
    %1530 = vdwg.mxu0
    %1531 = vmatprep.subr.bf16.mxu0 %v1371
    %1532 = vmatpush1.bf16.msra.mxu0 %v1370
    %1533 = vmatprep.subr.bf16.mxu0 %v1368
    %1534 = vmatpush1.bf16.msra.mxu0 %v1367
    %1535 = vmatprep.subr.bf16.mxu0 %v1365
    %1536 = vmatpush1.bf16.msra.mxu0 %v1364
    %1537 = vmatprep.subr.bf16.mxu0 %v1362
    %1538 = vmatpush1.bf16.msra.mxu0 %v1361
    %1539 = vmatprep.subr.bf16.mxu0 %v1359
    %1540 = vmatpush1.bf16.msra.mxu0 %v1358
    %1541 = vmatprep.subr.bf16.mxu0 %v1356
    %1542 = vmatpush1.bf16.msra.mxu0 %v1355
    %1543 = vmatprep.subr.bf16.mxu0 %v1353
    %1544 = vmatpush1.bf16.msra.mxu0 %v1352
    %1545 = vmatprep.subr.bf16.mxu0 %v1350
    %1546 = vmatpush1.bf16.msra.mxu0 %v1349
    %1547 = vmatprep.subr.bf16.mxu0 %v1395
    %1548 = vmatpush2.bf16.msra.mxu0 %v1394
    %1549 = vmatprep.subr.bf16.mxu0 %v1392
    %1550 = vmatpush2.bf16.msra.mxu0 %v1391
    %1551 = vmatprep.subr.bf16.mxu0 %v1389
    %1552 = vmatpush2.bf16.msra.mxu0 %v1388
    %1553 = vmatprep.subr.bf16.mxu0 %v1386
    %1554 = vmatpush2.bf16.msra.mxu0 %v1385
    %1555 = vmatprep.subr.bf16.mxu0 %v1383
    %1556 = vmatpush2.bf16.msra.mxu0 %v1382
    %1557 = vmatprep.subr.bf16.mxu0 %v1380
    %1558 = vmatpush2.bf16.msra.mxu0 %v1379
    %1559 = vmatprep.subr.bf16.mxu0 %v1377
    %1560 = vmatpush2.bf16.msra.mxu0 %v1376
    %1561 = vmatprep.subr.bf16.mxu0 %v1374
    %1562 = vmatpush2.bf16.msra.mxu0 %v1373
    %1563 = vmatprep.mubr.bf16.mxu0 %v593
    %1564 = vmatmul.mubr.bf16.gmra.mxu0 %v1188
    %v1565 = vpop.f32.mrf.mxu0
    %v1566 = vadd.f32 %v726, %v1565
    %v1567 = vpop.f32.mrf.mxu0
    %v1568 = vadd.f32 %v727, %v1567
    %v1569 = vpop.f32.mrf.mxu0
    %v1570 = vadd.f32 %v733, %v1569
    %v1571 = vpop.f32.mrf.mxu0
    %v1572 = vadd.f32 %v734, %v1571
    %1573 = vdwg.mxu0
    %1574 = vmatprep.subr.bf16.mxu0 0
    %1575 = vmatpush1.bf16.msra.mxu0 %v1372
    %1576 = vmatprep.subr.bf16.mxu0 0
    %1577 = vmatpush1.bf16.msra.mxu0 %v1369
    %1578 = vmatprep.subr.bf16.mxu0 0
    %1579 = vmatpush1.bf16.msra.mxu0 %v1366
    %1580 = vmatprep.subr.bf16.mxu0 0
    %1581 = vmatpush1.bf16.msra.mxu0 %v1363
    %1582 = vmatprep.subr.bf16.mxu0 0
    %1583 = vmatpush1.bf16.msra.mxu0 %v1360
    %1584 = vmatprep.subr.bf16.mxu0 0
    %1585 = vmatpush1.bf16.msra.mxu0 %v1357
    %1586 = vmatprep.subr.bf16.mxu0 0
    %1587 = vmatpush1.bf16.msra.mxu0 %v1354
    %1588 = vmatprep.subr.bf16.mxu0 0
    %1589 = vmatpush1.bf16.msra.mxu0 %v1351
    %1590 = vmatprep.subr.bf16.mxu0 0
    %1591 = vmatpush2.bf16.msra.mxu0 %v1396
    %1592 = vmatprep.subr.bf16.mxu0 0
    %1593 = vmatpush2.bf16.msra.mxu0 %v1393
    %1594 = vmatprep.subr.bf16.mxu0 0
    %1595 = vmatpush2.bf16.msra.mxu0 %v1390
    %1596 = vmatprep.subr.bf16.mxu0 0
    %1597 = vmatpush2.bf16.msra.mxu0 %v1387
    %1598 = vmatprep.subr.bf16.mxu0 0
    %1599 = vmatpush2.bf16.msra.mxu0 %v1384
    %1600 = vmatprep.subr.bf16.mxu0 0
    %1601 = vmatpush2.bf16.msra.mxu0 %v1381
    %1602 = vmatprep.subr.bf16.mxu0 0
    %1603 = vmatpush2.bf16.msra.mxu0 %v1378
    %1604 = vmatprep.subr.bf16.mxu0 0
    %1605 = vmatpush2.bf16.msra.mxu0 %v1375
    %1606 = vmatprep.mubr.bf16.mxu0 %v593
    %1607 = vmatmul.mubr.bf16.gmra.mxu0 %v1188
    %v1608 = vpop.f32.mrf.mxu0
    %v1609 = vadd.f32 %v728, %v1608
    %v1610 = vpop.f32.mrf.mxu0
    %v1611 = vpop.f32.mrf.mxu0
    %v1612 = vadd.f32 %v735, %v1611
    %v1613 = vpop.f32.mrf.mxu0
    %1614 = vdwg.mxu0
    %v1615 = vxor.u32 %v1525, 2147483648
    %v1616 = vxor.u32 %v1566, 2147483648
    %v1617 = vxor.u32 %v1529, 2147483648
    %v1618 = vxor.u32 %v1570, 2147483648
    %v1619 = vmul.f32 %v1615, 1.442695
    %v1620 = vpow.pop %v1619
    %v1621 = vmul.f32 %v1616, 1.442695
    %v1622 = vpow.pop %v1621
    %v1623 = vmul.f32 %v1617, 1.442695
    %v1624 = vpow.pop %v1623
    %v1625 = vmul.f32 %v1618, 1.442695
    %v1626 = vpow.pop %v1625
    %v1627 = vadd.f32 %v1620, 1.0
    %v1628 = vadd.f32 %v1622, 1.0
    %v1629 = vadd.f32 %v1624, 1.0
    %v1630 = vadd.f32 %v1626, 1.0
    %v1631 = vrcp.pop %v1627
    %v1632 = vmul.f32 1.0, %v1631
    %v1633 = vrcp.pop %v1628
    %v1634 = vmul.f32 1.0, %v1633
    %v1635 = vrcp.pop %v1629
    %v1636 = vmul.f32 1.0, %v1635
    %v1637 = vrcp.pop %v1630
    %v1638 = vmul.f32 1.0, %v1637
    %v1639 = vmul.f32 %v1632, %v1609
    %v1640 = vmul.f32 %v1636, %v1612
    %v1641 = vadd.f32 %v1568, %v1639
    %v1642 = vadd.f32 %v1572, %v1640
    %v1643 = vtanh.pop %v1641
    %v1644 = vtanh.pop %v1642
    %v1645 = vsub.f32 1.0, %v1634
    %v1646 = vsub.f32 1.0, %v1638
    %v1647 = vmul.f32 %v1645, %v1643
    %v1648 = vmul.f32 %v1646, %v1644
    %v1649 = vmul.f32 %v1634, %v590
    %v1650 = vmul.f32 %v1638, %v591
    %v1651 = vadd.f32 %v1647, %v1649
    %v1652 = vadd.f32 %v1648, %v1650
    %1653 = vst [vmem:[#allocation3] sm:$0xff] %v1651
    %1654 = vst [vmem:[#allocation3 + $0x8] sm:$0xff] %v1652
    %s1655 = smul.u32 2, 3
    %s1656 = smul.addr %s1655, 8
    %s1657 = scalar_lea.vmem [#allocation2], %s1656
    %v1658 = vld [vmem:[%s1657] sm:$0xff]
    %v1659 = vld [vmem:[%s1657 + $0x8] sm:$0xff]
    %v1660 = vld [vmem:[%s1657 + $0x10] sm:$0xff]
    %v1661 = vld [vmem:[%s1657 + $0x18] sm:$0xff]
    %v1662 = vld [vmem:[%s1657 + $0x20] sm:$0xff]
    %v1663 = vld [vmem:[%s1657 + $0x28] sm:$0xff]
    %v1664 = vadd.f32 %v1658, %v1480
    %v1665 = vadd.f32 %v1659, %v1482
    %v1666 = vadd.f32 %v1661, %v1484
    %v1667 = vadd.f32 %v1662, %v1486
    %v1668 = vxor.u32 %v1664, 2147483648
    %v1669 = vxor.u32 %v1665, 2147483648
    %v1670 = vxor.u32 %v1666, 2147483648
    %v1671 = vxor.u32 %v1667, 2147483648
    %v1672 = vmul.f32 %v1668, 1.442695
    %v1673 = vpow.pop %v1672
    %v1674 = vmul.f32 %v1669, 1.442695
    %v1675 = vpow.pop %v1674
    %v1676 = vmul.f32 %v1670, 1.442695
    %v1677 = vpow.pop %v1676
    %v1678 = vmul.f32 %v1671, 1.442695
    %v1679 = vpow.pop %v1678
    %v1680 = vadd.f32 %v1673, 1.0
    %v1681 = vadd.f32 %v1675, 1.0
    %v1682 = vadd.f32 %v1677, 1.0
    %v1683 = vadd.f32 %v1679, 1.0
    %v1684 = vrcp.pop %v1680
    %v1685 = vmul.f32 1.0, %v1684
    %v1686 = vrcp.pop %v1681
    %v1687 = vmul.f32 1.0, %v1686
    %v1688 = vrcp.pop %v1682
    %v1689 = vmul.f32 1.0, %v1688
    %v1690 = vrcp.pop %v1683
    %v1691 = vmul.f32 1.0, %v1690
    %v1692 = vmul.f32 %v1685, %v1523
    %v1693 = vmul.f32 %v1689, %v1527
    %v1694 = vadd.f32 %v1660, %v1692
    %v1695 = vadd.f32 %v1663, %v1693
    %v1696 = vtanh.pop %v1694
    %v1697 = vtanh.pop %v1695
    %v1698 = vsub.f32 1.0, %v1687
    %v1699 = vsub.f32 1.0, %v1691
    %v1700 = vmul.f32 %v1698, %v1696
    %v1701 = vmul.f32 %v1699, %v1697
    %v1702 = vmul.f32 %v1687, %v1186
    %v1703 = vmul.f32 %v1691, %v1187
    %v1704 = vadd.f32 %v1700, %v1702
    %v1705 = vadd.f32 %v1701, %v1703
    %v1706 = vpack.c.bf16 %v1705, %v1704
    %v1707 = vpack.c.bf16 %v1652, %v1651
    %v1708 = vld [vmem:[#allocation13] sm:$0xff]
    %v1709 = vld [vmem:[#allocation13 + $0x8] sm:$0xff]
    %v1710 = vld [vmem:[#allocation13 + $0x10] sm:$0xff]
    %v1711 = vld [vmem:[#allocation13 + $0x18] sm:$0xf]
    %v1712 = vld [vmem:[#allocation13 + $0x1c] sm:$0xff]
    %v1713 = vld [vmem:[#allocation13 + $0x24] sm:$0xff]
    %v1714 = vld [vmem:[#allocation13 + $0x2c] sm:$0xff]
    %v1715 = vld [vmem:[#allocation13 + $0x34] sm:$0xf]
    %v1716 = vld [vmem:[#allocation13 + $0x38] sm:$0xff]
    %v1717 = vld [vmem:[#allocation13 + $0x40] sm:$0xff]
    %v1718 = vld [vmem:[#allocation13 + $0x48] sm:$0xff]
    %v1719 = vld [vmem:[#allocation13 + $0x50] sm:$0xf]
    %v1720 = vld [vmem:[#allocation13 + $0x54] sm:$0xff]
    %v1721 = vld [vmem:[#allocation13 + $0x5c] sm:$0xff]
    %v1722 = vld [vmem:[#allocation13 + $0x64] sm:$0xff]
    %v1723 = vld [vmem:[#allocation13 + $0x6c] sm:$0xf]
    %v1724 = vld [vmem:[#allocation13 + $0x70] sm:$0xff]
    %v1725 = vld [vmem:[#allocation13 + $0x78] sm:$0xff]
    %v1726 = vld [vmem:[#allocation13 + $0x80] sm:$0xff]
    %v1727 = vld [vmem:[#allocation13 + $0x88] sm:$0xf]
    %v1728 = vld [vmem:[#allocation13 + $0x8c] sm:$0xff]
    %v1729 = vld [vmem:[#allocation13 + $0x94] sm:$0xff]
    %v1730 = vld [vmem:[#allocation13 + $0x9c] sm:$0xff]
    %v1731 = vld [vmem:[#allocation13 + $0xa4] sm:$0xf]
    %v1732 = vld [vmem:[#allocation13 + $0xa8] sm:$0xff]
    %v1733 = vld [vmem:[#allocation13 + $0xb0] sm:$0xff]
    %v1734 = vld [vmem:[#allocation13 + $0xb8] sm:$0xff]
    %v1735 = vld [vmem:[#allocation13 + $0xc0] sm:$0xf]
    %v1736 = vld [vmem:[#allocation13 + $0xc4] sm:$0xff]
    %v1737 = vld [vmem:[#allocation13 + $0xcc] sm:$0xff]
    %v1738 = vld [vmem:[#allocation13 + $0xd4] sm:$0xff]
    %v1739 = vld [vmem:[#allocation13 + $0xdc] sm:$0xf]
    %v1740 = vld [vmem:[#allocation13 + $0xe0] sm:$0xff]
    %v1741 = vld [vmem:[#allocation13 + $0xe8] sm:$0xff]
    %v1742 = vld [vmem:[#allocation13 + $0xf0] sm:$0xff]
    %v1743 = vld [vmem:[#allocation13 + $0xf8] sm:$0xf]
    %v1744 = vld [vmem:[#allocation13 + $0xfc] sm:$0xff]
    %v1745 = vld [vmem:[#allocation13 + $0x104] sm:$0xff]
    %v1746 = vld [vmem:[#allocation13 + $0x10c] sm:$0xff]
    %v1747 = vld [vmem:[#allocation13 + $0x114] sm:$0xf]
    %v1748 = vld [vmem:[#allocation13 + $0x118] sm:$0xff]
    %v1749 = vld [vmem:[#allocation13 + $0x120] sm:$0xff]
    %v1750 = vld [vmem:[#allocation13 + $0x128] sm:$0xff]
    %v1751 = vld [vmem:[#allocation13 + $0x130] sm:$0xf]
    %v1752 = vld [vmem:[#allocation13 + $0x134] sm:$0xff]
    %v1753 = vld [vmem:[#allocation13 + $0x13c] sm:$0xff]
    %v1754 = vld [vmem:[#allocation13 + $0x144] sm:$0xff]
    %v1755 = vld [vmem:[#allocation13 + $0x14c] sm:$0xf]
    %v1756 = vld [vmem:[#allocation13 + $0x150] sm:$0xff]
    %v1757 = vld [vmem:[#allocation13 + $0x158] sm:$0xff]
    %v1758 = vld [vmem:[#allocation13 + $0x160] sm:$0xff]
    %v1759 = vld [vmem:[#allocation13 + $0x168] sm:$0xf]
    %v1760 = vld [vmem:[#allocation13 + $0x16c] sm:$0xff]
    %v1761 = vld [vmem:[#allocation13 + $0x174] sm:$0xff]
    %v1762 = vld [vmem:[#allocation13 + $0x17c] sm:$0xff]
    %v1763 = vld [vmem:[#allocation13 + $0x184] sm:$0xf]
    %v1764 = vld [vmem:[#allocation13 + $0x188] sm:$0xff]
    %v1765 = vld [vmem:[#allocation13 + $0x190] sm:$0xff]
    %v1766 = vld [vmem:[#allocation13 + $0x198] sm:$0xff]
    %v1767 = vld [vmem:[#allocation13 + $0x1a0] sm:$0xf]
    %v1768 = vld [vmem:[#allocation13 + $0x1a4] sm:$0xff]
    %v1769 = vld [vmem:[#allocation13 + $0x1ac] sm:$0xff]
    %v1770 = vld [vmem:[#allocation13 + $0x1b4] sm:$0xff]
    %v1771 = vld [vmem:[#allocation13 + $0x1bc] sm:$0xf]
    %v1772 = vld [vmem:[#allocation13 + $0x1c0] sm:$0xff]
    %v1773 = vld [vmem:[#allocation13 + $0x1c8] sm:$0xff]
    %v1774 = vld [vmem:[#allocation13 + $0x1d0] sm:$0xff]
    %v1775 = vld [vmem:[#allocation13 + $0x1d8] sm:$0xf]
    %v1776 = vld [vmem:[#allocation13 + $0x1dc] sm:$0xff]
    %v1777 = vld [vmem:[#allocation13 + $0x1e4] sm:$0xff]
    %v1778 = vld [vmem:[#allocation13 + $0x1ec] sm:$0xff]
    %v1779 = vld [vmem:[#allocation13 + $0x1f4] sm:$0xf]
    %v1780 = vld [vmem:[#allocation13 + $0x1f8] sm:$0xff]
    %v1781 = vld [vmem:[#allocation13 + $0x200] sm:$0xff]
    %v1782 = vld [vmem:[#allocation13 + $0x208] sm:$0xff]
    %v1783 = vld [vmem:[#allocation13 + $0x210] sm:$0xf]
    %v1784 = vld [vmem:[#allocation13 + $0x214] sm:$0xff]
    %v1785 = vld [vmem:[#allocation13 + $0x21c] sm:$0xff]
    %v1786 = vld [vmem:[#allocation13 + $0x224] sm:$0xff]
    %v1787 = vld [vmem:[#allocation13 + $0x22c] sm:$0xf]
    %v1788 = vld [vmem:[#allocation13 + $0x230] sm:$0xff]
    %v1789 = vld [vmem:[#allocation13 + $0x238] sm:$0xff]
    %v1790 = vld [vmem:[#allocation13 + $0x240] sm:$0xff]
    %v1791 = vld [vmem:[#allocation13 + $0x248] sm:$0xf]
    %v1792 = vld [vmem:[#allocation13 + $0x24c] sm:$0xff]
    %v1793 = vld [vmem:[#allocation13 + $0x254] sm:$0xff]
    %v1794 = vld [vmem:[#allocation13 + $0x25c] sm:$0xff]
    %v1795 = vld [vmem:[#allocation13 + $0x264] sm:$0xf]
    %v1796 = vld [vmem:[#allocation13 + $0x268] sm:$0xff]
    %v1797 = vld [vmem:[#allocation13 + $0x270] sm:$0xff]
    %v1798 = vld [vmem:[#allocation13 + $0x278] sm:$0xff]
    %v1799 = vld [vmem:[#allocation13 + $0x280] sm:$0xf]
    %v1800 = vld [vmem:[#allocation13 + $0x284] sm:$0xff]
    %v1801 = vld [vmem:[#allocation13 + $0x28c] sm:$0xff]
    %v1802 = vld [vmem:[#allocation13 + $0x294] sm:$0xff]
    %v1803 = vld [vmem:[#allocation13 + $0x29c] sm:$0xf]
    %v1804 = vld [vmem:[#allocation13 + $0x2a0] sm:$0xff]
    %v1805 = vld [vmem:[#allocation13 + $0x2a8] sm:$0xff]
    %v1806 = vld [vmem:[#allocation13 + $0x2b0] sm:$0xff]
    %v1807 = vld [vmem:[#allocation13 + $0x2b8] sm:$0xf]
    %v1808 = vld [vmem:[#allocation13 + $0x2bc] sm:$0xff]
    %v1809 = vld [vmem:[#allocation13 + $0x2c4] sm:$0xff]
    %v1810 = vld [vmem:[#allocation13 + $0x2cc] sm:$0xff]
    %v1811 = vld [vmem:[#allocation13 + $0x2d4] sm:$0xf]
    %v1812 = vld [vmem:[#allocation13 + $0x2d8] sm:$0xff]
    %v1813 = vld [vmem:[#allocation13 + $0x2e0] sm:$0xff]
    %v1814 = vld [vmem:[#allocation13 + $0x2e8] sm:$0xff]
    %v1815 = vld [vmem:[#allocation13 + $0x2f0] sm:$0xf]
    %v1816 = vld [vmem:[#allocation13 + $0x2f4] sm:$0xff]
    %v1817 = vld [vmem:[#allocation13 + $0x2fc] sm:$0xff]
    %v1818 = vld [vmem:[#allocation13 + $0x304] sm:$0xff]
    %v1819 = vld [vmem:[#allocation13 + $0x30c] sm:$0xf]
    %v1820 = vld [vmem:[#allocation13 + $0x310] sm:$0xff]
    %v1821 = vld [vmem:[#allocation13 + $0x318] sm:$0xff]
    %v1822 = vld [vmem:[#allocation13 + $0x320] sm:$0xff]
    %v1823 = vld [vmem:[#allocation13 + $0x328] sm:$0xf]
    %v1824 = vld [vmem:[#allocation13 + $0x32c] sm:$0xff]
    %v1825 = vld [vmem:[#allocation13 + $0x334] sm:$0xff]
    %v1826 = vld [vmem:[#allocation13 + $0x33c] sm:$0xff]
    %v1827 = vld [vmem:[#allocation13 + $0x344] sm:$0xf]
    %v1828 = vld [vmem:[#allocation13 + $0x348] sm:$0xff]
    %v1829 = vld [vmem:[#allocation13 + $0x350] sm:$0xff]
    %v1830 = vld [vmem:[#allocation13 + $0x358] sm:$0xff]
    %v1831 = vld [vmem:[#allocation13 + $0x360] sm:$0xf]
    %v1832 = vld [vmem:[#allocation13 + $0x364] sm:$0xff]
    %v1833 = vld [vmem:[#allocation13 + $0x36c] sm:$0xff]
    %v1834 = vld [vmem:[#allocation13 + $0x374] sm:$0xff]
    %v1835 = vld [vmem:[#allocation13 + $0x37c] sm:$0xf]
    %v1836 = vld [vmem:[#allocation4] sm:$0xff]
    %v1837 = vld [vmem:[#allocation4 + $0x8] sm:$0xff]
    %v1838 = vld [vmem:[#allocation4 + $0x10] sm:$0xff]
    %v1839 = vld [vmem:[#allocation4 + $0x18] sm:$0xff]
    %v1840 = vld [vmem:[#allocation4 + $0x20] sm:$0xff]
    %v1841 = vld [vmem:[#allocation4 + $0x28] sm:$0xff]
    %v1842 = vld [vmem:[#allocation4 + $0x30] sm:$0xff]
    %v1843 = vld [vmem:[#allocation4 + $0x38] sm:$0xff]
    %v1844 = vld [vmem:[#allocation4 + $0x40] sm:$0xff]
    %v1845 = vld [vmem:[#allocation4 + $0x48] sm:$0xff]
    %v1846 = vld [vmem:[#allocation4 + $0x50] sm:$0xff]
    %v1847 = vld [vmem:[#allocation4 + $0x58] sm:$0xff]
    %v1848 = vld [vmem:[#allocation4 + $0x60] sm:$0xff]
    %v1849 = vld [vmem:[#allocation4 + $0x68] sm:$0xff]
    %v1978 = vunpack.c.l.b16 %v1708
    %v1979 = vunpack.c.h.b16 %v1708
    %v1980 = vunpack.c.l.b16 %v1709
    %v1981 = vunpack.c.h.b16 %v1709
    %v1982 = vunpack.c.l.b16 %v1710
    %v1983 = vunpack.c.h.b16 %v1710
    %v1984 = vunpack.c.l.b16 %v1711
    %v1985 = vunpack.c.l.b16 %v1712
    %v1986 = vunpack.c.h.b16 %v1712
    %v1987 = vunpack.c.l.b16 %v1713
    %v1988 = vunpack.c.h.b16 %v1713
    %v1989 = vunpack.c.l.b16 %v1714
    %v1990 = vunpack.c.h.b16 %v1714
    %v1991 = vunpack.c.l.b16 %v1715
    %v1992 = vunpack.c.l.b16 %v1716
    %v1993 = vunpack.c.h.b16 %v1716
    %v1994 = vunpack.c.l.b16 %v1717
    %v1995 = vunpack.c.h.b16 %v1717
    %v1996 = vunpack.c.l.b16 %v1718
    %v1997 = vunpack.c.h.b16 %v1718
    %v1998 = vunpack.c.l.b16 %v1719
    %v1999 = vunpack.c.l.b16 %v1720
    %v2000 = vunpack.c.h.b16 %v1720
    %v2001 = vunpack.c.l.b16 %v1721
    %v2002 = vunpack.c.h.b16 %v1721
    %v2003 = vunpack.c.l.b16 %v1722
    %v2004 = vunpack.c.h.b16 %v1722
    %v2005 = vunpack.c.l.b16 %v1723
    %v2006 = vunpack.c.l.b16 %v1724
    %v2007 = vunpack.c.h.b16 %v1724
    %v2008 = vunpack.c.l.b16 %v1725
    %v2009 = vunpack.c.h.b16 %v1725
    %v2010 = vunpack.c.l.b16 %v1726
    %v2011 = vunpack.c.h.b16 %v1726
    %v2012 = vunpack.c.l.b16 %v1727
    %v2013 = vunpack.c.l.b16 %v1728
    %v2014 = vunpack.c.h.b16 %v1728
    %v2015 = vunpack.c.l.b16 %v1729
    %v2016 = vunpack.c.h.b16 %v1729
    %v2017 = vunpack.c.l.b16 %v1730
    %v2018 = vunpack.c.h.b16 %v1730
    %v2019 = vunpack.c.l.b16 %v1731
    %v2020 = vunpack.c.l.b16 %v1732
    %v2021 = vunpack.c.h.b16 %v1732
    %v2022 = vunpack.c.l.b16 %v1733
    %v2023 = vunpack.c.h.b16 %v1733
    %v2024 = vunpack.c.l.b16 %v1734
    %v2025 = vunpack.c.h.b16 %v1734
    %v2026 = vunpack.c.l.b16 %v1735
    %v2027 = vunpack.c.l.b16 %v1736
    %v2028 = vunpack.c.h.b16 %v1736
    %v2029 = vunpack.c.l.b16 %v1737
    %v2030 = vunpack.c.h.b16 %v1737
    %v2031 = vunpack.c.l.b16 %v1738
    %v2032 = vunpack.c.h.b16 %v1738
    %v2033 = vunpack.c.l.b16 %v1739
    %v2034 = vunpack.c.l.b16 %v1740
    %v2035 = vunpack.c.h.b16 %v1740
    %v2036 = vunpack.c.l.b16 %v1741
    %v2037 = vunpack.c.h.b16 %v1741
    %v2038 = vunpack.c.l.b16 %v1742
    %v2039 = vunpack.c.h.b16 %v1742
    %v2040 = vunpack.c.l.b16 %v1743
    %v2041 = vunpack.c.l.b16 %v1744
    %v2042 = vunpack.c.h.b16 %v1744
    %v2043 = vunpack.c.l.b16 %v1745
    %v2044 = vunpack.c.h.b16 %v1745
    %v2045 = vunpack.c.l.b16 %v1746
    %v2046 = vunpack.c.h.b16 %v1746
    %v2047 = vunpack.c.l.b16 %v1747
    %v2048 = vunpack.c.l.b16 %v1748
    %v2049 = vunpack.c.h.b16 %v1748
    %v2050 = vunpack.c.l.b16 %v1749
    %v2051 = vunpack.c.h.b16 %v1749
    %v2052 = vunpack.c.l.b16 %v1750
    %v2053 = vunpack.c.h.b16 %v1750
    %v2054 = vunpack.c.l.b16 %v1751
    %v2055 = vunpack.c.l.b16 %v1752
    %v2056 = vunpack.c.h.b16 %v1752
    %v2057 = vunpack.c.l.b16 %v1753
    %v2058 = vunpack.c.h.b16 %v1753
    %v2059 = vunpack.c.l.b16 %v1754
    %v2060 = vunpack.c.h.b16 %v1754
    %v2061 = vunpack.c.l.b16 %v1755
    %v2062 = vunpack.c.l.b16 %v1756
    %v2063 = vunpack.c.h.b16 %v1756
    %v2064 = vunpack.c.l.b16 %v1757
    %v2065 = vunpack.c.h.b16 %v1757
    %v2066 = vunpack.c.l.b16 %v1758
    %v2067 = vunpack.c.h.b16 %v1758
    %v2068 = vunpack.c.l.b16 %v1759
    %v2069 = vunpack.c.l.b16 %v1760
    %v2070 = vunpack.c.h.b16 %v1760
    %v2071 = vunpack.c.l.b16 %v1761
    %v2072 = vunpack.c.h.b16 %v1761
    %v2073 = vunpack.c.l.b16 %v1762
    %v2074 = vunpack.c.h.b16 %v1762
    %v2075 = vunpack.c.l.b16 %v1763
    %v2076 = vunpack.c.l.b16 %v1764
    %v2077 = vunpack.c.h.b16 %v1764
    %v2078 = vunpack.c.l.b16 %v1765
    %v2079 = vunpack.c.h.b16 %v1765
    %v2080 = vunpack.c.l.b16 %v1766
    %v2081 = vunpack.c.h.b16 %v1766
    %v2082 = vunpack.c.l.b16 %v1767
    %v2083 = vunpack.c.l.b16 %v1768
    %v2084 = vunpack.c.h.b16 %v1768
    %v2085 = vunpack.c.l.b16 %v1769
    %v2086 = vunpack.c.h.b16 %v1769
    %v2087 = vunpack.c.l.b16 %v1770
    %v2088 = vunpack.c.h.b16 %v1770
    %v2089 = vunpack.c.l.b16 %v1771
    %v2090 = vunpack.c.l.b16 %v1772
    %v2091 = vunpack.c.h.b16 %v1772
    %v2092 = vunpack.c.l.b16 %v1773
    %v2093 = vunpack.c.h.b16 %v1773
    %v2094 = vunpack.c.l.b16 %v1774
    %v2095 = vunpack.c.h.b16 %v1774
    %v2096 = vunpack.c.l.b16 %v1775
    %v2097 = vunpack.c.l.b16 %v1776
    %v2098 = vunpack.c.h.b16 %v1776
    %v2099 = vunpack.c.l.b16 %v1777
    %v2100 = vunpack.c.h.b16 %v1777
    %v2101 = vunpack.c.l.b16 %v1778
    %v2102 = vunpack.c.h.b16 %v1778
    %v2103 = vunpack.c.l.b16 %v1779
    %v2104 = vunpack.c.l.b16 %v1780
    %v2105 = vunpack.c.h.b16 %v1780
    %v2106 = vunpack.c.l.b16 %v1781
    %v2107 = vunpack.c.h.b16 %v1781
    %v2108 = vunpack.c.l.b16 %v1782
    %v2109 = vunpack.c.h.b16 %v1782
    %v2110 = vunpack.c.l.b16 %v1783
    %v2111 = vunpack.c.l.b16 %v1784
    %v2112 = vunpack.c.h.b16 %v1784
    %v2113 = vunpack.c.l.b16 %v1785
    %v2114 = vunpack.c.h.b16 %v1785
    %v2115 = vunpack.c.l.b16 %v1786
    %v2116 = vunpack.c.h.b16 %v1786
    %v2117 = vunpack.c.l.b16 %v1787
    %v2118 = vunpack.c.l.b16 %v1788
    %v2119 = vunpack.c.h.b16 %v1788
    %v2120 = vunpack.c.l.b16 %v1789
    %v2121 = vunpack.c.h.b16 %v1789
    %v2122 = vunpack.c.l.b16 %v1790
    %v2123 = vunpack.c.h.b16 %v1790
    %v2124 = vunpack.c.l.b16 %v1791
    %v2125 = vunpack.c.l.b16 %v1792
    %v2126 = vunpack.c.h.b16 %v1792
    %v2127 = vunpack.c.l.b16 %v1793
    %v2128 = vunpack.c.h.b16 %v1793
    %v2129 = vunpack.c.l.b16 %v1794
    %v2130 = vunpack.c.h.b16 %v1794
    %v2131 = vunpack.c.l.b16 %v1795
    %v2132 = vunpack.c.l.b16 %v1796
    %v2133 = vunpack.c.h.b16 %v1796
    %v2134 = vunpack.c.l.b16 %v1797
    %v2135 = vunpack.c.h.b16 %v1797
    %v2136 = vunpack.c.l.b16 %v1798
    %v2137 = vunpack.c.h.b16 %v1798
    %v2138 = vunpack.c.l.b16 %v1799
    %v2139 = vunpack.c.l.b16 %v1800
    %v2140 = vunpack.c.h.b16 %v1800
    %v2141 = vunpack.c.l.b16 %v1801
    %v2142 = vunpack.c.h.b16 %v1801
    %v2143 = vunpack.c.l.b16 %v1802
    %v2144 = vunpack.c.h.b16 %v1802
    %v2145 = vunpack.c.l.b16 %v1803
    %v2146 = vunpack.c.l.b16 %v1804
    %v2147 = vunpack.c.h.b16 %v1804
    %v2148 = vunpack.c.l.b16 %v1805
    %v2149 = vunpack.c.h.b16 %v1805
    %v2150 = vunpack.c.l.b16 %v1806
    %v2151 = vunpack.c.h.b16 %v1806
    %v2152 = vunpack.c.l.b16 %v1807
    %v2153 = vunpack.c.l.b16 %v1808
    %v2154 = vunpack.c.h.b16 %v1808
    %v2155 = vunpack.c.l.b16 %v1809
    %v2156 = vunpack.c.h.b16 %v1809
    %v2157 = vunpack.c.l.b16 %v1810
    %v2158 = vunpack.c.h.b16 %v1810
    %v2159 = vunpack.c.l.b16 %v1811
    %v2160 = vunpack.c.l.b16 %v1812
    %v2161 = vunpack.c.h.b16 %v1812
    %v2162 = vunpack.c.l.b16 %v1813
    %v2163 = vunpack.c.h.b16 %v1813
    %v2164 = vunpack.c.l.b16 %v1814
    %v2165 = vunpack.c.h.b16 %v1814
    %v2166 = vunpack.c.l.b16 %v1815
    %v2167 = vunpack.c.l.b16 %v1816
    %v2168 = vunpack.c.h.b16 %v1816
    %v2169 = vunpack.c.l.b16 %v1817
    %v2170 = vunpack.c.h.b16 %v1817
    %v2171 = vunpack.c.l.b16 %v1818
    %v2172 = vunpack.c.h.b16 %v1818
    %v2173 = vunpack.c.l.b16 %v1819
    %v2174 = vunpack.c.l.b16 %v1820
    %v2175 = vunpack.c.h.b16 %v1820
    %v2176 = vunpack.c.l.b16 %v1821
    %v2177 = vunpack.c.h.b16 %v1821
    %v2178 = vunpack.c.l.b16 %v1822
    %v2179 = vunpack.c.h.b16 %v1822
    %v2180 = vunpack.c.l.b16 %v1823
    %v2181 = vunpack.c.l.b16 %v1824
    %v2182 = vunpack.c.h.b16 %v1824
    %v2183 = vunpack.c.l.b16 %v1825
    %v2184 = vunpack.c.h.b16 %v1825
    %v2185 = vunpack.c.l.b16 %v1826
    %v2186 = vunpack.c.h.b16 %v1826
    %v2187 = vunpack.c.l.b16 %v1827
    %v2188 = vunpack.c.l.b16 %v1828
    %v2189 = vunpack.c.h.b16 %v1828
    %v2190 = vunpack.c.l.b16 %v1829
    %v2191 = vunpack.c.h.b16 %v1829
    %v2192 = vunpack.c.l.b16 %v1830
    %v2193 = vunpack.c.h.b16 %v1830
    %v2194 = vunpack.c.l.b16 %v1831
    %v2195 = vunpack.c.l.b16 %v1832
    %v2196 = vunpack.c.h.b16 %v1832
    %v2197 = vunpack.c.l.b16 %v1833
    %v2198 = vunpack.c.h.b16 %v1833
    %v2199 = vunpack.c.l.b16 %v1834
    %v2200 = vunpack.c.h.b16 %v1834
    %v2201 = vunpack.c.l.b16 %v1835
    %v2202 = vpack.c.b16 %v1985, %v1978
    %v2203 = vpack.c.b16 %v1986, %v1979
    %v2204 = vpack.c.b16 %v1987, %v1980
    %v2205 = vpack.c.b16 %v1988, %v1981
    %v2206 = vpack.c.b16 %v1989, %v1982
    %v2207 = vpack.c.b16 %v1990, %v1983
    %v2208 = vpack.c.b16 %v1991, %v1984
    %v2209 = vpack.c.b16 %v1999, %v1992
    %v2210 = vpack.c.b16 %v2000, %v1993
    %v2211 = vpack.c.b16 %v2001, %v1994
    %v2212 = vpack.c.b16 %v2002, %v1995
    %v2213 = vpack.c.b16 %v2003, %v1996
    %v2214 = vpack.c.b16 %v2004, %v1997
    %v2215 = vpack.c.b16 %v2005, %v1998
    %v2216 = vpack.c.b16 %v2013, %v2006
    %v2217 = vpack.c.b16 %v2014, %v2007
    %v2218 = vpack.c.b16 %v2015, %v2008
    %v2219 = vpack.c.b16 %v2016, %v2009
    %v2220 = vpack.c.b16 %v2017, %v2010
    %v2221 = vpack.c.b16 %v2018, %v2011
    %v2222 = vpack.c.b16 %v2019, %v2012
    %v2223 = vpack.c.b16 %v2027, %v2020
    %v2224 = vpack.c.b16 %v2028, %v2021
    %v2225 = vpack.c.b16 %v2029, %v2022
    %v2226 = vpack.c.b16 %v2030, %v2023
    %v2227 = vpack.c.b16 %v2031, %v2024
    %v2228 = vpack.c.b16 %v2032, %v2025
    %v2229 = vpack.c.b16 %v2033, %v2026
    %v2230 = vpack.c.b16 %v2041, %v2034
    %v2231 = vpack.c.b16 %v2042, %v2035
    %v2232 = vpack.c.b16 %v2043, %v2036
    %v2233 = vpack.c.b16 %v2044, %v2037
    %v2234 = vpack.c.b16 %v2045, %v2038
    %v2235 = vpack.c.b16 %v2046, %v2039
    %v2236 = vpack.c.b16 %v2047, %v2040
    %v2237 = vpack.c.b16 %v2055, %v2048
    %v2238 = vpack.c.b16 %v2056, %v2049
    %v2239 = vpack.c.b16 %v2057, %v2050
    %v2240 = vpack.c.b16 %v2058, %v2051
    %v2241 = vpack.c.b16 %v2059, %v2052
    %v2242 = vpack.c.b16 %v2060, %v2053
    %v2243 = vpack.c.b16 %v2061, %v2054
    %v2244 = vpack.c.b16 %v2069, %v2062
    %v2245 = vpack.c.b16 %v2070, %v2063
    %v2246 = vpack.c.b16 %v2071, %v2064
    %v2247 = vpack.c.b16 %v2072, %v2065
    %v2248 = vpack.c.b16 %v2073, %v2066
    %v2249 = vpack.c.b16 %v2074, %v2067
    %v2250 = vpack.c.b16 %v2075, %v2068
    %v2251 = vpack.c.b16 %v2083, %v2076
    %v2252 = vpack.c.b16 %v2084, %v2077
    %v2253 = vpack.c.b16 %v2085, %v2078
    %v2254 = vpack.c.b16 %v2086, %v2079
    %v2255 = vpack.c.b16 %v2087, %v2080
    %v2256 = vpack.c.b16 %v2088, %v2081
    %v2257 = vpack.c.b16 %v2089, %v2082
    %v2258 = vpack.c.b16 %v2097, %v2090
    %v2259 = vpack.c.b16 %v2098, %v2091
    %v2260 = vpack.c.b16 %v2099, %v2092
    %v2261 = vpack.c.b16 %v2100, %v2093
    %v2262 = vpack.c.b16 %v2101, %v2094
    %v2263 = vpack.c.b16 %v2102, %v2095
    %v2264 = vpack.c.b16 %v2103, %v2096
    %v2265 = vpack.c.b16 %v2111, %v2104
    %v2266 = vpack.c.b16 %v2112, %v2105
    %v2267 = vpack.c.b16 %v2113, %v2106
    %v2268 = vpack.c.b16 %v2114, %v2107
    %v2269 = vpack.c.b16 %v2115, %v2108
    %v2270 = vpack.c.b16 %v2116, %v2109
    %v2271 = vpack.c.b16 %v2117, %v2110
    %v2272 = vpack.c.b16 %v2125, %v2118
    %v2273 = vpack.c.b16 %v2126, %v2119
    %v2274 = vpack.c.b16 %v2127, %v2120
    %v2275 = vpack.c.b16 %v2128, %v2121
    %v2276 = vpack.c.b16 %v2129, %v2122
    %v2277 = vpack.c.b16 %v2130, %v2123
    %v2278 = vpack.c.b16 %v2131, %v2124
    %v2279 = vpack.c.b16 %v2139, %v2132
    %v2280 = vpack.c.b16 %v2140, %v2133
    %v2281 = vpack.c.b16 %v2141, %v2134
    %v2282 = vpack.c.b16 %v2142, %v2135
    %v2283 = vpack.c.b16 %v2143, %v2136
    %v2284 = vpack.c.b16 %v2144, %v2137
    %v2285 = vpack.c.b16 %v2145, %v2138
    %v2286 = vpack.c.b16 %v2153, %v2146
    %v2287 = vpack.c.b16 %v2154, %v2147
    %v2288 = vpack.c.b16 %v2155, %v2148
    %v2289 = vpack.c.b16 %v2156, %v2149
    %v2290 = vpack.c.b16 %v2157, %v2150
    %v2291 = vpack.c.b16 %v2158, %v2151
    %v2292 = vpack.c.b16 %v2159, %v2152
    %v2293 = vpack.c.b16 %v2167, %v2160
    %v2294 = vpack.c.b16 %v2168, %v2161
    %v2295 = vpack.c.b16 %v2169, %v2162
    %v2296 = vpack.c.b16 %v2170, %v2163
    %v2297 = vpack.c.b16 %v2171, %v2164
    %v2298 = vpack.c.b16 %v2172, %v2165
    %v2299 = vpack.c.b16 %v2173, %v2166
    %v2300 = vpack.c.b16 %v2181, %v2174
    %v2301 = vpack.c.b16 %v2182, %v2175
    %v2302 = vpack.c.b16 %v2183, %v2176
    %v2303 = vpack.c.b16 %v2184, %v2177
    %v2304 = vpack.c.b16 %v2185, %v2178
    %v2305 = vpack.c.b16 %v2186, %v2179
    %v2306 = vpack.c.b16 %v2187, %v2180
    %v2307 = vpack.c.b16 %v2195, %v2188
    %v2308 = vpack.c.b16 %v2196, %v2189
    %v2309 = vpack.c.b16 %v2197, %v2190
    %v2310 = vpack.c.b16 %v2198, %v2191
    %v2311 = vpack.c.b16 %v2199, %v2192
    %v2312 = vpack.c.b16 %v2200, %v2193
    %v2313 = vpack.c.b16 %v2201, %v2194
    %2426 = vmatprep.subr.bf16.mxu0 %v2252
    %2427 = vmatpush1.bf16.msra.mxu0 %v2251
    %2428 = vmatprep.subr.bf16.mxu0 %v2245
    %2429 = vmatpush1.bf16.msra.mxu0 %v2244
    %2430 = vmatprep.subr.bf16.mxu0 %v2238
    %2431 = vmatpush1.bf16.msra.mxu0 %v2237
    %2432 = vmatprep.subr.bf16.mxu0 %v2231
    %2433 = vmatpush1.bf16.msra.mxu0 %v2230
    %2434 = vmatprep.subr.bf16.mxu0 %v2224
    %2435 = vmatpush1.bf16.msra.mxu0 %v2223
    %2436 = vmatprep.subr.bf16.mxu0 %v2217
    %2437 = vmatpush1.bf16.msra.mxu0 %v2216
    %2438 = vmatprep.subr.bf16.mxu0 %v2210
    %2439 = vmatpush1.bf16.msra.mxu0 %v2209
    %2440 = vmatprep.subr.bf16.mxu0 %v2203
    %2441 = vmatpush1.bf16.msra.mxu0 %v2202
    %2442 = vmatprep.subr.bf16.mxu0 %v2308
    %2443 = vmatpush2.bf16.msra.mxu0 %v2307
    %2444 = vmatprep.subr.bf16.mxu0 %v2301
    %2445 = vmatpush2.bf16.msra.mxu0 %v2300
    %2446 = vmatprep.subr.bf16.mxu0 %v2294
    %2447 = vmatpush2.bf16.msra.mxu0 %v2293
    %2448 = vmatprep.subr.bf16.mxu0 %v2287
    %2449 = vmatpush2.bf16.msra.mxu0 %v2286
    %2450 = vmatprep.subr.bf16.mxu0 %v2280
    %2451 = vmatpush2.bf16.msra.mxu0 %v2279
    %2452 = vmatprep.subr.bf16.mxu0 %v2273
    %2453 = vmatpush2.bf16.msra.mxu0 %v2272
    %2454 = vmatprep.subr.bf16.mxu0 %v2266
    %2455 = vmatpush2.bf16.msra.mxu0 %v2265
    %2456 = vmatprep.subr.bf16.mxu0 %v2259
    %2457 = vmatpush2.bf16.msra.mxu0 %v2258
    %2458 = vmatprep.mubr.bf16.mxu0 %v1707
    %2459 = vmatmul.mubr.bf16.gmra.mxu0 %v1706
    %v2460 = vpop.f32.mrf.mxu0
    %v2461 = vadd.f32 %v1836, %v2460
    %v2462 = vpop.f32.mrf.mxu0
    %v2463 = vadd.f32 %v1837, %v2462
    %v2464 = vpop.f32.mrf.mxu0
    %v2465 = vadd.f32 %v1843, %v2464
    %v2466 = vpop.f32.mrf.mxu0
    %v2467 = vadd.f32 %v1844, %v2466
    %2468 = vdwg.mxu0
    %2469 = vmatprep.subr.bf16.mxu0 %v2254
    %2470 = vmatpush1.bf16.msra.mxu0 %v2253
    %2471 = vmatprep.subr.bf16.mxu0 %v2247
    %2472 = vmatpush1.bf16.msra.mxu0 %v2246
    %2473 = vmatprep.subr.bf16.mxu0 %v2240
    %2474 = vmatpush1.bf16.msra.mxu0 %v2239
    %2475 = vmatprep.subr.bf16.mxu0 %v2233
    %2476 = vmatpush1.bf16.msra.mxu0 %v2232
    %2477 = vmatprep.subr.bf16.mxu0 %v2226
    %2478 = vmatpush1.bf16.msra.mxu0 %v2225
    %2479 = vmatprep.subr.bf16.mxu0 %v2219
    %2480 = vmatpush1.bf16.msra.mxu0 %v2218
    %2481 = vmatprep.subr.bf16.mxu0 %v2212
    %2482 = vmatpush1.bf16.msra.mxu0 %v2211
    %2483 = vmatprep.subr.bf16.mxu0 %v2205
    %2484 = vmatpush1.bf16.msra.mxu0 %v2204
    %2485 = vmatprep.subr.bf16.mxu0 %v2310
    %2486 = vmatpush2.bf16.msra.mxu0 %v2309
    %2487 = vmatprep.subr.bf16.mxu0 %v2303
    %2488 = vmatpush2.bf16.msra.mxu0 %v2302
    %2489 = vmatprep.subr.bf16.mxu0 %v2296
    %2490 = vmatpush2.bf16.msra.mxu0 %v2295
    %2491 = vmatprep.subr.bf16.mxu0 %v2289
    %2492 = vmatpush2.bf16.msra.mxu0 %v2288
    %2493 = vmatprep.subr.bf16.mxu0 %v2282
    %2494 = vmatpush2.bf16.msra.mxu0 %v2281
    %2495 = vmatprep.subr.bf16.mxu0 %v2275
    %2496 = vmatpush2.bf16.msra.mxu0 %v2274
    %2497 = vmatprep.subr.bf16.mxu0 %v2268
    %2498 = vmatpush2.bf16.msra.mxu0 %v2267
    %2499 = vmatprep.subr.bf16.mxu0 %v2261
    %2500 = vmatpush2.bf16.msra.mxu0 %v2260
    %2501 = vmatprep.mubr.bf16.mxu0 %v1707
    %2502 = vmatmul.mubr.bf16.gmra.mxu0 %v1706
    %v2503 = vpop.f32.mrf.mxu0
    %v2504 = vadd.f32 %v1838, %v2503
    %v2505 = vpop.f32.mrf.mxu0
    %v2506 = vadd.f32 %v1839, %v2505
    %v2507 = vpop.f32.mrf.mxu0
    %v2508 = vadd.f32 %v1845, %v2507
    %v2509 = vpop.f32.mrf.mxu0
    %v2510 = vadd.f32 %v1846, %v2509
    %2511 = vdwg.mxu0
    %2512 = vmatprep.subr.bf16.mxu0 %v2256
    %2513 = vmatpush1.bf16.msra.mxu0 %v2255
    %2514 = vmatprep.subr.bf16.mxu0 %v2249
    %2515 = vmatpush1.bf16.msra.mxu0 %v2248
    %2516 = vmatprep.subr.bf16.mxu0 %v2242
    %2517 = vmatpush1.bf16.msra.mxu0 %v2241
    %2518 = vmatprep.subr.bf16.mxu0 %v2235
    %2519 = vmatpush1.bf16.msra.mxu0 %v2234
    %2520 = vmatprep.subr.bf16.mxu0 %v2228
    %2521 = vmatpush1.bf16.msra.mxu0 %v2227
    %2522 = vmatprep.subr.bf16.mxu0 %v2221
    %2523 = vmatpush1.bf16.msra.mxu0 %v2220
    %2524 = vmatprep.subr.bf16.mxu0 %v2214
    %2525 = vmatpush1.bf16.msra.mxu0 %v2213
    %2526 = vmatprep.subr.bf16.mxu0 %v2207
    %2527 = vmatpush1.bf16.msra.mxu0 %v2206
    %2528 = vmatprep.subr.bf16.mxu0 %v2312
    %2529 = vmatpush2.bf16.msra.mxu0 %v2311
    %2530 = vmatprep.subr.bf16.mxu0 %v2305
    %2531 = vmatpush2.bf16.msra.mxu0 %v2304
    %2532 = vmatprep.subr.bf16.mxu0 %v2298
    %2533 = vmatpush2.bf16.msra.mxu0 %v2297
    %2534 = vmatprep.subr.bf16.mxu0 %v2291
    %2535 = vmatpush2.bf16.msra.mxu0 %v2290
    %2536 = vmatprep.subr.bf16.mxu0 %v2284
    %2537 = vmatpush2.bf16.msra.mxu0 %v2283
    %2538 = vmatprep.subr.bf16.mxu0 %v2277
    %2539 = vmatpush2.bf16.msra.mxu0 %v2276
    %2540 = vmatprep.subr.bf16.mxu0 %v2270
    %2541 = vmatpush2.bf16.msra.mxu0 %v2269
    %2542 = vmatprep.subr.bf16.mxu0 %v2263
    %2543 = vmatpush2.bf16.msra.mxu0 %v2262
    %2544 = vmatprep.mubr.bf16.mxu0 %v1707
    %2545 = vmatmul.mubr.bf16.gmra.mxu0 %v1706
    %v2546 = vpop.f32.mrf.mxu0
    %v2547 = vadd.f32 %v1840, %v2546
    %v2548 = vpop.f32.mrf.mxu0
    %v2549 = vadd.f32 %v1841, %v2548
    %v2550 = vpop.f32.mrf.mxu0
    %v2551 = vadd.f32 %v1847, %v2550
    %v2552 = vpop.f32.mrf.mxu0
    %v2553 = vadd.f32 %v1848, %v2552
    %2554 = vdwg.mxu0
    %2555 = vmatprep.subr.bf16.mxu0 0
    %2556 = vmatpush1.bf16.msra.mxu0 %v2257
    %2557 = vmatprep.subr.bf16.mxu0 0
    %2558 = vmatpush1.bf16.msra.mxu0 %v2250
    %2559 = vmatprep.subr.bf16.mxu0 0
    %2560 = vmatpush1.bf16.msra.mxu0 %v2243
    %2561 = vmatprep.subr.bf16.mxu0 0
    %2562 = vmatpush1.bf16.msra.mxu0 %v2236
    %2563 = vmatprep.subr.bf16.mxu0 0
    %2564 = vmatpush1.bf16.msra.mxu0 %v2229
    %2565 = vmatprep.subr.bf16.mxu0 0
    %2566 = vmatpush1.bf16.msra.mxu0 %v2222
    %2567 = vmatprep.subr.bf16.mxu0 0
    %2568 = vmatpush1.bf16.msra.mxu0 %v2215
    %2569 = vmatprep.subr.bf16.mxu0 0
    %2570 = vmatpush1.bf16.msra.mxu0 %v2208
    %2571 = vmatprep.subr.bf16.mxu0 0
    %2572 = vmatpush2.bf16.msra.mxu0 %v2313
    %2573 = vmatprep.subr.bf16.mxu0 0
    %2574 = vmatpush2.bf16.msra.mxu0 %v2306
    %2575 = vmatprep.subr.bf16.mxu0 0
    %2576 = vmatpush2.bf16.msra.mxu0 %v2299
    %2577 = vmatprep.subr.bf16.mxu0 0
    %2578 = vmatpush2.bf16.msra.mxu0 %v2292
    %2579 = vmatprep.subr.bf16.mxu0 0
    %2580 = vmatpush2.bf16.msra.mxu0 %v2285
    %2581 = vmatprep.subr.bf16.mxu0 0
    %2582 = vmatpush2.bf16.msra.mxu0 %v2278
    %2583 = vmatprep.subr.bf16.mxu0 0
    %2584 = vmatpush2.bf16.msra.mxu0 %v2271
    %2585 = vmatprep.subr.bf16.mxu0 0
    %2586 = vmatpush2.bf16.msra.mxu0 %v2264
    %2587 = vmatprep.mubr.bf16.mxu0 %v1707
    %2588 = vmatmul.mubr.bf16.gmra.mxu0 %v1706
    %v2589 = vpop.f32.mrf.mxu0
    %v2590 = vadd.f32 %v1842, %v2589
    %v2591 = vpop.f32.mrf.mxu0
    %v2592 = vpop.f32.mrf.mxu0
    %v2593 = vadd.f32 %v1849, %v2592
    %v2594 = vpop.f32.mrf.mxu0
    %2595 = vdwg.mxu0
    %v2596 = vxor.u32 %v2506, 2147483648
    %v2597 = vxor.u32 %v2547, 2147483648
    %v2598 = vxor.u32 %v2510, 2147483648
    %v2599 = vxor.u32 %v2551, 2147483648
    %v2600 = vmul.f32 %v2596, 1.442695
    %v2601 = vpow.pop %v2600
    %v2602 = vmul.f32 %v2597, 1.442695
    %v2603 = vpow.pop %v2602
    %v2604 = vmul.f32 %v2598, 1.442695
    %v2605 = vpow.pop %v2604
    %v2606 = vmul.f32 %v2599, 1.442695
    %v2607 = vpow.pop %v2606
    %v2608 = vadd.f32 %v2601, 1.0
    %v2609 = vadd.f32 %v2603, 1.0
    %v2610 = vadd.f32 %v2605, 1.0
    %v2611 = vadd.f32 %v2607, 1.0
    %v2612 = vrcp.pop %v2608
    %v2613 = vmul.f32 1.0, %v2612
    %v2614 = vrcp.pop %v2609
    %v2615 = vmul.f32 1.0, %v2614
    %v2616 = vrcp.pop %v2610
    %v2617 = vmul.f32 1.0, %v2616
    %v2618 = vrcp.pop %v2611
    %v2619 = vmul.f32 1.0, %v2618
    %v2620 = vmul.f32 %v2613, %v2590
    %v2621 = vmul.f32 %v2617, %v2593
    %v2622 = vadd.f32 %v2549, %v2620
    %v2623 = vadd.f32 %v2553, %v2621
    %v2624 = vtanh.pop %v2622
    %v2625 = vtanh.pop %v2623
    %v2626 = vsub.f32 1.0, %v2615
    %v2627 = vsub.f32 1.0, %v2619
    %v2628 = vmul.f32 %v2626, %v2624
    %v2629 = vmul.f32 %v2627, %v2625
    %v2630 = vmul.f32 %v2615, %v1651
    %v2631 = vmul.f32 %v2619, %v1652
    %v2632 = vadd.f32 %v2628, %v2630
    %v2633 = vadd.f32 %v2629, %v2631
    %s2634 = scalar_lea.vmem [#allocation3], 16
    %2635 = vst [vmem:[%s2634] sm:$0xff] %v2632
    %2636 = vst [vmem:[%s2634 + $0x8] sm:$0xff] %v2633
    %s2637 = smul.u32 4, 3
    %s2638 = smul.addr %s2637, 8
    %s2639 = scalar_lea.vmem [#allocation2], %s2638
    %v2640 = vld [vmem:[%s2639] sm:$0xff]
    %v2641 = vld [vmem:[%s2639 + $0x8] sm:$0xff]
    %v2642 = vld [vmem:[%s2639 + $0x10] sm:$0xff]
    %v2643 = vld [vmem:[%s2639 + $0x18] sm:$0xff]
    %v2644 = vld [vmem:[%s2639 + $0x20] sm:$0xff]
    %v2645 = vld [vmem:[%s2639 + $0x28] sm:$0xff]
    %v2646 = vadd.f32 %v2640, %v2461
    %v2647 = vadd.f32 %v2641, %v2463
    %v2648 = vadd.f32 %v2643, %v2465
    %v2649 = vadd.f32 %v2644, %v2467
    %v2650 = vxor.u32 %v2646, 2147483648
    %v2651 = vxor.u32 %v2647, 2147483648
    %v2652 = vxor.u32 %v2648, 2147483648
    %v2653 = vxor.u32 %v2649, 2147483648
    %v2654 = vmul.f32 %v2650, 1.442695
    %v2655 = vpow.pop %v2654
    %v2656 = vmul.f32 %v2651, 1.442695
    %v2657 = vpow.pop %v2656
    %v2658 = vmul.f32 %v2652, 1.442695
    %v2659 = vpow.pop %v2658
    %v2660 = vmul.f32 %v2653, 1.442695
    %v2661 = vpow.pop %v2660
    %v2662 = vadd.f32 %v2655, 1.0
    %v2663 = vadd.f32 %v2657, 1.0
    %v2664 = vadd.f32 %v2659, 1.0
    %v2665 = vadd.f32 %v2661, 1.0
    %v2666 = vrcp.pop %v2662
    %v2667 = vmul.f32 1.0, %v2666
    %v2668 = vrcp.pop %v2663
    %v2669 = vmul.f32 1.0, %v2668
    %v2670 = vrcp.pop %v2664
    %v2671 = vmul.f32 1.0, %v2670
    %v2672 = vrcp.pop %v2665
    %v2673 = vmul.f32 1.0, %v2672
    %v2674 = vmul.f32 %v2667, %v2504
    %v2675 = vmul.f32 %v2671, %v2508
    %v2676 = vadd.f32 %v2642, %v2674
    %v2677 = vadd.f32 %v2645, %v2675
    %v2678 = vtanh.pop %v2676
    %v2679 = vtanh.pop %v2677
    %v2680 = vsub.f32 1.0, %v2669
    %v2681 = vsub.f32 1.0, %v2673
    %v2682 = vmul.f32 %v2680, %v2678
    %v2683 = vmul.f32 %v2681, %v2679
    %v2684 = vmul.f32 %v2669, %v1704
    %v2685 = vmul.f32 %v2673, %v1705
    %v2686 = vadd.f32 %v2682, %v2684
    %v2687 = vadd.f32 %v2683, %v2685
    %v2688 = vpack.c.bf16 %v2687, %v2686
    %v2689 = vpack.c.bf16 %v2633, %v2632
    %v2690 = vld [vmem:[#allocation13] sm:$0xff]
    %v2691 = vld [vmem:[#allocation13 + $0x8] sm:$0xff]
    %v2692 = vld [vmem:[#allocation13 + $0x10] sm:$0xff]
    %v2693 = vld [vmem:[#allocation13 + $0x18] sm:$0xf]
    %v2694 = vld [vmem:[#allocation13 + $0x1c] sm:$0xff]
    %v2695 = vld [vmem:[#allocation13 + $0x24] sm:$0xff]
    %v2696 = vld [vmem:[#allocation13 + $0x2c] sm:$0xff]
    %v2697 = vld [vmem:[#allocation13 + $0x34] sm:$0xf]
    %v2698 = vld [vmem:[#allocation13 + $0x38] sm:$0xff]
    %v2699 = vld [vmem:[#allocation13 + $0x40] sm:$0xff]
    %v2700 = vld [vmem:[#allocation13 + $0x48] sm:$0xff]
    %v2701 = vld [vmem:[#allocation13 + $0x50] sm:$0xf]
    %v2702 = vld [vmem:[#allocation13 + $0x54] sm:$0xff]
    %v2703 = vld [vmem:[#allocation13 + $0x5c] sm:$0xff]
    %v2704 = vld [vmem:[#allocation13 + $0x64] sm:$0xff]
    %v2705 = vld [vmem:[#allocation13 + $0x6c] sm:$0xf]
    %v2706 = vld [vmem:[#allocation13 + $0x70] sm:$0xff]
    %v2707 = vld [vmem:[#allocation13 + $0x78] sm:$0xff]
    %v2708 = vld [vmem:[#allocation13 + $0x80] sm:$0xff]
    %v2709 = vld [vmem:[#allocation13 + $0x88] sm:$0xf]
    %v2710 = vld [vmem:[#allocation13 + $0x8c] sm:$0xff]
    %v2711 = vld [vmem:[#allocation13 + $0x94] sm:$0xff]
    %v2712 = vld [vmem:[#allocation13 + $0x9c] sm:$0xff]
    %v2713 = vld [vmem:[#allocation13 + $0xa4] sm:$0xf]
    %v2714 = vld [vmem:[#allocation13 + $0xa8] sm:$0xff]
    %v2715 = vld [vmem:[#allocation13 + $0xb0] sm:$0xff]
    %v2716 = vld [vmem:[#allocation13 + $0xb8] sm:$0xff]
    %v2717 = vld [vmem:[#allocation13 + $0xc0] sm:$0xf]
    %v2718 = vld [vmem:[#allocation13 + $0xc4] sm:$0xff]
    %v2719 = vld [vmem:[#allocation13 + $0xcc] sm:$0xff]
    %v2720 = vld [vmem:[#allocation13 + $0xd4] sm:$0xff]
    %v2721 = vld [vmem:[#allocation13 + $0xdc] sm:$0xf]
    %v2722 = vld [vmem:[#allocation13 + $0xe0] sm:$0xff]
    %v2723 = vld [vmem:[#allocation13 + $0xe8] sm:$0xff]
    %v2724 = vld [vmem:[#allocation13 + $0xf0] sm:$0xff]
    %v2725 = vld [vmem:[#allocation13 + $0xf8] sm:$0xf]
    %v2726 = vld [vmem:[#allocation13 + $0xfc] sm:$0xff]
    %v2727 = vld [vmem:[#allocation13 + $0x104] sm:$0xff]
    %v2728 = vld [vmem:[#allocation13 + $0x10c] sm:$0xff]
    %v2729 = vld [vmem:[#allocation13 + $0x114] sm:$0xf]
    %v2730 = vld [vmem:[#allocation13 + $0x118] sm:$0xff]
    %v2731 = vld [vmem:[#allocation13 + $0x120] sm:$0xff]
    %v2732 = vld [vmem:[#allocation13 + $0x128] sm:$0xff]
    %v2733 = vld [vmem:[#allocation13 + $0x130] sm:$0xf]
    %v2734 = vld [vmem:[#allocation13 + $0x134] sm:$0xff]
    %v2735 = vld [vmem:[#allocation13 + $0x13c] sm:$0xff]
    %v2736 = vld [vmem:[#allocation13 + $0x144] sm:$0xff]
    %v2737 = vld [vmem:[#allocation13 + $0x14c] sm:$0xf]
    %v2738 = vld [vmem:[#allocation13 + $0x150] sm:$0xff]
    %v2739 = vld [vmem:[#allocation13 + $0x158] sm:$0xff]
    %v2740 = vld [vmem:[#allocation13 + $0x160] sm:$0xff]
    %v2741 = vld [vmem:[#allocation13 + $0x168] sm:$0xf]
    %v2742 = vld [vmem:[#allocation13 + $0x16c] sm:$0xff]
    %v2743 = vld [vmem:[#allocation13 + $0x174] sm:$0xff]
    %v2744 = vld [vmem:[#allocation13 + $0x17c] sm:$0xff]
    %v2745 = vld [vmem:[#allocation13 + $0x184] sm:$0xf]
    %v2746 = vld [vmem:[#allocation13 + $0x188] sm:$0xff]
    %v2747 = vld [vmem:[#allocation13 + $0x190] sm:$0xff]
    %v2748 = vld [vmem:[#allocation13 + $0x198] sm:$0xff]
    %v2749 = vld [vmem:[#allocation13 + $0x1a0] sm:$0xf]
    %v2750 = vld [vmem:[#allocation13 + $0x1a4] sm:$0xff]
    %v2751 = vld [vmem:[#allocation13 + $0x1ac] sm:$0xff]
    %v2752 = vld [vmem:[#allocation13 + $0x1b4] sm:$0xff]
    %v2753 = vld [vmem:[#allocation13 + $0x1bc] sm:$0xf]
    %v2754 = vld [vmem:[#allocation13 + $0x1c0] sm:$0xff]
    %v2755 = vld [vmem:[#allocation13 + $0x1c8] sm:$0xff]
    %v2756 = vld [vmem:[#allocation13 + $0x1d0] sm:$0xff]
    %v2757 = vld [vmem:[#allocation13 + $0x1d8] sm:$0xf]
    %v2758 = vld [vmem:[#allocation13 + $0x1dc] sm:$0xff]
    %v2759 = vld [vmem:[#allocation13 + $0x1e4] sm:$0xff]
    %v2760 = vld [vmem:[#allocation13 + $0x1ec] sm:$0xff]
    %v2761 = vld [vmem:[#allocation13 + $0x1f4] sm:$0xf]
    %v2762 = vld [vmem:[#allocation13 + $0x1f8] sm:$0xff]
    %v2763 = vld [vmem:[#allocation13 + $0x200] sm:$0xff]
    %v2764 = vld [vmem:[#allocation13 + $0x208] sm:$0xff]
    %v2765 = vld [vmem:[#allocation13 + $0x210] sm:$0xf]
    %v2766 = vld [vmem:[#allocation13 + $0x214] sm:$0xff]
    %v2767 = vld [vmem:[#allocation13 + $0x21c] sm:$0xff]
    %v2768 = vld [vmem:[#allocation13 + $0x224] sm:$0xff]
    %v2769 = vld [vmem:[#allocation13 + $0x22c] sm:$0xf]
    %v2770 = vld [vmem:[#allocation13 + $0x230] sm:$0xff]
    %v2771 = vld [vmem:[#allocation13 + $0x238] sm:$0xff]
    %v2772 = vld [vmem:[#allocation13 + $0x240] sm:$0xff]
    %v2773 = vld [vmem:[#allocation13 + $0x248] sm:$0xf]
    %v2774 = vld [vmem:[#allocation13 + $0x24c] sm:$0xff]
    %v2775 = vld [vmem:[#allocation13 + $0x254] sm:$0xff]
    %v2776 = vld [vmem:[#allocation13 + $0x25c] sm:$0xff]
    %v2777 = vld [vmem:[#allocation13 + $0x264] sm:$0xf]
    %v2778 = vld [vmem:[#allocation13 + $0x268] sm:$0xff]
    %v2779 = vld [vmem:[#allocation13 + $0x270] sm:$0xff]
    %v2780 = vld [vmem:[#allocation13 + $0x278] sm:$0xff]
    %v2781 = vld [vmem:[#allocation13 + $0x280] sm:$0xf]
    %v2782 = vld [vmem:[#allocation13 + $0x284] sm:$0xff]
    %v2783 = vld [vmem:[#allocation13 + $0x28c] sm:$0xff]
    %v2784 = vld [vmem:[#allocation13 + $0x294] sm:$0xff]
    %v2785 = vld [vmem:[#allocation13 + $0x29c] sm:$0xf]
    %v2786 = vld [vmem:[#allocation13 + $0x2a0] sm:$0xff]
    %v2787 = vld [vmem:[#allocation13 + $0x2a8] sm:$0xff]
    %v2788 = vld [vmem:[#allocation13 + $0x2b0] sm:$0xff]
    %v2789 = vld [vmem:[#allocation13 + $0x2b8] sm:$0xf]
    %v2790 = vld [vmem:[#allocation13 + $0x2bc] sm:$0xff]
    %v2791 = vld [vmem:[#allocation13 + $0x2c4] sm:$0xff]
    %v2792 = vld [vmem:[#allocation13 + $0x2cc] sm:$0xff]
    %v2793 = vld [vmem:[#allocation13 + $0x2d4] sm:$0xf]
    %v2794 = vld [vmem:[#allocation13 + $0x2d8] sm:$0xff]
    %v2795 = vld [vmem:[#allocation13 + $0x2e0] sm:$0xff]
    %v2796 = vld [vmem:[#allocation13 + $0x2e8] sm:$0xff]
    %v2797 = vld [vmem:[#allocation13 + $0x2f0] sm:$0xf]
    %v2798 = vld [vmem:[#allocation13 + $0x2f4] sm:$0xff]
    %v2799 = vld [vmem:[#allocation13 + $0x2fc] sm:$0xff]
    %v2800 = vld [vmem:[#allocation13 + $0x304] sm:$0xff]
    %v2801 = vld [vmem:[#allocation13 + $0x30c] sm:$0xf]
    %v2802 = vld [vmem:[#allocation13 + $0x310] sm:$0xff]
    %v2803 = vld [vmem:[#allocation13 + $0x318] sm:$0xff]
    %v2804 = vld [vmem:[#allocation13 + $0x320] sm:$0xff]
    %v2805 = vld [vmem:[#allocation13 + $0x328] sm:$0xf]
    %v2806 = vld [vmem:[#allocation13 + $0x32c] sm:$0xff]
    %v2807 = vld [vmem:[#allocation13 + $0x334] sm:$0xff]
    %v2808 = vld [vmem:[#allocation13 + $0x33c] sm:$0xff]
    %v2809 = vld [vmem:[#allocation13 + $0x344] sm:$0xf]
    %v2810 = vld [vmem:[#allocation13 + $0x348] sm:$0xff]
    %v2811 = vld [vmem:[#allocation13 + $0x350] sm:$0xff]
    %v2812 = vld [vmem:[#allocation13 + $0x358] sm:$0xff]
    %v2813 = vld [vmem:[#allocation13 + $0x360] sm:$0xf]
    %v2814 = vld [vmem:[#allocation13 + $0x364] sm:$0xff]
    %v2815 = vld [vmem:[#allocation13 + $0x36c] sm:$0xff]
    %v2816 = vld [vmem:[#allocation13 + $0x374] sm:$0xff]
    %v2817 = vld [vmem:[#allocation13 + $0x37c] sm:$0xf]
    %v2818 = vld [vmem:[#allocation4] sm:$0xff]
    %v2819 = vld [vmem:[#allocation4 + $0x8] sm:$0xff]
    %v2820 = vld [vmem:[#allocation4 + $0x10] sm:$0xff]
    %v2821 = vld [vmem:[#allocation4 + $0x18] sm:$0xff]
    %v2822 = vld [vmem:[#allocation4 + $0x20] sm:$0xff]
    %v2823 = vld [vmem:[#allocation4 + $0x28] sm:$0xff]
    %v2824 = vld [vmem:[#allocation4 + $0x30] sm:$0xff]
    %v2825 = vld [vmem:[#allocation4 + $0x38] sm:$0xff]
    %v2826 = vld [vmem:[#allocation4 + $0x40] sm:$0xff]
    %v2827 = vld [vmem:[#allocation4 + $0x48] sm:$0xff]
    %v2828 = vld [vmem:[#allocation4 + $0x50] sm:$0xff]
    %v2829 = vld [vmem:[#allocation4 + $0x58] sm:$0xff]
    %v2830 = vld [vmem:[#allocation4 + $0x60] sm:$0xff]
    %v2831 = vld [vmem:[#allocation4 + $0x68] sm:$0xff]
    %v2960 = vunpack.c.l.b16 %v2690
    %v2961 = vunpack.c.h.b16 %v2690
    %v2962 = vunpack.c.l.b16 %v2691
    %v2963 = vunpack.c.h.b16 %v2691
    %v2964 = vunpack.c.l.b16 %v2692
    %v2965 = vunpack.c.h.b16 %v2692
    %v2966 = vunpack.c.l.b16 %v2693
    %v2967 = vunpack.c.l.b16 %v2694
    %v2968 = vunpack.c.h.b16 %v2694
    %v2969 = vunpack.c.l.b16 %v2695
    %v2970 = vunpack.c.h.b16 %v2695
    %v2971 = vunpack.c.l.b16 %v2696
    %v2972 = vunpack.c.h.b16 %v2696
    %v2973 = vunpack.c.l.b16 %v2697
    %v2974 = vunpack.c.l.b16 %v2698
    %v2975 = vunpack.c.h.b16 %v2698
    %v2976 = vunpack.c.l.b16 %v2699
    %v2977 = vunpack.c.h.b16 %v2699
    %v2978 = vunpack.c.l.b16 %v2700
    %v2979 = vunpack.c.h.b16 %v2700
    %v2980 = vunpack.c.l.b16 %v2701
    %v2981 = vunpack.c.l.b16 %v2702
    %v2982 = vunpack.c.h.b16 %v2702
    %v2983 = vunpack.c.l.b16 %v2703
    %v2984 = vunpack.c.h.b16 %v2703
    %v2985 = vunpack.c.l.b16 %v2704
    %v2986 = vunpack.c.h.b16 %v2704
    %v2987 = vunpack.c.l.b16 %v2705
    %v2988 = vunpack.c.l.b16 %v2706
    %v2989 = vunpack.c.h.b16 %v2706
    %v2990 = vunpack.c.l.b16 %v2707
    %v2991 = vunpack.c.h.b16 %v2707
    %v2992 = vunpack.c.l.b16 %v2708
    %v2993 = vunpack.c.h.b16 %v2708
    %v2994 = vunpack.c.l.b16 %v2709
    %v2995 = vunpack.c.l.b16 %v2710
    %v2996 = vunpack.c.h.b16 %v2710
    %v2997 = vunpack.c.l.b16 %v2711
    %v2998 = vunpack.c.h.b16 %v2711
    %v2999 = vunpack.c.l.b16 %v2712
    %v3000 = vunpack.c.h.b16 %v2712
    %v3001 = vunpack.c.l.b16 %v2713
    %v3002 = vunpack.c.l.b16 %v2714
    %v3003 = vunpack.c.h.b16 %v2714
    %v3004 = vunpack.c.l.b16 %v2715
    %v3005 = vunpack.c.h.b16 %v2715
    %v3006 = vunpack.c.l.b16 %v2716
    %v3007 = vunpack.c.h.b16 %v2716
    %v3008 = vunpack.c.l.b16 %v2717
    %v3009 = vunpack.c.l.b16 %v2718
    %v3010 = vunpack.c.h.b16 %v2718
    %v3011 = vunpack.c.l.b16 %v2719
    %v3012 = vunpack.c.h.b16 %v2719
    %v3013 = vunpack.c.l.b16 %v2720
    %v3014 = vunpack.c.h.b16 %v2720
    %v3015 = vunpack.c.l.b16 %v2721
    %v3016 = vunpack.c.l.b16 %v2722
    %v3017 = vunpack.c.h.b16 %v2722
    %v3018 = vunpack.c.l.b16 %v2723
    %v3019 = vunpack.c.h.b16 %v2723
    %v3020 = vunpack.c.l.b16 %v2724
    %v3021 = vunpack.c.h.b16 %v2724
    %v3022 = vunpack.c.l.b16 %v2725
    %v3023 = vunpack.c.l.b16 %v2726
    %v3024 = vunpack.c.h.b16 %v2726
    %v3025 = vunpack.c.l.b16 %v2727
    %v3026 = vunpack.c.h.b16 %v2727
    %v3027 = vunpack.c.l.b16 %v2728
    %v3028 = vunpack.c.h.b16 %v2728
    %v3029 = vunpack.c.l.b16 %v2729
    %v3030 = vunpack.c.l.b16 %v2730
    %v3031 = vunpack.c.h.b16 %v2730
    %v3032 = vunpack.c.l.b16 %v2731
    %v3033 = vunpack.c.h.b16 %v2731
    %v3034 = vunpack.c.l.b16 %v2732
    %v3035 = vunpack.c.h.b16 %v2732
    %v3036 = vunpack.c.l.b16 %v2733
    %v3037 = vunpack.c.l.b16 %v2734
    %v3038 = vunpack.c.h.b16 %v2734
    %v3039 = vunpack.c.l.b16 %v2735
    %v3040 = vunpack.c.h.b16 %v2735
    %v3041 = vunpack.c.l.b16 %v2736
    %v3042 = vunpack.c.h.b16 %v2736
    %v3043 = vunpack.c.l.b16 %v2737
    %v3044 = vunpack.c.l.b16 %v2738
    %v3045 = vunpack.c.h.b16 %v2738
    %v3046 = vunpack.c.l.b16 %v2739
    %v3047 = vunpack.c.h.b16 %v2739
    %v3048 = vunpack.c.l.b16 %v2740
    %v3049 = vunpack.c.h.b16 %v2740
    %v3050 = vunpack.c.l.b16 %v2741
    %v3051 = vunpack.c.l.b16 %v2742
    %v3052 = vunpack.c.h.b16 %v2742
    %v3053 = vunpack.c.l.b16 %v2743
    %v3054 = vunpack.c.h.b16 %v2743
    %v3055 = vunpack.c.l.b16 %v2744
    %v3056 = vunpack.c.h.b16 %v2744
    %v3057 = vunpack.c.l.b16 %v2745
    %v3058 = vunpack.c.l.b16 %v2746
    %v3059 = vunpack.c.h.b16 %v2746
    %v3060 = vunpack.c.l.b16 %v2747
    %v3061 = vunpack.c.h.b16 %v2747
    %v3062 = vunpack.c.l.b16 %v2748
    %v3063 = vunpack.c.h.b16 %v2748
    %v3064 = vunpack.c.l.b16 %v2749
    %v3065 = vunpack.c.l.b16 %v2750
    %v3066 = vunpack.c.h.b16 %v2750
    %v3067 = vunpack.c.l.b16 %v2751
    %v3068 = vunpack.c.h.b16 %v2751
    %v3069 = vunpack.c.l.b16 %v2752
    %v3070 = vunpack.c.h.b16 %v2752
    %v3071 = vunpack.c.l.b16 %v2753
    %v3072 = vunpack.c.l.b16 %v2754
    %v3073 = vunpack.c.h.b16 %v2754
    %v3074 = vunpack.c.l.b16 %v2755
    %v3075 = vunpack.c.h.b16 %v2755
    %v3076 = vunpack.c.l.b16 %v2756
    %v3077 = vunpack.c.h.b16 %v2756
    %v3078 = vunpack.c.l.b16 %v2757
    %v3079 = vunpack.c.l.b16 %v2758
    %v3080 = vunpack.c.h.b16 %v2758
    %v3081 = vunpack.c.l.b16 %v2759
    %v3082 = vunpack.c.h.b16 %v2759
    %v3083 = vunpack.c.l.b16 %v2760
    %v3084 = vunpack.c.h.b16 %v2760
    %v3085 = vunpack.c.l.b16 %v2761
    %v3086 = vunpack.c.l.b16 %v2762
    %v3087 = vunpack.c.h.b16 %v2762
    %v3088 = vunpack.c.l.b16 %v2763
    %v3089 = vunpack.c.h.b16 %v2763
    %v3090 = vunpack.c.l.b16 %v2764
    %v3091 = vunpack.c.h.b16 %v2764
    %v3092 = vunpack.c.l.b16 %v2765
    %v3093 = vunpack.c.l.b16 %v2766
    %v3094 = vunpack.c.h.b16 %v2766
    %v3095 = vunpack.c.l.b16 %v2767
    %v3096 = vunpack.c.h.b16 %v2767
    %v3097 = vunpack.c.l.b16 %v2768
    %v3098 = vunpack.c.h.b16 %v2768
    %v3099 = vunpack.c.l.b16 %v2769
    %v3100 = vunpack.c.l.b16 %v2770
    %v3101 = vunpack.c.h.b16 %v2770
    %v3102 = vunpack.c.l.b16 %v2771
    %v3103 = vunpack.c.h.b16 %v2771
    %v3104 = vunpack.c.l.b16 %v2772
    %v3105 = vunpack.c.h.b16 %v2772
    %v3106 = vunpack.c.l.b16 %v2773
    %v3107 = vunpack.c.l.b16 %v2774
    %v3108 = vunpack.c.h.b16 %v2774
    %v3109 = vunpack.c.l.b16 %v2775
    %v3110 = vunpack.c.h.b16 %v2775
    %v3111 = vunpack.c.l.b16 %v2776
    %v3112 = vunpack.c.h.b16 %v2776
    %v3113 = vunpack.c.l.b16 %v2777
    %v3114 = vunpack.c.l.b16 %v2778
    %v3115 = vunpack.c.h.b16 %v2778
    %v3116 = vunpack.c.l.b16 %v2779
    %v3117 = vunpack.c.h.b16 %v2779
    %v3118 = vunpack.c.l.b16 %v2780
    %v3119 = vunpack.c.h.b16 %v2780
    %v3120 = vunpack.c.l.b16 %v2781
    %v3121 = vunpack.c.l.b16 %v2782
    %v3122 = vunpack.c.h.b16 %v2782
    %v3123 = vunpack.c.l.b16 %v2783
    %v3124 = vunpack.c.h.b16 %v2783
    %v3125 = vunpack.c.l.b16 %v2784
    %v3126 = vunpack.c.h.b16 %v2784
    %v3127 = vunpack.c.l.b16 %v2785
    %v3128 = vunpack.c.l.b16 %v2786
    %v3129 = vunpack.c.h.b16 %v2786
    %v3130 = vunpack.c.l.b16 %v2787
    %v3131 = vunpack.c.h.b16 %v2787
    %v3132 = vunpack.c.l.b16 %v2788
    %v3133 = vunpack.c.h.b16 %v2788
    %v3134 = vunpack.c.l.b16 %v2789
    %v3135 = vunpack.c.l.b16 %v2790
    %v3136 = vunpack.c.h.b16 %v2790
    %v3137 = vunpack.c.l.b16 %v2791
    %v3138 = vunpack.c.h.b16 %v2791
    %v3139 = vunpack.c.l.b16 %v2792
    %v3140 = vunpack.c.h.b16 %v2792
    %v3141 = vunpack.c.l.b16 %v2793
    %v3142 = vunpack.c.l.b16 %v2794
    %v3143 = vunpack.c.h.b16 %v2794
    %v3144 = vunpack.c.l.b16 %v2795
    %v3145 = vunpack.c.h.b16 %v2795
    %v3146 = vunpack.c.l.b16 %v2796
    %v3147 = vunpack.c.h.b16 %v2796
    %v3148 = vunpack.c.l.b16 %v2797
    %v3149 = vunpack.c.l.b16 %v2798
    %v3150 = vunpack.c.h.b16 %v2798
    %v3151 = vunpack.c.l.b16 %v2799
    %v3152 = vunpack.c.h.b16 %v2799
    %v3153 = vunpack.c.l.b16 %v2800
    %v3154 = vunpack.c.h.b16 %v2800
    %v3155 = vunpack.c.l.b16 %v2801
    %v3156 = vunpack.c.l.b16 %v2802
    %v3157 = vunpack.c.h.b16 %v2802
    %v3158 = vunpack.c.l.b16 %v2803
    %v3159 = vunpack.c.h.b16 %v2803
    %v3160 = vunpack.c.l.b16 %v2804
    %v3161 = vunpack.c.h.b16 %v2804
    %v3162 = vunpack.c.l.b16 %v2805
    %v3163 = vunpack.c.l.b16 %v2806
    %v3164 = vunpack.c.h.b16 %v2806
    %v3165 = vunpack.c.l.b16 %v2807
    %v3166 = vunpack.c.h.b16 %v2807
    %v3167 = vunpack.c.l.b16 %v2808
    %v3168 = vunpack.c.h.b16 %v2808
    %v3169 = vunpack.c.l.b16 %v2809
    %v3170 = vunpack.c.l.b16 %v2810
    %v3171 = vunpack.c.h.b16 %v2810
    %v3172 = vunpack.c.l.b16 %v2811
    %v3173 = vunpack.c.h.b16 %v2811
    %v3174 = vunpack.c.l.b16 %v2812
    %v3175 = vunpack.c.h.b16 %v2812
    %v3176 = vunpack.c.l.b16 %v2813
    %v3177 = vunpack.c.l.b16 %v2814
    %v3178 = vunpack.c.h.b16 %v2814
    %v3179 = vunpack.c.l.b16 %v2815
    %v3180 = vunpack.c.h.b16 %v2815
    %v3181 = vunpack.c.l.b16 %v2816
    %v3182 = vunpack.c.h.b16 %v2816
    %v3183 = vunpack.c.l.b16 %v2817
    %v3184 = vpack.c.b16 %v2967, %v2960
    %v3185 = vpack.c.b16 %v2968, %v2961
    %v3186 = vpack.c.b16 %v2969, %v2962
    %v3187 = vpack.c.b16 %v2970, %v2963
    %v3188 = vpack.c.b16 %v2971, %v2964
    %v3189 = vpack.c.b16 %v2972, %v2965
    %v3190 = vpack.c.b16 %v2973, %v2966
    %v3191 = vpack.c.b16 %v2981, %v2974
    %v3192 = vpack.c.b16 %v2982, %v2975
    %v3193 = vpack.c.b16 %v2983, %v2976
    %v3194 = vpack.c.b16 %v2984, %v2977
    %v3195 = vpack.c.b16 %v2985, %v2978
    %v3196 = vpack.c.b16 %v2986, %v2979
    %v3197 = vpack.c.b16 %v2987, %v2980
    %v3198 = vpack.c.b16 %v2995, %v2988
    %v3199 = vpack.c.b16 %v2996, %v2989
    %v3200 = vpack.c.b16 %v2997, %v2990
    %v3201 = vpack.c.b16 %v2998, %v2991
    %v3202 = vpack.c.b16 %v2999, %v2992
    %v3203 = vpack.c.b16 %v3000, %v2993
    %v3204 = vpack.c.b16 %v3001, %v2994
    %v3205 = vpack.c.b16 %v3009, %v3002
    %v3206 = vpack.c.b16 %v3010, %v3003
    %v3207 = vpack.c.b16 %v3011, %v3004
    %v3208 = vpack.c.b16 %v3012, %v3005
    %v3209 = vpack.c.b16 %v3013, %v3006
    %v3210 = vpack.c.b16 %v3014, %v3007
    %v3211 = vpack.c.b16 %v3015, %v3008
    %v3212 = vpack.c.b16 %v3023, %v3016
    %v3213 = vpack.c.b16 %v3024, %v3017
    %v3214 = vpack.c.b16 %v3025, %v3018
    %v3215 = vpack.c.b16 %v3026, %v3019
    %v3216 = vpack.c.b16 %v3027, %v3020
    %v3217 = vpack.c.b16 %v3028, %v3021
    %v3218 = vpack.c.b16 %v3029, %v3022
    %v3219 = vpack.c.b16 %v3037, %v3030
    %v3220 = vpack.c.b16 %v3038, %v3031
    %v3221 = vpack.c.b16 %v3039, %v3032
    %v3222 = vpack.c.b16 %v3040, %v3033
    %v3223 = vpack.c.b16 %v3041, %v3034
    %v3224 = vpack.c.b16 %v3042, %v3035
    %v3225 = vpack.c.b16 %v3043, %v3036
    %v3226 = vpack.c.b16 %v3051, %v3044
    %v3227 = vpack.c.b16 %v3052, %v3045
    %v3228 = vpack.c.b16 %v3053, %v3046
    %v3229 = vpack.c.b16 %v3054, %v3047
    %v3230 = vpack.c.b16 %v3055, %v3048
    %v3231 = vpack.c.b16 %v3056, %v3049
    %v3232 = vpack.c.b16 %v3057, %v3050
    %v3233 = vpack.c.b16 %v3065, %v3058
    %v3234 = vpack.c.b16 %v3066, %v3059
    %v3235 = vpack.c.b16 %v3067, %v3060
    %v3236 = vpack.c.b16 %v3068, %v3061
    %v3237 = vpack.c.b16 %v3069, %v3062
    %v3238 = vpack.c.b16 %v3070, %v3063
    %v3239 = vpack.c.b16 %v3071, %v3064
    %v3240 = vpack.c.b16 %v3079, %v3072
    %v3241 = vpack.c.b16 %v3080, %v3073
    %v3242 = vpack.c.b16 %v3081, %v3074
    %v3243 = vpack.c.b16 %v3082, %v3075
    %v3244 = vpack.c.b16 %v3083, %v3076
    %v3245 = vpack.c.b16 %v3084, %v3077
    %v3246 = vpack.c.b16 %v3085, %v3078
    %v3247 = vpack.c.b16 %v3093, %v3086
    %v3248 = vpack.c.b16 %v3094, %v3087
    %v3249 = vpack.c.b16 %v3095, %v3088
    %v3250 = vpack.c.b16 %v3096, %v3089
    %v3251 = vpack.c.b16 %v3097, %v3090
    %v3252 = vpack.c.b16 %v3098, %v3091
    %v3253 = vpack.c.b16 %v3099, %v3092
    %v3254 = vpack.c.b16 %v3107, %v3100
    %v3255 = vpack.c.b16 %v3108, %v3101
    %v3256 = vpack.c.b16 %v3109, %v3102
    %v3257 = vpack.c.b16 %v3110, %v3103
    %v3258 = vpack.c.b16 %v3111, %v3104
    %v3259 = vpack.c.b16 %v3112, %v3105
    %v3260 = vpack.c.b16 %v3113, %v3106
    %v3261 = vpack.c.b16 %v3121, %v3114
    %v3262 = vpack.c.b16 %v3122, %v3115
    %v3263 = vpack.c.b16 %v3123, %v3116
    %v3264 = vpack.c.b16 %v3124, %v3117
    %v3265 = vpack.c.b16 %v3125, %v3118
    %v3266 = vpack.c.b16 %v3126, %v3119
    %v3267 = vpack.c.b16 %v3127, %v3120
    %v3268 = vpack.c.b16 %v3135, %v3128
    %v3269 = vpack.c.b16 %v3136, %v3129
    %v3270 = vpack.c.b16 %v3137, %v3130
    %v3271 = vpack.c.b16 %v3138, %v3131
    %v3272 = vpack.c.b16 %v3139, %v3132
    %v3273 = vpack.c.b16 %v3140, %v3133
    %v3274 = vpack.c.b16 %v3141, %v3134
    %v3275 = vpack.c.b16 %v3149, %v3142
    %v3276 = vpack.c.b16 %v3150, %v3143
    %v3277 = vpack.c.b16 %v3151, %v3144
    %v3278 = vpack.c.b16 %v3152, %v3145
    %v3279 = vpack.c.b16 %v3153, %v3146
    %v3280 = vpack.c.b16 %v3154, %v3147
    %v3281 = vpack.c.b16 %v3155, %v3148
    %v3282 = vpack.c.b16 %v3163, %v3156
    %v3283 = vpack.c.b16 %v3164, %v3157
    %v3284 = vpack.c.b16 %v3165, %v3158
    %v3285 = vpack.c.b16 %v3166, %v3159
    %v3286 = vpack.c.b16 %v3167, %v3160
    %v3287 = vpack.c.b16 %v3168, %v3161
    %v3288 = vpack.c.b16 %v3169, %v3162
    %v3289 = vpack.c.b16 %v3177, %v3170
    %v3290 = vpack.c.b16 %v3178, %v3171
    %v3291 = vpack.c.b16 %v3179, %v3172
    %v3292 = vpack.c.b16 %v3180, %v3173
    %v3293 = vpack.c.b16 %v3181, %v3174
    %v3294 = vpack.c.b16 %v3182, %v3175
    %v3295 = vpack.c.b16 %v3183, %v3176
    %3408 = vmatprep.subr.bf16.mxu0 %v3234
    %3409 = vmatpush1.bf16.msra.mxu0 %v3233
    %3410 = vmatprep.subr.bf16.mxu0 %v3227
    %3411 = vmatpush1.bf16.msra.mxu0 %v3226
    %3412 = vmatprep.subr.bf16.mxu0 %v3220
    %3413 = vmatpush1.bf16.msra.mxu0 %v3219
    %3414 = vmatprep.subr.bf16.mxu0 %v3213
    %3415 = vmatpush1.bf16.msra.mxu0 %v3212
    %3416 = vmatprep.subr.bf16.mxu0 %v3206
    %3417 = vmatpush1.bf16.msra.mxu0 %v3205
    %3418 = vmatprep.subr.bf16.mxu0 %v3199
    %3419 = vmatpush1.bf16.msra.mxu0 %v3198
    %3420 = vmatprep.subr.bf16.mxu0 %v3192
    %3421 = vmatpush1.bf16.msra.mxu0 %v3191
    %3422 = vmatprep.subr.bf16.mxu0 %v3185
    %3423 = vmatpush1.bf16.msra.mxu0 %v3184
    %3424 = vmatprep.subr.bf16.mxu0 %v3290
    %3425 = vmatpush2.bf16.msra.mxu0 %v3289
    %3426 = vmatprep.subr.bf16.mxu0 %v3283
    %3427 = vmatpush2.bf16.msra.mxu0 %v3282
    %3428 = vmatprep.subr.bf16.mxu0 %v3276
    %3429 = vmatpush2.bf16.msra.mxu0 %v3275
    %3430 = vmatprep.subr.bf16.mxu0 %v3269
    %3431 = vmatpush2.bf16.msra.mxu0 %v3268
    %3432 = vmatprep.subr.bf16.mxu0 %v3262
    %3433 = vmatpush2.bf16.msra.mxu0 %v3261
    %3434 = vmatprep.subr.bf16.mxu0 %v3255
    %3435 = vmatpush2.bf16.msra.mxu0 %v3254
    %3436 = vmatprep.subr.bf16.mxu0 %v3248
    %3437 = vmatpush2.bf16.msra.mxu0 %v3247
    %3438 = vmatprep.subr.bf16.mxu0 %v3241
    %3439 = vmatpush2.bf16.msra.mxu0 %v3240
    %3440 = vmatprep.mubr.bf16.mxu0 %v2689
    %3441 = vmatmul.mubr.bf16.gmra.mxu0 %v2688
    %v3442 = vpop.f32.mrf.mxu0
    %v3443 = vadd.f32 %v2818, %v3442
    %v3444 = vpop.f32.mrf.mxu0
    %v3445 = vadd.f32 %v2819, %v3444
    %v3446 = vpop.f32.mrf.mxu0
    %v3447 = vadd.f32 %v2825, %v3446
    %v3448 = vpop.f32.mrf.mxu0
    %v3449 = vadd.f32 %v2826, %v3448
    %3450 = vdwg.mxu0
    %3451 = vmatprep.subr.bf16.mxu0 %v3236
    %3452 = vmatpush1.bf16.msra.mxu0 %v3235
    %3453 = vmatprep.subr.bf16.mxu0 %v3229
    %3454 = vmatpush1.bf16.msra.mxu0 %v3228
    %3455 = vmatprep.subr.bf16.mxu0 %v3222
    %3456 = vmatpush1.bf16.msra.mxu0 %v3221
    %3457 = vmatprep.subr.bf16.mxu0 %v3215
    %3458 = vmatpush1.bf16.msra.mxu0 %v3214
    %3459 = vmatprep.subr.bf16.mxu0 %v3208
    %3460 = vmatpush1.bf16.msra.mxu0 %v3207
    %3461 = vmatprep.subr.bf16.mxu0 %v3201
    %3462 = vmatpush1.bf16.msra.mxu0 %v3200
    %3463 = vmatprep.subr.bf16.mxu0 %v3194
    %3464 = vmatpush1.bf16.msra.mxu0 %v3193
    %3465 = vmatprep.subr.bf16.mxu0 %v3187
    %3466 = vmatpush1.bf16.msra.mxu0 %v3186
    %3467 = vmatprep.subr.bf16.mxu0 %v3292
    %3468 = vmatpush2.bf16.msra.mxu0 %v3291
    %3469 = vmatprep.subr.bf16.mxu0 %v3285
    %3470 = vmatpush2.bf16.msra.mxu0 %v3284
    %3471 = vmatprep.subr.bf16.mxu0 %v3278
    %3472 = vmatpush2.bf16.msra.mxu0 %v3277
    %3473 = vmatprep.subr.bf16.mxu0 %v3271
    %3474 = vmatpush2.bf16.msra.mxu0 %v3270
    %3475 = vmatprep.subr.bf16.mxu0 %v3264
    %3476 = vmatpush2.bf16.msra.mxu0 %v3263
    %3477 = vmatprep.subr.bf16.mxu0 %v3257
    %3478 = vmatpush2.bf16.msra.mxu0 %v3256
    %3479 = vmatprep.subr.bf16.mxu0 %v3250
    %3480 = vmatpush2.bf16.msra.mxu0 %v3249
    %3481 = vmatprep.subr.bf16.mxu0 %v3243
    %3482 = vmatpush2.bf16.msra.mxu0 %v3242
    %3483 = vmatprep.mubr.bf16.mxu0 %v2689
    %3484 = vmatmul.mubr.bf16.gmra.mxu0 %v2688
    %v3485 = vpop.f32.mrf.mxu0
    %v3486 = vadd.f32 %v2820, %v3485
    %v3487 = vpop.f32.mrf.mxu0
    %v3488 = vadd.f32 %v2821, %v3487
    %v3489 = vpop.f32.mrf.mxu0
    %v3490 = vadd.f32 %v2827, %v3489
    %v3491 = vpop.f32.mrf.mxu0
    %v3492 = vadd.f32 %v2828, %v3491
    %3493 = vdwg.mxu0
    %3494 = vmatprep.subr.bf16.mxu0 %v3238
    %3495 = vmatpush1.bf16.msra.mxu0 %v3237
    %3496 = vmatprep.subr.bf16.mxu0 %v3231
    %3497 = vmatpush1.bf16.msra.mxu0 %v3230
    %3498 = vmatprep.subr.bf16.mxu0 %v3224
    %3499 = vmatpush1.bf16.msra.mxu0 %v3223
    %3500 = vmatprep.subr.bf16.mxu0 %v3217
    %3501 = vmatpush1.bf16.msra.mxu0 %v3216
    %3502 = vmatprep.subr.bf16.mxu0 %v3210
    %3503 = vmatpush1.bf16.msra.mxu0 %v3209
    %3504 = vmatprep.subr.bf16.mxu0 %v3203
    %3505 = vmatpush1.bf16.msra.mxu0 %v3202
    %3506 = vmatprep.subr.bf16.mxu0 %v3196
    %3507 = vmatpush1.bf16.msra.mxu0 %v3195
    %3508 = vmatprep.subr.bf16.mxu0 %v3189
    %3509 = vmatpush1.bf16.msra.mxu0 %v3188
    %3510 = vmatprep.subr.bf16.mxu0 %v3294
    %3511 = vmatpush2.bf16.msra.mxu0 %v3293
    %3512 = vmatprep.subr.bf16.mxu0 %v3287
    %3513 = vmatpush2.bf16.msra.mxu0 %v3286
    %3514 = vmatprep.subr.bf16.mxu0 %v3280
    %3515 = vmatpush2.bf16.msra.mxu0 %v3279
    %3516 = vmatprep.subr.bf16.mxu0 %v3273
    %3517 = vmatpush2.bf16.msra.mxu0 %v3272
    %3518 = vmatprep.subr.bf16.mxu0 %v3266
    %3519 = vmatpush2.bf16.msra.mxu0 %v3265
    %3520 = vmatprep.subr.bf16.mxu0 %v3259
    %3521 = vmatpush2.bf16.msra.mxu0 %v3258
    %3522 = vmatprep.subr.bf16.mxu0 %v3252
    %3523 = vmatpush2.bf16.msra.mxu0 %v3251
    %3524 = vmatprep.subr.bf16.mxu0 %v3245
    %3525 = vmatpush2.bf16.msra.mxu0 %v3244
    %3526 = vmatprep.mubr.bf16.mxu0 %v2689
    %3527 = vmatmul.mubr.bf16.gmra.mxu0 %v2688
    %v3528 = vpop.f32.mrf.mxu0
    %v3529 = vadd.f32 %v2822, %v3528
    %v3530 = vpop.f32.mrf.mxu0
    %v3531 = vadd.f32 %v2823, %v3530
    %v3532 = vpop.f32.mrf.mxu0
    %v3533 = vadd.f32 %v2829, %v3532
    %v3534 = vpop.f32.mrf.mxu0
    %v3535 = vadd.f32 %v2830, %v3534
    %3536 = vdwg.mxu0
    %3537 = vmatprep.subr.bf16.mxu0 0
    %3538 = vmatpush1.bf16.msra.mxu0 %v3239
    %3539 = vmatprep.subr.bf16.mxu0 0
    %3540 = vmatpush1.bf16.msra.mxu0 %v3232
    %3541 = vmatprep.subr.bf16.mxu0 0
    %3542 = vmatpush1.bf16.msra.mxu0 %v3225
    %3543 = vmatprep.subr.bf16.mxu0 0
    %3544 = vmatpush1.bf16.msra.mxu0 %v3218
    %3545 = vmatprep.subr.bf16.mxu0 0
    %3546 = vmatpush1.bf16.msra.mxu0 %v3211
    %3547 = vmatprep.subr.bf16.mxu0 0
    %3548 = vmatpush1.bf16.msra.mxu0 %v3204
    %3549 = vmatprep.subr.bf16.mxu0 0
    %3550 = vmatpush1.bf16.msra.mxu0 %v3197
    %3551 = vmatprep.subr.bf16.mxu0 0
    %3552 = vmatpush1.bf16.msra.mxu0 %v3190
    %3553 = vmatprep.subr.bf16.mxu0 0
    %3554 = vmatpush2.bf16.msra.mxu0 %v3295
    %3555 = vmatprep.subr.bf16.mxu0 0
    %3556 = vmatpush2.bf16.msra.mxu0 %v3288
    %3557 = vmatprep.subr.bf16.mxu0 0
    %3558 = vmatpush2.bf16.msra.mxu0 %v3281
    %3559 = vmatprep.subr.bf16.mxu0 0
    %3560 = vmatpush2.bf16.msra.mxu0 %v3274
    %3561 = vmatprep.subr.bf16.mxu0 0
    %3562 = vmatpush2.bf16.msra.mxu0 %v3267
    %3563 = vmatprep.subr.bf16.mxu0 0
    %3564 = vmatpush2.bf16.msra.mxu0 %v3260
    %3565 = vmatprep.subr.bf16.mxu0 0
    %3566 = vmatpush2.bf16.msra.mxu0 %v3253
    %3567 = vmatprep.subr.bf16.mxu0 0
    %3568 = vmatpush2.bf16.msra.mxu0 %v3246
    %3569 = vmatprep.mubr.bf16.mxu0 %v2689
    %3570 = vmatmul.mubr.bf16.gmra.mxu0 %v2688
    %v3571 = vpop.f32.mrf.mxu0
    %v3572 = vadd.f32 %v2824, %v3571
    %v3573 = vpop.f32.mrf.mxu0
    %v3574 = vpop.f32.mrf.mxu0
    %v3575 = vadd.f32 %v2831, %v3574
    %v3576 = vpop.f32.mrf.mxu0
    %3577 = vdwg.mxu0
    %v3578 = vxor.u32 %v3488, 2147483648
    %v3579 = vxor.u32 %v3529, 2147483648
    %v3580 = vxor.u32 %v3492, 2147483648
    %v3581 = vxor.u32 %v3533, 2147483648
    %v3582 = vmul.f32 %v3578, 1.442695
    %v3583 = vpow.pop %v3582
    %v3584 = vmul.f32 %v3579, 1.442695
    %v3585 = vpow.pop %v3584
    %v3586 = vmul.f32 %v3580, 1.442695
    %v3587 = vpow.pop %v3586
    %v3588 = vmul.f32 %v3581, 1.442695
    %v3589 = vpow.pop %v3588
    %v3590 = vadd.f32 %v3583, 1.0
    %v3591 = vadd.f32 %v3585, 1.0
    %v3592 = vadd.f32 %v3587, 1.0
    %v3593 = vadd.f32 %v3589, 1.0
    %v3594 = vrcp.pop %v3590
    %v3595 = vmul.f32 1.0, %v3594
    %v3596 = vrcp.pop %v3591
    %v3597 = vmul.f32 1.0, %v3596
    %v3598 = vrcp.pop %v3592
    %v3599 = vmul.f32 1.0, %v3598
    %v3600 = vrcp.pop %v3593
    %v3601 = vmul.f32 1.0, %v3600
    %v3602 = vmul.f32 %v3595, %v3572
    %v3603 = vmul.f32 %v3599, %v3575
    %v3604 = vadd.f32 %v3531, %v3602
    %v3605 = vadd.f32 %v3535, %v3603
    %v3606 = vtanh.pop %v3604
    %v3607 = vtanh.pop %v3605
    %v3608 = vsub.f32 1.0, %v3597
    %v3609 = vsub.f32 1.0, %v3601
    %v3610 = vmul.f32 %v3608, %v3606
    %v3611 = vmul.f32 %v3609, %v3607
    %v3612 = vmul.f32 %v3597, %v2632
    %v3613 = vmul.f32 %v3601, %v2633
    %v3614 = vadd.f32 %v3610, %v3612
    %v3615 = vadd.f32 %v3611, %v3613
    %s3616 = scalar_lea.vmem [#allocation3], 32
    %3617 = vst [vmem:[%s3616] sm:$0xff] %v3614
    %3618 = vst [vmem:[%s3616 + $0x8] sm:$0xff] %v3615
    %s3619 = smul.u32 6, 3
    %s3620 = smul.addr %s3619, 8
    %s3621 = scalar_lea.vmem [#allocation2], %s3620
    %v3622 = vld [vmem:[%s3621] sm:$0xff]
    %v3623 = vld [vmem:[%s3621 + $0x8] sm:$0xff]
    %v3624 = vld [vmem:[%s3621 + $0x10] sm:$0xff]
    %v3625 = vld [vmem:[%s3621 + $0x18] sm:$0xff]
    %v3626 = vld [vmem:[%s3621 + $0x20] sm:$0xff]
    %v3627 = vld [vmem:[%s3621 + $0x28] sm:$0xff]
    %v3628 = vadd.f32 %v3622, %v3443
    %v3629 = vadd.f32 %v3623, %v3445
    %v3630 = vadd.f32 %v3625, %v3447
    %v3631 = vadd.f32 %v3626, %v3449
    %v3632 = vxor.u32 %v3628, 2147483648
    %v3633 = vxor.u32 %v3629, 2147483648
    %v3634 = vxor.u32 %v3630, 2147483648
    %v3635 = vxor.u32 %v3631, 2147483648
    %v3636 = vmul.f32 %v3632, 1.442695
    %v3637 = vpow.pop %v3636
    %v3638 = vmul.f32 %v3633, 1.442695
    %v3639 = vpow.pop %v3638
    %v3640 = vmul.f32 %v3634, 1.442695
    %v3641 = vpow.pop %v3640
    %v3642 = vmul.f32 %v3635, 1.442695
    %v3643 = vpow.pop %v3642
    %v3644 = vadd.f32 %v3637, 1.0
    %v3645 = vadd.f32 %v3639, 1.0
    %v3646 = vadd.f32 %v3641, 1.0
    %v3647 = vadd.f32 %v3643, 1.0
    %v3648 = vrcp.pop %v3644
    %v3649 = vmul.f32 1.0, %v3648
    %v3650 = vrcp.pop %v3645
    %v3651 = vmul.f32 1.0, %v3650
    %v3652 = vrcp.pop %v3646
    %v3653 = vmul.f32 1.0, %v3652
    %v3654 = vrcp.pop %v3647
    %v3655 = vmul.f32 1.0, %v3654
    %v3656 = vmul.f32 %v3649, %v3486
    %v3657 = vmul.f32 %v3653, %v3490
    %v3658 = vadd.f32 %v3624, %v3656
    %v3659 = vadd.f32 %v3627, %v3657
    %v3660 = vtanh.pop %v3658
    %v3661 = vtanh.pop %v3659
    %v3662 = vsub.f32 1.0, %v3651
    %v3663 = vsub.f32 1.0, %v3655
    %v3664 = vmul.f32 %v3662, %v3660
    %v3665 = vmul.f32 %v3663, %v3661
    %v3666 = vmul.f32 %v3651, %v2686
    %v3667 = vmul.f32 %v3655, %v2687
    %v3668 = vadd.f32 %v3664, %v3666
    %v3669 = vadd.f32 %v3665, %v3667
    %v3670 = vpack.c.bf16 %v3669, %v3668
    %v3671 = vpack.c.bf16 %v3615, %v3614
    %v3672 = vld [vmem:[#allocation13] sm:$0xff]
    %v3673 = vld [vmem:[#allocation13 + $0x8] sm:$0xff]
    %v3674 = vld [vmem:[#allocation13 + $0x10] sm:$0xff]
    %v3675 = vld [vmem:[#allocation13 + $0x18] sm:$0xf]
    %v3676 = vld [vmem:[#allocation13 + $0x1c] sm:$0xff]
    %v3677 = vld [vmem:[#allocation13 + $0x24] sm:$0xff]
    %v3678 = vld [vmem:[#allocation13 + $0x2c] sm:$0xff]
    %v3679 = vld [vmem:[#allocation13 + $0x34] sm:$0xf]
    %v3680 = vld [vmem:[#allocation13 + $0x38] sm:$0xff]
    %v3681 = vld [vmem:[#allocation13 + $0x40] sm:$0xff]
    %v3682 = vld [vmem:[#allocation13 + $0x48] sm:$0xff]
    %v3683 = vld [vmem:[#allocation13 + $0x50] sm:$0xf]
    %v3684 = vld [vmem:[#allocation13 + $0x54] sm:$0xff]
    %v3685 = vld [vmem:[#allocation13 + $0x5c] sm:$0xff]
    %v3686 = vld [vmem:[#allocation13 + $0x64] sm:$0xff]
    %v3687 = vld [vmem:[#allocation13 + $0x6c] sm:$0xf]
    %v3688 = vld [vmem:[#allocation13 + $0x70] sm:$0xff]
    %v3689 = vld [vmem:[#allocation13 + $0x78] sm:$0xff]
    %v3690 = vld [vmem:[#allocation13 + $0x80] sm:$0xff]
    %v3691 = vld [vmem:[#allocation13 + $0x88] sm:$0xf]
    %v3692 = vld [vmem:[#allocation13 + $0x8c] sm:$0xff]
    %v3693 = vld [vmem:[#allocation13 + $0x94] sm:$0xff]
    %v3694 = vld [vmem:[#allocation13 + $0x9c] sm:$0xff]
    %v3695 = vld [vmem:[#allocation13 + $0xa4] sm:$0xf]
    %v3696 = vld [vmem:[#allocation13 + $0xa8] sm:$0xff]
    %v3697 = vld [vmem:[#allocation13 + $0xb0] sm:$0xff]
    %v3698 = vld [vmem:[#allocation13 + $0xb8] sm:$0xff]
    %v3699 = vld [vmem:[#allocation13 + $0xc0] sm:$0xf]
    %v3700 = vld [vmem:[#allocation13 + $0xc4] sm:$0xff]
    %v3701 = vld [vmem:[#allocation13 + $0xcc] sm:$0xff]
    %v3702 = vld [vmem:[#allocation13 + $0xd4] sm:$0xff]
    %v3703 = vld [vmem:[#allocation13 + $0xdc] sm:$0xf]
    %v3704 = vld [vmem:[#allocation13 + $0xe0] sm:$0xff]
    %v3705 = vld [vmem:[#allocation13 + $0xe8] sm:$0xff]
    %v3706 = vld [vmem:[#allocation13 + $0xf0] sm:$0xff]
    %v3707 = vld [vmem:[#allocation13 + $0xf8] sm:$0xf]
    %v3708 = vld [vmem:[#allocation13 + $0xfc] sm:$0xff]
    %v3709 = vld [vmem:[#allocation13 + $0x104] sm:$0xff]
    %v3710 = vld [vmem:[#allocation13 + $0x10c] sm:$0xff]
    %v3711 = vld [vmem:[#allocation13 + $0x114] sm:$0xf]
    %v3712 = vld [vmem:[#allocation13 + $0x118] sm:$0xff]
    %v3713 = vld [vmem:[#allocation13 + $0x120] sm:$0xff]
    %v3714 = vld [vmem:[#allocation13 + $0x128] sm:$0xff]
    %v3715 = vld [vmem:[#allocation13 + $0x130] sm:$0xf]
    %v3716 = vld [vmem:[#allocation13 + $0x134] sm:$0xff]
    %v3717 = vld [vmem:[#allocation13 + $0x13c] sm:$0xff]
    %v3718 = vld [vmem:[#allocation13 + $0x144] sm:$0xff]
    %v3719 = vld [vmem:[#allocation13 + $0x14c] sm:$0xf]
    %v3720 = vld [vmem:[#allocation13 + $0x150] sm:$0xff]
    %v3721 = vld [vmem:[#allocation13 + $0x158] sm:$0xff]
    %v3722 = vld [vmem:[#allocation13 + $0x160] sm:$0xff]
    %v3723 = vld [vmem:[#allocation13 + $0x168] sm:$0xf]
    %v3724 = vld [vmem:[#allocation13 + $0x16c] sm:$0xff]
    %v3725 = vld [vmem:[#allocation13 + $0x174] sm:$0xff]
    %v3726 = vld [vmem:[#allocation13 + $0x17c] sm:$0xff]
    %v3727 = vld [vmem:[#allocation13 + $0x184] sm:$0xf]
    %v3728 = vld [vmem:[#allocation13 + $0x188] sm:$0xff]
    %v3729 = vld [vmem:[#allocation13 + $0x190] sm:$0xff]
    %v3730 = vld [vmem:[#allocation13 + $0x198] sm:$0xff]
    %v3731 = vld [vmem:[#allocation13 + $0x1a0] sm:$0xf]
    %v3732 = vld [vmem:[#allocation13 + $0x1a4] sm:$0xff]
    %v3733 = vld [vmem:[#allocation13 + $0x1ac] sm:$0xff]
    %v3734 = vld [vmem:[#allocation13 + $0x1b4] sm:$0xff]
    %v3735 = vld [vmem:[#allocation13 + $0x1bc] sm:$0xf]
    %v3736 = vld [vmem:[#allocation13 + $0x1c0] sm:$0xff]
    %v3737 = vld [vmem:[#allocation13 + $0x1c8] sm:$0xff]
    %v3738 = vld [vmem:[#allocation13 + $0x1d0] sm:$0xff]
    %v3739 = vld [vmem:[#allocation13 + $0x1d8] sm:$0xf]
    %v3740 = vld [vmem:[#allocation13 + $0x1dc] sm:$0xff]
    %v3741 = vld [vmem:[#allocation13 + $0x1e4] sm:$0xff]
    %v3742 = vld [vmem:[#allocation13 + $0x1ec] sm:$0xff]
    %v3743 = vld [vmem:[#allocation13 + $0x1f4] sm:$0xf]
    %v3744 = vld [vmem:[#allocation13 + $0x1f8] sm:$0xff]
    %v3745 = vld [vmem:[#allocation13 + $0x200] sm:$0xff]
    %v3746 = vld [vmem:[#allocation13 + $0x208] sm:$0xff]
    %v3747 = vld [vmem:[#allocation13 + $0x210] sm:$0xf]
    %v3748 = vld [vmem:[#allocation13 + $0x214] sm:$0xff]
    %v3749 = vld [vmem:[#allocation13 + $0x21c] sm:$0xff]
    %v3750 = vld [vmem:[#allocation13 + $0x224] sm:$0xff]
    %v3751 = vld [vmem:[#allocation13 + $0x22c] sm:$0xf]
    %v3752 = vld [vmem:[#allocation13 + $0x230] sm:$0xff]
    %v3753 = vld [vmem:[#allocation13 + $0x238] sm:$0xff]
    %v3754 = vld [vmem:[#allocation13 + $0x240] sm:$0xff]
    %v3755 = vld [vmem:[#allocation13 + $0x248] sm:$0xf]
    %v3756 = vld [vmem:[#allocation13 + $0x24c] sm:$0xff]
    %v3757 = vld [vmem:[#allocation13 + $0x254] sm:$0xff]
    %v3758 = vld [vmem:[#allocation13 + $0x25c] sm:$0xff]
    %v3759 = vld [vmem:[#allocation13 + $0x264] sm:$0xf]
    %v3760 = vld [vmem:[#allocation13 + $0x268] sm:$0xff]
    %v3761 = vld [vmem:[#allocation13 + $0x270] sm:$0xff]
    %v3762 = vld [vmem:[#allocation13 + $0x278] sm:$0xff]
    %v3763 = vld [vmem:[#allocation13 + $0x280] sm:$0xf]
    %v3764 = vld [vmem:[#allocation13 + $0x284] sm:$0xff]
    %v3765 = vld [vmem:[#allocation13 + $0x28c] sm:$0xff]
    %v3766 = vld [vmem:[#allocation13 + $0x294] sm:$0xff]
    %v3767 = vld [vmem:[#allocation13 + $0x29c] sm:$0xf]
    %v3768 = vld [vmem:[#allocation13 + $0x2a0] sm:$0xff]
    %v3769 = vld [vmem:[#allocation13 + $0x2a8] sm:$0xff]
    %v3770 = vld [vmem:[#allocation13 + $0x2b0] sm:$0xff]
    %v3771 = vld [vmem:[#allocation13 + $0x2b8] sm:$0xf]
    %v3772 = vld [vmem:[#allocation13 + $0x2bc] sm:$0xff]
    %v3773 = vld [vmem:[#allocation13 + $0x2c4] sm:$0xff]
    %v3774 = vld [vmem:[#allocation13 + $0x2cc] sm:$0xff]
    %v3775 = vld [vmem:[#allocation13 + $0x2d4] sm:$0xf]
    %v3776 = vld [vmem:[#allocation13 + $0x2d8] sm:$0xff]
    %v3777 = vld [vmem:[#allocation13 + $0x2e0] sm:$0xff]
    %v3778 = vld [vmem:[#allocation13 + $0x2e8] sm:$0xff]
    %v3779 = vld [vmem:[#allocation13 + $0x2f0] sm:$0xf]
    %v3780 = vld [vmem:[#allocation13 + $0x2f4] sm:$0xff]
    %v3781 = vld [vmem:[#allocation13 + $0x2fc] sm:$0xff]
    %v3782 = vld [vmem:[#allocation13 + $0x304] sm:$0xff]
    %v3783 = vld [vmem:[#allocation13 + $0x30c] sm:$0xf]
    %v3784 = vld [vmem:[#allocation13 + $0x310] sm:$0xff]
    %v3785 = vld [vmem:[#allocation13 + $0x318] sm:$0xff]
    %v3786 = vld [vmem:[#allocation13 + $0x320] sm:$0xff]
    %v3787 = vld [vmem:[#allocation13 + $0x328] sm:$0xf]
    %v3788 = vld [vmem:[#allocation13 + $0x32c] sm:$0xff]
    %v3789 = vld [vmem:[#allocation13 + $0x334] sm:$0xff]
    %v3790 = vld [vmem:[#allocation13 + $0x33c] sm:$0xff]
    %v3791 = vld [vmem:[#allocation13 + $0x344] sm:$0xf]
    %v3792 = vld [vmem:[#allocation13 + $0x348] sm:$0xff]
    %v3793 = vld [vmem:[#allocation13 + $0x350] sm:$0xff]
    %v3794 = vld [vmem:[#allocation13 + $0x358] sm:$0xff]
    %v3795 = vld [vmem:[#allocation13 + $0x360] sm:$0xf]
    %v3796 = vld [vmem:[#allocation13 + $0x364] sm:$0xff]
    %v3797 = vld [vmem:[#allocation13 + $0x36c] sm:$0xff]
    %v3798 = vld [vmem:[#allocation13 + $0x374] sm:$0xff]
    %v3799 = vld [vmem:[#allocation13 + $0x37c] sm:$0xf]
    %v3800 = vld [vmem:[#allocation4] sm:$0xff]
    %v3801 = vld [vmem:[#allocation4 + $0x8] sm:$0xff]
    %v3802 = vld [vmem:[#allocation4 + $0x10] sm:$0xff]
    %v3803 = vld [vmem:[#allocation4 + $0x18] sm:$0xff]
    %v3804 = vld [vmem:[#allocation4 + $0x20] sm:$0xff]
    %v3805 = vld [vmem:[#allocation4 + $0x28] sm:$0xff]
    %v3806 = vld [vmem:[#allocation4 + $0x30] sm:$0xff]
    %v3807 = vld [vmem:[#allocation4 + $0x38] sm:$0xff]
    %v3808 = vld [vmem:[#allocation4 + $0x40] sm:$0xff]
    %v3809 = vld [vmem:[#allocation4 + $0x48] sm:$0xff]
    %v3810 = vld [vmem:[#allocation4 + $0x50] sm:$0xff]
    %v3811 = vld [vmem:[#allocation4 + $0x58] sm:$0xff]
    %v3812 = vld [vmem:[#allocation4 + $0x60] sm:$0xff]
    %v3813 = vld [vmem:[#allocation4 + $0x68] sm:$0xff]
    %v3942 = vunpack.c.l.b16 %v3672
    %v3943 = vunpack.c.h.b16 %v3672
    %v3944 = vunpack.c.l.b16 %v3673
    %v3945 = vunpack.c.h.b16 %v3673
    %v3946 = vunpack.c.l.b16 %v3674
    %v3947 = vunpack.c.h.b16 %v3674
    %v3948 = vunpack.c.l.b16 %v3675
    %v3949 = vunpack.c.l.b16 %v3676
    %v3950 = vunpack.c.h.b16 %v3676
    %v3951 = vunpack.c.l.b16 %v3677
    %v3952 = vunpack.c.h.b16 %v3677
    %v3953 = vunpack.c.l.b16 %v3678
    %v3954 = vunpack.c.h.b16 %v3678
    %v3955 = vunpack.c.l.b16 %v3679
    %v3956 = vunpack.c.l.b16 %v3680
    %v3957 = vunpack.c.h.b16 %v3680
    %v3958 = vunpack.c.l.b16 %v3681
    %v3959 = vunpack.c.h.b16 %v3681
    %v3960 = vunpack.c.l.b16 %v3682
    %v3961 = vunpack.c.h.b16 %v3682
    %v3962 = vunpack.c.l.b16 %v3683
    %v3963 = vunpack.c.l.b16 %v3684
    %v3964 = vunpack.c.h.b16 %v3684
    %v3965 = vunpack.c.l.b16 %v3685
    %v3966 = vunpack.c.h.b16 %v3685
    %v3967 = vunpack.c.l.b16 %v3686
    %v3968 = vunpack.c.h.b16 %v3686
    %v3969 = vunpack.c.l.b16 %v3687
    %v3970 = vunpack.c.l.b16 %v3688
    %v3971 = vunpack.c.h.b16 %v3688
    %v3972 = vunpack.c.l.b16 %v3689
    %v3973 = vunpack.c.h.b16 %v3689
    %v3974 = vunpack.c.l.b16 %v3690
    %v3975 = vunpack.c.h.b16 %v3690
    %v3976 = vunpack.c.l.b16 %v3691
    %v3977 = vunpack.c.l.b16 %v3692
    %v3978 = vunpack.c.h.b16 %v3692
    %v3979 = vunpack.c.l.b16 %v3693
    %v3980 = vunpack.c.h.b16 %v3693
    %v3981 = vunpack.c.l.b16 %v3694
    %v3982 = vunpack.c.h.b16 %v3694
    %v3983 = vunpack.c.l.b16 %v3695
    %v3984 = vunpack.c.l.b16 %v3696
    %v3985 = vunpack.c.h.b16 %v3696
    %v3986 = vunpack.c.l.b16 %v3697
    %v3987 = vunpack.c.h.b16 %v3697
    %v3988 = vunpack.c.l.b16 %v3698
    %v3989 = vunpack.c.h.b16 %v3698
    %v3990 = vunpack.c.l.b16 %v3699
    %v3991 = vunpack.c.l.b16 %v3700
    %v3992 = vunpack.c.h.b16 %v3700
    %v3993 = vunpack.c.l.b16 %v3701
    %v3994 = vunpack.c.h.b16 %v3701
    %v3995 = vunpack.c.l.b16 %v3702
    %v3996 = vunpack.c.h.b16 %v3702
    %v3997 = vunpack.c.l.b16 %v3703
    %v3998 = vunpack.c.l.b16 %v3704
    %v3999 = vunpack.c.h.b16 %v3704
    %v4000 = vunpack.c.l.b16 %v3705
    %v4001 = vunpack.c.h.b16 %v3705
    %v4002 = vunpack.c.l.b16 %v3706
    %v4003 = vunpack.c.h.b16 %v3706
    %v4004 = vunpack.c.l.b16 %v3707
    %v4005 = vunpack.c.l.b16 %v3708
    %v4006 = vunpack.c.h.b16 %v3708
    %v4007 = vunpack.c.l.b16 %v3709
    %v4008 = vunpack.c.h.b16 %v3709
    %v4009 = vunpack.c.l.b16 %v3710
    %v4010 = vunpack.c.h.b16 %v3710
    %v4011 = vunpack.c.l.b16 %v3711
    %v4012 = vunpack.c.l.b16 %v3712
    %v4013 = vunpack.c.h.b16 %v3712
    %v4014 = vunpack.c.l.b16 %v3713
    %v4015 = vunpack.c.h.b16 %v3713
    %v4016 = vunpack.c.l.b16 %v3714
    %v4017 = vunpack.c.h.b16 %v3714
    %v4018 = vunpack.c.l.b16 %v3715
    %v4019 = vunpack.c.l.b16 %v3716
    %v4020 = vunpack.c.h.b16 %v3716
    %v4021 = vunpack.c.l.b16 %v3717
    %v4022 = vunpack.c.h.b16 %v3717
    %v4023 = vunpack.c.l.b16 %v3718
    %v4024 = vunpack.c.h.b16 %v3718
    %v4025 = vunpack.c.l.b16 %v3719
    %v4026 = vunpack.c.l.b16 %v3720
    %v4027 = vunpack.c.h.b16 %v3720
    %v4028 = vunpack.c.l.b16 %v3721
    %v4029 = vunpack.c.h.b16 %v3721
    %v4030 = vunpack.c.l.b16 %v3722
    %v4031 = vunpack.c.h.b16 %v3722
    %v4032 = vunpack.c.l.b16 %v3723
    %v4033 = vunpack.c.l.b16 %v3724
    %v4034 = vunpack.c.h.b16 %v3724
    %v4035 = vunpack.c.l.b16 %v3725
    %v4036 = vunpack.c.h.b16 %v3725
    %v4037 = vunpack.c.l.b16 %v3726
    %v4038 = vunpack.c.h.b16 %v3726
    %v4039 = vunpack.c.l.b16 %v3727
    %v4040 = vunpack.c.l.b16 %v3728
    %v4041 = vunpack.c.h.b16 %v3728
    %v4042 = vunpack.c.l.b16 %v3729
    %v4043 = vunpack.c.h.b16 %v3729
    %v4044 = vunpack.c.l.b16 %v3730
    %v4045 = vunpack.c.h.b16 %v3730
    %v4046 = vunpack.c.l.b16 %v3731
    %v4047 = vunpack.c.l.b16 %v3732
    %v4048 = vunpack.c.h.b16 %v3732
    %v4049 = vunpack.c.l.b16 %v3733
    %v4050 = vunpack.c.h.b16 %v3733
    %v4051 = vunpack.c.l.b16 %v3734
    %v4052 = vunpack.c.h.b16 %v3734
    %v4053 = vunpack.c.l.b16 %v3735
    %v4054 = vunpack.c.l.b16 %v3736
    %v4055 = vunpack.c.h.b16 %v3736
    %v4056 = vunpack.c.l.b16 %v3737
    %v4057 = vunpack.c.h.b16 %v3737
    %v4058 = vunpack.c.l.b16 %v3738
    %v4059 = vunpack.c.h.b16 %v3738
    %v4060 = vunpack.c.l.b16 %v3739
    %v4061 = vunpack.c.l.b16 %v3740
    %v4062 = vunpack.c.h.b16 %v3740
    %v4063 = vunpack.c.l.b16 %v3741
    %v4064 = vunpack.c.h.b16 %v3741
    %v4065 = vunpack.c.l.b16 %v3742
    %v4066 = vunpack.c.h.b16 %v3742
    %v4067 = vunpack.c.l.b16 %v3743
    %v4068 = vunpack.c.l.b16 %v3744
    %v4069 = vunpack.c.h.b16 %v3744
    %v4070 = vunpack.c.l.b16 %v3745
    %v4071 = vunpack.c.h.b16 %v3745
    %v4072 = vunpack.c.l.b16 %v3746
    %v4073 = vunpack.c.h.b16 %v3746
    %v4074 = vunpack.c.l.b16 %v3747
    %v4075 = vunpack.c.l.b16 %v3748
    %v4076 = vunpack.c.h.b16 %v3748
    %v4077 = vunpack.c.l.b16 %v3749
    %v4078 = vunpack.c.h.b16 %v3749
    %v4079 = vunpack.c.l.b16 %v3750
    %v4080 = vunpack.c.h.b16 %v3750
    %v4081 = vunpack.c.l.b16 %v3751
    %v4082 = vunpack.c.l.b16 %v3752
    %v4083 = vunpack.c.h.b16 %v3752
    %v4084 = vunpack.c.l.b16 %v3753
    %v4085 = vunpack.c.h.b16 %v3753
    %v4086 = vunpack.c.l.b16 %v3754
    %v4087 = vunpack.c.h.b16 %v3754
    %v4088 = vunpack.c.l.b16 %v3755
    %v4089 = vunpack.c.l.b16 %v3756
    %v4090 = vunpack.c.h.b16 %v3756
    %v4091 = vunpack.c.l.b16 %v3757
    %v4092 = vunpack.c.h.b16 %v3757
    %v4093 = vunpack.c.l.b16 %v3758
    %v4094 = vunpack.c.h.b16 %v3758
    %v4095 = vunpack.c.l.b16 %v3759
    %v4096 = vunpack.c.l.b16 %v3760
    %v4097 = vunpack.c.h.b16 %v3760
    %v4098 = vunpack.c.l.b16 %v3761
    %v4099 = vunpack.c.h.b16 %v3761
    %v4100 = vunpack.c.l.b16 %v3762
    %v4101 = vunpack.c.h.b16 %v3762
    %v4102 = vunpack.c.l.b16 %v3763
    %v4103 = vunpack.c.l.b16 %v3764
    %v4104 = vunpack.c.h.b16 %v3764
    %v4105 = vunpack.c.l.b16 %v3765
    %v4106 = vunpack.c.h.b16 %v3765
    %v4107 = vunpack.c.l.b16 %v3766
    %v4108 = vunpack.c.h.b16 %v3766
    %v4109 = vunpack.c.l.b16 %v3767
    %v4110 = vunpack.c.l.b16 %v3768
    %v4111 = vunpack.c.h.b16 %v3768
    %v4112 = vunpack.c.l.b16 %v3769
    %v4113 = vunpack.c.h.b16 %v3769
    %v4114 = vunpack.c.l.b16 %v3770
    %v4115 = vunpack.c.h.b16 %v3770
    %v4116 = vunpack.c.l.b16 %v3771
    %v4117 = vunpack.c.l.b16 %v3772
    %v4118 = vunpack.c.h.b16 %v3772
    %v4119 = vunpack.c.l.b16 %v3773
    %v4120 = vunpack.c.h.b16 %v3773
    %v4121 = vunpack.c.l.b16 %v3774
    %v4122 = vunpack.c.h.b16 %v3774
    %v4123 = vunpack.c.l.b16 %v3775
    %v4124 = vunpack.c.l.b16 %v3776
    %v4125 = vunpack.c.h.b16 %v3776
    %v4126 = vunpack.c.l.b16 %v3777
    %v4127 = vunpack.c.h.b16 %v3777
    %v4128 = vunpack.c.l.b16 %v3778
    %v4129 = vunpack.c.h.b16 %v3778
    %v4130 = vunpack.c.l.b16 %v3779
    %v4131 = vunpack.c.l.b16 %v3780
    %v4132 = vunpack.c.h.b16 %v3780
    %v4133 = vunpack.c.l.b16 %v3781
    %v4134 = vunpack.c.h.b16 %v3781
    %v4135 = vunpack.c.l.b16 %v3782
    %v4136 = vunpack.c.h.b16 %v3782
    %v4137 = vunpack.c.l.b16 %v3783
    %v4138 = vunpack.c.l.b16 %v3784
    %v4139 = vunpack.c.h.b16 %v3784
    %v4140 = vunpack.c.l.b16 %v3785
    %v4141 = vunpack.c.h.b16 %v3785
    %v4142 = vunpack.c.l.b16 %v3786
    %v4143 = vunpack.c.h.b16 %v3786
    %v4144 = vunpack.c.l.b16 %v3787
    %v4145 = vunpack.c.l.b16 %v3788
    %v4146 = vunpack.c.h.b16 %v3788
    %v4147 = vunpack.c.l.b16 %v3789
    %v4148 = vunpack.c.h.b16 %v3789
    %v4149 = vunpack.c.l.b16 %v3790
    %v4150 = vunpack.c.h.b16 %v3790
    %v4151 = vunpack.c.l.b16 %v3791
    %v4152 = vunpack.c.l.b16 %v3792
    %v4153 = vunpack.c.h.b16 %v3792
    %v4154 = vunpack.c.l.b16 %v3793
    %v4155 = vunpack.c.h.b16 %v3793
    %v4156 = vunpack.c.l.b16 %v3794
    %v4157 = vunpack.c.h.b16 %v3794
    %v4158 = vunpack.c.l.b16 %v3795
    %v4159 = vunpack.c.l.b16 %v3796
    %v4160 = vunpack.c.h.b16 %v3796
    %v4161 = vunpack.c.l.b16 %v3797
    %v4162 = vunpack.c.h.b16 %v3797
    %v4163 = vunpack.c.l.b16 %v3798
    %v4164 = vunpack.c.h.b16 %v3798
    %v4165 = vunpack.c.l.b16 %v3799
    %v4166 = vpack.c.b16 %v3949, %v3942
    %v4167 = vpack.c.b16 %v3950, %v3943
    %v4168 = vpack.c.b16 %v3951, %v3944
    %v4169 = vpack.c.b16 %v3952, %v3945
    %v4170 = vpack.c.b16 %v3953, %v3946
    %v4171 = vpack.c.b16 %v3954, %v3947
    %v4172 = vpack.c.b16 %v3955, %v3948
    %v4173 = vpack.c.b16 %v3963, %v3956
    %v4174 = vpack.c.b16 %v3964, %v3957
    %v4175 = vpack.c.b16 %v3965, %v3958
    %v4176 = vpack.c.b16 %v3966, %v3959
    %v4177 = vpack.c.b16 %v3967, %v3960
    %v4178 = vpack.c.b16 %v3968, %v3961
    %v4179 = vpack.c.b16 %v3969, %v3962
    %v4180 = vpack.c.b16 %v3977, %v3970
    %v4181 = vpack.c.b16 %v3978, %v3971
    %v4182 = vpack.c.b16 %v3979, %v3972
    %v4183 = vpack.c.b16 %v3980, %v3973
    %v4184 = vpack.c.b16 %v3981, %v3974
    %v4185 = vpack.c.b16 %v3982, %v3975
    %v4186 = vpack.c.b16 %v3983, %v3976
    %v4187 = vpack.c.b16 %v3991, %v3984
    %v4188 = vpack.c.b16 %v3992, %v3985
    %v4189 = vpack.c.b16 %v3993, %v3986
    %v4190 = vpack.c.b16 %v3994, %v3987
    %v4191 = vpack.c.b16 %v3995, %v3988
    %v4192 = vpack.c.b16 %v3996, %v3989
    %v4193 = vpack.c.b16 %v3997, %v3990
    %v4194 = vpack.c.b16 %v4005, %v3998
    %v4195 = vpack.c.b16 %v4006, %v3999
    %v4196 = vpack.c.b16 %v4007, %v4000
    %v4197 = vpack.c.b16 %v4008, %v4001
    %v4198 = vpack.c.b16 %v4009, %v4002
    %v4199 = vpack.c.b16 %v4010, %v4003
    %v4200 = vpack.c.b16 %v4011, %v4004
    %v4201 = vpack.c.b16 %v4019, %v4012
    %v4202 = vpack.c.b16 %v4020, %v4013
    %v4203 = vpack.c.b16 %v4021, %v4014
    %v4204 = vpack.c.b16 %v4022, %v4015
    %v4205 = vpack.c.b16 %v4023, %v4016
    %v4206 = vpack.c.b16 %v4024, %v4017
    %v4207 = vpack.c.b16 %v4025, %v4018
    %v4208 = vpack.c.b16 %v4033, %v4026
    %v4209 = vpack.c.b16 %v4034, %v4027
    %v4210 = vpack.c.b16 %v4035, %v4028
    %v4211 = vpack.c.b16 %v4036, %v4029
    %v4212 = vpack.c.b16 %v4037, %v4030
    %v4213 = vpack.c.b16 %v4038, %v4031
    %v4214 = vpack.c.b16 %v4039, %v4032
    %v4215 = vpack.c.b16 %v4047, %v4040
    %v4216 = vpack.c.b16 %v4048, %v4041
    %v4217 = vpack.c.b16 %v4049, %v4042
    %v4218 = vpack.c.b16 %v4050, %v4043
    %v4219 = vpack.c.b16 %v4051, %v4044
    %v4220 = vpack.c.b16 %v4052, %v4045
    %v4221 = vpack.c.b16 %v4053, %v4046
    %v4222 = vpack.c.b16 %v4061, %v4054
    %v4223 = vpack.c.b16 %v4062, %v4055
    %v4224 = vpack.c.b16 %v4063, %v4056
    %v4225 = vpack.c.b16 %v4064, %v4057
    %v4226 = vpack.c.b16 %v4065, %v4058
    %v4227 = vpack.c.b16 %v4066, %v4059
    %v4228 = vpack.c.b16 %v4067, %v4060
    %v4229 = vpack.c.b16 %v4075, %v4068
    %v4230 = vpack.c.b16 %v4076, %v4069
    %v4231 = vpack.c.b16 %v4077, %v4070
    %v4232 = vpack.c.b16 %v4078, %v4071
    %v4233 = vpack.c.b16 %v4079, %v4072
    %v4234 = vpack.c.b16 %v4080, %v4073
    %v4235 = vpack.c.b16 %v4081, %v4074
    %v4236 = vpack.c.b16 %v4089, %v4082
    %v4237 = vpack.c.b16 %v4090, %v4083
    %v4238 = vpack.c.b16 %v4091, %v4084
    %v4239 = vpack.c.b16 %v4092, %v4085
    %v4240 = vpack.c.b16 %v4093, %v4086
    %v4241 = vpack.c.b16 %v4094, %v4087
    %v4242 = vpack.c.b16 %v4095, %v4088
    %v4243 = vpack.c.b16 %v4103, %v4096
    %v4244 = vpack.c.b16 %v4104, %v4097
    %v4245 = vpack.c.b16 %v4105, %v4098
    %v4246 = vpack.c.b16 %v4106, %v4099
    %v4247 = vpack.c.b16 %v4107, %v4100
    %v4248 = vpack.c.b16 %v4108, %v4101
    %v4249 = vpack.c.b16 %v4109, %v4102
    %v4250 = vpack.c.b16 %v4117, %v4110
    %v4251 = vpack.c.b16 %v4118, %v4111
    %v4252 = vpack.c.b16 %v4119, %v4112
    %v4253 = vpack.c.b16 %v4120, %v4113
    %v4254 = vpack.c.b16 %v4121, %v4114
    %v4255 = vpack.c.b16 %v4122, %v4115
    %v4256 = vpack.c.b16 %v4123, %v4116
    %v4257 = vpack.c.b16 %v4131, %v4124
    %v4258 = vpack.c.b16 %v4132, %v4125
    %v4259 = vpack.c.b16 %v4133, %v4126
    %v4260 = vpack.c.b16 %v4134, %v4127
    %v4261 = vpack.c.b16 %v4135, %v4128
    %v4262 = vpack.c.b16 %v4136, %v4129
    %v4263 = vpack.c.b16 %v4137, %v4130
    %v4264 = vpack.c.b16 %v4145, %v4138
    %v4265 = vpack.c.b16 %v4146, %v4139
    %v4266 = vpack.c.b16 %v4147, %v4140
    %v4267 = vpack.c.b16 %v4148, %v4141
    %v4268 = vpack.c.b16 %v4149, %v4142
    %v4269 = vpack.c.b16 %v4150, %v4143
    %v4270 = vpack.c.b16 %v4151, %v4144
    %v4271 = vpack.c.b16 %v4159, %v4152
    %v4272 = vpack.c.b16 %v4160, %v4153
    %v4273 = vpack.c.b16 %v4161, %v4154
    %v4274 = vpack.c.b16 %v4162, %v4155
    %v4275 = vpack.c.b16 %v4163, %v4156
    %v4276 = vpack.c.b16 %v4164, %v4157
    %v4277 = vpack.c.b16 %v4165, %v4158
    %4390 = vmatprep.subr.bf16.mxu0 %v4216
    %4391 = vmatpush1.bf16.msra.mxu0 %v4215
    %4392 = vmatprep.subr.bf16.mxu0 %v4209
    %4393 = vmatpush1.bf16.msra.mxu0 %v4208
    %4394 = vmatprep.subr.bf16.mxu0 %v4202
    %4395 = vmatpush1.bf16.msra.mxu0 %v4201
    %4396 = vmatprep.subr.bf16.mxu0 %v4195
    %4397 = vmatpush1.bf16.msra.mxu0 %v4194
    %4398 = vmatprep.subr.bf16.mxu0 %v4188
    %4399 = vmatpush1.bf16.msra.mxu0 %v4187
    %4400 = vmatprep.subr.bf16.mxu0 %v4181
    %4401 = vmatpush1.bf16.msra.mxu0 %v4180
    %4402 = vmatprep.subr.bf16.mxu0 %v4174
    %4403 = vmatpush1.bf16.msra.mxu0 %v4173
    %4404 = vmatprep.subr.bf16.mxu0 %v4167
    %4405 = vmatpush1.bf16.msra.mxu0 %v4166
    %4406 = vmatprep.subr.bf16.mxu0 %v4272
    %4407 = vmatpush2.bf16.msra.mxu0 %v4271
    %4408 = vmatprep.subr.bf16.mxu0 %v4265
    %4409 = vmatpush2.bf16.msra.mxu0 %v4264
    %4410 = vmatprep.subr.bf16.mxu0 %v4258
    %4411 = vmatpush2.bf16.msra.mxu0 %v4257
    %4412 = vmatprep.subr.bf16.mxu0 %v4251
    %4413 = vmatpush2.bf16.msra.mxu0 %v4250
    %4414 = vmatprep.subr.bf16.mxu0 %v4244
    %4415 = vmatpush2.bf16.msra.mxu0 %v4243
    %4416 = vmatprep.subr.bf16.mxu0 %v4237
    %4417 = vmatpush2.bf16.msra.mxu0 %v4236
    %4418 = vmatprep.subr.bf16.mxu0 %v4230
    %4419 = vmatpush2.bf16.msra.mxu0 %v4229
    %4420 = vmatprep.subr.bf16.mxu0 %v4223
    %4421 = vmatpush2.bf16.msra.mxu0 %v4222
    %4422 = vmatprep.mubr.bf16.mxu0 %v3671
    %4423 = vmatmul.mubr.bf16.gmra.mxu0 %v3670
    %v4424 = vpop.f32.mrf.mxu0
    %v4425 = vadd.f32 %v3800, %v4424
    %v4426 = vpop.f32.mrf.mxu0
    %v4427 = vadd.f32 %v3801, %v4426
    %v4428 = vpop.f32.mrf.mxu0
    %v4429 = vadd.f32 %v3807, %v4428
    %v4430 = vpop.f32.mrf.mxu0
    %v4431 = vadd.f32 %v3808, %v4430
    %4432 = vdwg.mxu0
    %4433 = vmatprep.subr.bf16.mxu0 %v4218
    %4434 = vmatpush1.bf16.msra.mxu0 %v4217
    %4435 = vmatprep.subr.bf16.mxu0 %v4211
    %4436 = vmatpush1.bf16.msra.mxu0 %v4210
    %4437 = vmatprep.subr.bf16.mxu0 %v4204
    %4438 = vmatpush1.bf16.msra.mxu0 %v4203
    %4439 = vmatprep.subr.bf16.mxu0 %v4197
    %4440 = vmatpush1.bf16.msra.mxu0 %v4196
    %4441 = vmatprep.subr.bf16.mxu0 %v4190
    %4442 = vmatpush1.bf16.msra.mxu0 %v4189
    %4443 = vmatprep.subr.bf16.mxu0 %v4183
    %4444 = vmatpush1.bf16.msra.mxu0 %v4182
    %4445 = vmatprep.subr.bf16.mxu0 %v4176
    %4446 = vmatpush1.bf16.msra.mxu0 %v4175
    %4447 = vmatprep.subr.bf16.mxu0 %v4169
    %4448 = vmatpush1.bf16.msra.mxu0 %v4168
    %4449 = vmatprep.subr.bf16.mxu0 %v4274
    %4450 = vmatpush2.bf16.msra.mxu0 %v4273
    %4451 = vmatprep.subr.bf16.mxu0 %v4267
    %4452 = vmatpush2.bf16.msra.mxu0 %v4266
    %4453 = vmatprep.subr.bf16.mxu0 %v4260
    %4454 = vmatpush2.bf16.msra.mxu0 %v4259
    %4455 = vmatprep.subr.bf16.mxu0 %v4253
    %4456 = vmatpush2.bf16.msra.mxu0 %v4252
    %4457 = vmatprep.subr.bf16.mxu0 %v4246
    %4458 = vmatpush2.bf16.msra.mxu0 %v4245
    %4459 = vmatprep.subr.bf16.mxu0 %v4239
    %4460 = vmatpush2.bf16.msra.mxu0 %v4238
    %4461 = vmatprep.subr.bf16.mxu0 %v4232
    %4462 = vmatpush2.bf16.msra.mxu0 %v4231
    %4463 = vmatprep.subr.bf16.mxu0 %v4225
    %4464 = vmatpush2.bf16.msra.mxu0 %v4224
    %4465 = vmatprep.mubr.bf16.mxu0 %v3671
    %4466 = vmatmul.mubr.bf16.gmra.mxu0 %v3670
    %v4467 = vpop.f32.mrf.mxu0
    %v4468 = vadd.f32 %v3802, %v4467
    %v4469 = vpop.f32.mrf.mxu0
    %v4470 = vadd.f32 %v3803, %v4469
    %v4471 = vpop.f32.mrf.mxu0
    %v4472 = vadd.f32 %v3809, %v4471
    %v4473 = vpop.f32.mrf.mxu0
    %v4474 = vadd.f32 %v3810, %v4473
    %4475 = vdwg.mxu0
    %4476 = vmatprep.subr.bf16.mxu0 %v4220
    %4477 = vmatpush1.bf16.msra.mxu0 %v4219
    %4478 = vmatprep.subr.bf16.mxu0 %v4213
    %4479 = vmatpush1.bf16.msra.mxu0 %v4212
    %4480 = vmatprep.subr.bf16.mxu0 %v4206
    %4481 = vmatpush1.bf16.msra.mxu0 %v4205
    %4482 = vmatprep.subr.bf16.mxu0 %v4199
    %4483 = vmatpush1.bf16.msra.mxu0 %v4198
    %4484 = vmatprep.subr.bf16.mxu0 %v4192
    %4485 = vmatpush1.bf16.msra.mxu0 %v4191
    %4486 = vmatprep.subr.bf16.mxu0 %v4185
    %4487 = vmatpush1.bf16.msra.mxu0 %v4184
    %4488 = vmatprep.subr.bf16.mxu0 %v4178
    %4489 = vmatpush1.bf16.msra.mxu0 %v4177
    %4490 = vmatprep.subr.bf16.mxu0 %v4171
    %4491 = vmatpush1.bf16.msra.mxu0 %v4170
    %4492 = vmatprep.subr.bf16.mxu0 %v4276
    %4493 = vmatpush2.bf16.msra.mxu0 %v4275
    %4494 = vmatprep.subr.bf16.mxu0 %v4269
    %4495 = vmatpush2.bf16.msra.mxu0 %v4268
    %4496 = vmatprep.subr.bf16.mxu0 %v4262
    %4497 = vmatpush2.bf16.msra.mxu0 %v4261
    %4498 = vmatprep.subr.bf16.mxu0 %v4255
    %4499 = vmatpush2.bf16.msra.mxu0 %v4254
    %4500 = vmatprep.subr.bf16.mxu0 %v4248
    %4501 = vmatpush2.bf16.msra.mxu0 %v4247
    %4502 = vmatprep.subr.bf16.mxu0 %v4241
    %4503 = vmatpush2.bf16.msra.mxu0 %v4240
    %4504 = vmatprep.subr.bf16.mxu0 %v4234
    %4505 = vmatpush2.bf16.msra.mxu0 %v4233
    %4506 = vmatprep.subr.bf16.mxu0 %v4227
    %4507 = vmatpush2.bf16.msra.mxu0 %v4226
    %4508 = vmatprep.mubr.bf16.mxu0 %v3671
    %4509 = vmatmul.mubr.bf16.gmra.mxu0 %v3670
    %v4510 = vpop.f32.mrf.mxu0
    %v4511 = vadd.f32 %v3804, %v4510
    %v4512 = vpop.f32.mrf.mxu0
    %v4513 = vadd.f32 %v3805, %v4512
    %v4514 = vpop.f32.mrf.mxu0
    %v4515 = vadd.f32 %v3811, %v4514
    %v4516 = vpop.f32.mrf.mxu0
    %v4517 = vadd.f32 %v3812, %v4516
    %4518 = vdwg.mxu0
    %4519 = vmatprep.subr.bf16.mxu0 0
    %4520 = vmatpush1.bf16.msra.mxu0 %v4221
    %4521 = vmatprep.subr.bf16.mxu0 0
    %4522 = vmatpush1.bf16.msra.mxu0 %v4214
    %4523 = vmatprep.subr.bf16.mxu0 0
    %4524 = vmatpush1.bf16.msra.mxu0 %v4207
    %4525 = vmatprep.subr.bf16.mxu0 0
    %4526 = vmatpush1.bf16.msra.mxu0 %v4200
    %4527 = vmatprep.subr.bf16.mxu0 0
    %4528 = vmatpush1.bf16.msra.mxu0 %v4193
    %4529 = vmatprep.subr.bf16.mxu0 0
    %4530 = vmatpush1.bf16.msra.mxu0 %v4186
    %4531 = vmatprep.subr.bf16.mxu0 0
    %4532 = vmatpush1.bf16.msra.mxu0 %v4179
    %4533 = vmatprep.subr.bf16.mxu0 0
    %4534 = vmatpush1.bf16.msra.mxu0 %v4172
    %4535 = vmatprep.subr.bf16.mxu0 0
    %4536 = vmatpush2.bf16.msra.mxu0 %v4277
    %4537 = vmatprep.subr.bf16.mxu0 0
    %4538 = vmatpush2.bf16.msra.mxu0 %v4270
    %4539 = vmatprep.subr.bf16.mxu0 0
    %4540 = vmatpush2.bf16.msra.mxu0 %v4263
    %4541 = vmatprep.subr.bf16.mxu0 0
    %4542 = vmatpush2.bf16.msra.mxu0 %v4256
    %4543 = vmatprep.subr.bf16.mxu0 0
    %4544 = vmatpush2.bf16.msra.mxu0 %v4249
    %4545 = vmatprep.subr.bf16.mxu0 0
    %4546 = vmatpush2.bf16.msra.mxu0 %v4242
    %4547 = vmatprep.subr.bf16.mxu0 0
    %4548 = vmatpush2.bf16.msra.mxu0 %v4235
    %4549 = vmatprep.subr.bf16.mxu0 0
    %4550 = vmatpush2.bf16.msra.mxu0 %v4228
    %4551 = vmatprep.mubr.bf16.mxu0 %v3671
    %4552 = vmatmul.mubr.bf16.gmra.mxu0 %v3670
    %v4553 = vpop.f32.mrf.mxu0
    %v4554 = vadd.f32 %v3806, %v4553
    %v4555 = vpop.f32.mrf.mxu0
    %v4556 = vpop.f32.mrf.mxu0
    %v4557 = vadd.f32 %v3813, %v4556
    %v4558 = vpop.f32.mrf.mxu0
    %4559 = vdwg.mxu0
    %v4560 = vxor.u32 %v4470, 2147483648
    %v4561 = vxor.u32 %v4511, 2147483648
    %v4562 = vxor.u32 %v4474, 2147483648
    %v4563 = vxor.u32 %v4515, 2147483648
    %v4564 = vmul.f32 %v4560, 1.442695
    %v4565 = vpow.pop %v4564
    %v4566 = vmul.f32 %v4561, 1.442695
    %v4567 = vpow.pop %v4566
    %v4568 = vmul.f32 %v4562, 1.442695
    %v4569 = vpow.pop %v4568
    %v4570 = vmul.f32 %v4563, 1.442695
    %v4571 = vpow.pop %v4570
    %v4572 = vadd.f32 %v4565, 1.0
    %v4573 = vadd.f32 %v4567, 1.0
    %v4574 = vadd.f32 %v4569, 1.0
    %v4575 = vadd.f32 %v4571, 1.0
    %v4576 = vrcp.pop %v4572
    %v4577 = vmul.f32 1.0, %v4576
    %v4578 = vrcp.pop %v4573
    %v4579 = vmul.f32 1.0, %v4578
    %v4580 = vrcp.pop %v4574
    %v4581 = vmul.f32 1.0, %v4580
    %v4582 = vrcp.pop %v4575
    %v4583 = vmul.f32 1.0, %v4582
    %v4584 = vmul.f32 %v4577, %v4554
    %v4585 = vmul.f32 %v4581, %v4557
    %v4586 = vadd.f32 %v4513, %v4584
    %v4587 = vadd.f32 %v4517, %v4585
    %v4588 = vtanh.pop %v4586
    %v4589 = vtanh.pop %v4587
    %v4590 = vsub.f32 1.0, %v4579
    %v4591 = vsub.f32 1.0, %v4583
    %v4592 = vmul.f32 %v4590, %v4588
    %v4593 = vmul.f32 %v4591, %v4589
    %v4594 = vmul.f32 %v4579, %v3614
    %v4595 = vmul.f32 %v4583, %v3615
    %v4596 = vadd.f32 %v4592, %v4594
    %v4597 = vadd.f32 %v4593, %v4595
    %s4598 = scalar_lea.vmem [#allocation3], 48
    %4599 = vst [vmem:[%s4598] sm:$0xff] %v4596
    %4600 = vst [vmem:[%s4598 + $0x8] sm:$0xff] %v4597
    %s4601 = smul.u32 8, 3
    %s4602 = smul.addr %s4601, 8
    %s4603 = scalar_lea.vmem [#allocation2], %s4602
    %v4604 = vld [vmem:[%s4603] sm:$0xff]
    %v4605 = vld [vmem:[%s4603 + $0x8] sm:$0xff]
    %v4606 = vld [vmem:[%s4603 + $0x10] sm:$0xff]
    %v4607 = vld [vmem:[%s4603 + $0x18] sm:$0xff]
    %v4608 = vld [vmem:[%s4603 + $0x20] sm:$0xff]
    %v4609 = vld [vmem:[%s4603 + $0x28] sm:$0xff]
    %v4610 = vadd.f32 %v4604, %v4425
    %v4611 = vadd.f32 %v4605, %v4427
    %v4612 = vadd.f32 %v4607, %v4429
    %v4613 = vadd.f32 %v4608, %v4431
    %v4614 = vxor.u32 %v4610, 2147483648
    %v4615 = vxor.u32 %v4611, 2147483648
    %v4616 = vxor.u32 %v4612, 2147483648
    %v4617 = vxor.u32 %v4613, 2147483648
    %v4618 = vmul.f32 %v4614, 1.442695
    %v4619 = vpow.pop %v4618
    %v4620 = vmul.f32 %v4615, 1.442695
    %v4621 = vpow.pop %v4620
    %v4622 = vmul.f32 %v4616, 1.442695
    %v4623 = vpow.pop %v4622
    %v4624 = vmul.f32 %v4617, 1.442695
    %v4625 = vpow.pop %v4624
    %v4626 = vadd.f32 %v4619, 1.0
    %v4627 = vadd.f32 %v4621, 1.0
    %v4628 = vadd.f32 %v4623, 1.0
    %v4629 = vadd.f32 %v4625, 1.0
    %v4630 = vrcp.pop %v4626
    %v4631 = vmul.f32 1.0, %v4630
    %v4632 = vrcp.pop %v4627
    %v4633 = vmul.f32 1.0, %v4632
    %v4634 = vrcp.pop %v4628
    %v4635 = vmul.f32 1.0, %v4634
    %v4636 = vrcp.pop %v4629
    %v4637 = vmul.f32 1.0, %v4636
    %v4638 = vmul.f32 %v4631, %v4468
    %v4639 = vmul.f32 %v4635, %v4472
    %v4640 = vadd.f32 %v4606, %v4638
    %v4641 = vadd.f32 %v4609, %v4639
    %v4642 = vtanh.pop %v4640
    %v4643 = vtanh.pop %v4641
    %v4644 = vsub.f32 1.0, %v4633
    %v4645 = vsub.f32 1.0, %v4637
    %v4646 = vmul.f32 %v4644, %v4642
    %v4647 = vmul.f32 %v4645, %v4643
    %v4648 = vmul.f32 %v4633, %v3668
    %v4649 = vmul.f32 %v4637, %v3669
    %v4650 = vadd.f32 %v4646, %v4648
    %v4651 = vadd.f32 %v4647, %v4649
    %v4652 = vpack.c.bf16 %v4651, %v4650
    %v4653 = vpack.c.bf16 %v4597, %v4596
    %v4654 = vld [vmem:[#allocation13] sm:$0xff]
    %v4655 = vld [vmem:[#allocation13 + $0x8] sm:$0xff]
    %v4656 = vld [vmem:[#allocation13 + $0x10] sm:$0xff]
    %v4657 = vld [vmem:[#allocation13 + $0x18] sm:$0xf]
    %v4658 = vld [vmem:[#allocation13 + $0x1c] sm:$0xff]
    %v4659 = vld [vmem:[#allocation13 + $0x24] sm:$0xff]
    %v4660 = vld [vmem:[#allocation13 + $0x2c] sm:$0xff]
    %v4661 = vld [vmem:[#allocation13 + $0x34] sm:$0xf]
    %v4662 = vld [vmem:[#allocation13 + $0x38] sm:$0xff]
    %v4663 = vld [vmem:[#allocation13 + $0x40] sm:$0xff]
    %v4664 = vld [vmem:[#allocation13 + $0x48] sm:$0xff]
    %v4665 = vld [vmem:[#allocation13 + $0x50] sm:$0xf]
    %v4666 = vld [vmem:[#allocation13 + $0x54] sm:$0xff]
    %v4667 = vld [vmem:[#allocation13 + $0x5c] sm:$0xff]
    %v4668 = vld [vmem:[#allocation13 + $0x64] sm:$0xff]
    %v4669 = vld [vmem:[#allocation13 + $0x6c] sm:$0xf]
    %v4670 = vld [vmem:[#allocation13 + $0x70] sm:$0xff]
    %v4671 = vld [vmem:[#allocation13 + $0x78] sm:$0xff]
    %v4672 = vld [vmem:[#allocation13 + $0x80] sm:$0xff]
    %v4673 = vld [vmem:[#allocation13 + $0x88] sm:$0xf]
    %v4674 = vld [vmem:[#allocation13 + $0x8c] sm:$0xff]
    %v4675 = vld [vmem:[#allocation13 + $0x94] sm:$0xff]
    %v4676 = vld [vmem:[#allocation13 + $0x9c] sm:$0xff]
    %v4677 = vld [vmem:[#allocation13 + $0xa4] sm:$0xf]
    %v4678 = vld [vmem:[#allocation13 + $0xa8] sm:$0xff]
    %v4679 = vld [vmem:[#allocation13 + $0xb0] sm:$0xff]
    %v4680 = vld [vmem:[#allocation13 + $0xb8] sm:$0xff]
    %v4681 = vld [vmem:[#allocation13 + $0xc0] sm:$0xf]
    %v4682 = vld [vmem:[#allocation13 + $0xc4] sm:$0xff]
    %v4683 = vld [vmem:[#allocation13 + $0xcc] sm:$0xff]
    %v4684 = vld [vmem:[#allocation13 + $0xd4] sm:$0xff]
    %v4685 = vld [vmem:[#allocation13 + $0xdc] sm:$0xf]
    %v4686 = vld [vmem:[#allocation13 + $0xe0] sm:$0xff]
    %v4687 = vld [vmem:[#allocation13 + $0xe8] sm:$0xff]
    %v4688 = vld [vmem:[#allocation13 + $0xf0] sm:$0xff]
    %v4689 = vld [vmem:[#allocation13 + $0xf8] sm:$0xf]
    %v4690 = vld [vmem:[#allocation13 + $0xfc] sm:$0xff]
    %v4691 = vld [vmem:[#allocation13 + $0x104] sm:$0xff]
    %v4692 = vld [vmem:[#allocation13 + $0x10c] sm:$0xff]
    %v4693 = vld [vmem:[#allocation13 + $0x114] sm:$0xf]
    %v4694 = vld [vmem:[#allocation13 + $0x118] sm:$0xff]
    %v4695 = vld [vmem:[#allocation13 + $0x120] sm:$0xff]
    %v4696 = vld [vmem:[#allocation13 + $0x128] sm:$0xff]
    %v4697 = vld [vmem:[#allocation13 + $0x130] sm:$0xf]
    %v4698 = vld [vmem:[#allocation13 + $0x134] sm:$0xff]
    %v4699 = vld [vmem:[#allocation13 + $0x13c] sm:$0xff]
    %v4700 = vld [vmem:[#allocation13 + $0x144] sm:$0xff]
    %v4701 = vld [vmem:[#allocation13 + $0x14c] sm:$0xf]
    %v4702 = vld [vmem:[#allocation13 + $0x150] sm:$0xff]
    %v4703 = vld [vmem:[#allocation13 + $0x158] sm:$0xff]
    %v4704 = vld [vmem:[#allocation13 + $0x160] sm:$0xff]
    %v4705 = vld [vmem:[#allocation13 + $0x168] sm:$0xf]
    %v4706 = vld [vmem:[#allocation13 + $0x16c] sm:$0xff]
    %v4707 = vld [vmem:[#allocation13 + $0x174] sm:$0xff]
    %v4708 = vld [vmem:[#allocation13 + $0x17c] sm:$0xff]
    %v4709 = vld [vmem:[#allocation13 + $0x184] sm:$0xf]
    %v4710 = vld [vmem:[#allocation13 + $0x188] sm:$0xff]
    %v4711 = vld [vmem:[#allocation13 + $0x190] sm:$0xff]
    %v4712 = vld [vmem:[#allocation13 + $0x198] sm:$0xff]
    %v4713 = vld [vmem:[#allocation13 + $0x1a0] sm:$0xf]
    %v4714 = vld [vmem:[#allocation13 + $0x1a4] sm:$0xff]
    %v4715 = vld [vmem:[#allocation13 + $0x1ac] sm:$0xff]
    %v4716 = vld [vmem:[#allocation13 + $0x1b4] sm:$0xff]
    %v4717 = vld [vmem:[#allocation13 + $0x1bc] sm:$0xf]
    %v4718 = vld [vmem:[#allocation13 + $0x1c0] sm:$0xff]
    %v4719 = vld [vmem:[#allocation13 + $0x1c8] sm:$0xff]
    %v4720 = vld [vmem:[#allocation13 + $0x1d0] sm:$0xff]
    %v4721 = vld [vmem:[#allocation13 + $0x1d8] sm:$0xf]
    %v4722 = vld [vmem:[#allocation13 + $0x1dc] sm:$0xff]
    %v4723 = vld [vmem:[#allocation13 + $0x1e4] sm:$0xff]
    %v4724 = vld [vmem:[#allocation13 + $0x1ec] sm:$0xff]
    %v4725 = vld [vmem:[#allocation13 + $0x1f4] sm:$0xf]
    %v4726 = vld [vmem:[#allocation13 + $0x1f8] sm:$0xff]
    %v4727 = vld [vmem:[#allocation13 + $0x200] sm:$0xff]
    %v4728 = vld [vmem:[#allocation13 + $0x208] sm:$0xff]
    %v4729 = vld [vmem:[#allocation13 + $0x210] sm:$0xf]
    %v4730 = vld [vmem:[#allocation13 + $0x214] sm:$0xff]
    %v4731 = vld [vmem:[#allocation13 + $0x21c] sm:$0xff]
    %v4732 = vld [vmem:[#allocation13 + $0x224] sm:$0xff]
    %v4733 = vld [vmem:[#allocation13 + $0x22c] sm:$0xf]
    %v4734 = vld [vmem:[#allocation13 + $0x230] sm:$0xff]
    %v4735 = vld [vmem:[#allocation13 + $0x238] sm:$0xff]
    %v4736 = vld [vmem:[#allocation13 + $0x240] sm:$0xff]
    %v4737 = vld [vmem:[#allocation13 + $0x248] sm:$0xf]
    %v4738 = vld [vmem:[#allocation13 + $0x24c] sm:$0xff]
    %v4739 = vld [vmem:[#allocation13 + $0x254] sm:$0xff]
    %v4740 = vld [vmem:[#allocation13 + $0x25c] sm:$0xff]
    %v4741 = vld [vmem:[#allocation13 + $0x264] sm:$0xf]
    %v4742 = vld [vmem:[#allocation13 + $0x268] sm:$0xff]
    %v4743 = vld [vmem:[#allocation13 + $0x270] sm:$0xff]
    %v4744 = vld [vmem:[#allocation13 + $0x278] sm:$0xff]
    %v4745 = vld [vmem:[#allocation13 + $0x280] sm:$0xf]
    %v4746 = vld [vmem:[#allocation13 + $0x284] sm:$0xff]
    %v4747 = vld [vmem:[#allocation13 + $0x28c] sm:$0xff]
    %v4748 = vld [vmem:[#allocation13 + $0x294] sm:$0xff]
    %v4749 = vld [vmem:[#allocation13 + $0x29c] sm:$0xf]
    %v4750 = vld [vmem:[#allocation13 + $0x2a0] sm:$0xff]
    %v4751 = vld [vmem:[#allocation13 + $0x2a8] sm:$0xff]
    %v4752 = vld [vmem:[#allocation13 + $0x2b0] sm:$0xff]
    %v4753 = vld [vmem:[#allocation13 + $0x2b8] sm:$0xf]
    %v4754 = vld [vmem:[#allocation13 + $0x2bc] sm:$0xff]
    %v4755 = vld [vmem:[#allocation13 + $0x2c4] sm:$0xff]
    %v4756 = vld [vmem:[#allocation13 + $0x2cc] sm:$0xff]
    %v4757 = vld [vmem:[#allocation13 + $0x2d4] sm:$0xf]
    %v4758 = vld [vmem:[#allocation13 + $0x2d8] sm:$0xff]
    %v4759 = vld [vmem:[#allocation13 + $0x2e0] sm:$0xff]
    %v4760 = vld [vmem:[#allocation13 + $0x2e8] sm:$0xff]
    %v4761 = vld [vmem:[#allocation13 + $0x2f0] sm:$0xf]
    %v4762 = vld [vmem:[#allocation13 + $0x2f4] sm:$0xff]
    %v4763 = vld [vmem:[#allocation13 + $0x2fc] sm:$0xff]
    %v4764 = vld [vmem:[#allocation13 + $0x304] sm:$0xff]
    %v4765 = vld [vmem:[#allocation13 + $0x30c] sm:$0xf]
    %v4766 = vld [vmem:[#allocation13 + $0x310] sm:$0xff]
    %v4767 = vld [vmem:[#allocation13 + $0x318] sm:$0xff]
    %v4768 = vld [vmem:[#allocation13 + $0x320] sm:$0xff]
    %v4769 = vld [vmem:[#allocation13 + $0x328] sm:$0xf]
    %v4770 = vld [vmem:[#allocation13 + $0x32c] sm:$0xff]
    %v4771 = vld [vmem:[#allocation13 + $0x334] sm:$0xff]
    %v4772 = vld [vmem:[#allocation13 + $0x33c] sm:$0xff]
    %v4773 = vld [vmem:[#allocation13 + $0x344] sm:$0xf]
    %v4774 = vld [vmem:[#allocation13 + $0x348] sm:$0xff]
    %v4775 = vld [vmem:[#allocation13 + $0x350] sm:$0xff]
    %v4776 = vld [vmem:[#allocation13 + $0x358] sm:$0xff]
    %v4777 = vld [vmem:[#allocation13 + $0x360] sm:$0xf]
    %v4778 = vld [vmem:[#allocation13 + $0x364] sm:$0xff]
    %v4779 = vld [vmem:[#allocation13 + $0x36c] sm:$0xff]
    %v4780 = vld [vmem:[#allocation13 + $0x374] sm:$0xff]
    %v4781 = vld [vmem:[#allocation13 + $0x37c] sm:$0xf]
    %v4782 = vld [vmem:[#allocation4] sm:$0xff]
    %v4783 = vld [vmem:[#allocation4 + $0x8] sm:$0xff]
    %v4784 = vld [vmem:[#allocation4 + $0x10] sm:$0xff]
    %v4785 = vld [vmem:[#allocation4 + $0x18] sm:$0xff]
    %v4786 = vld [vmem:[#allocation4 + $0x20] sm:$0xff]
    %v4787 = vld [vmem:[#allocation4 + $0x28] sm:$0xff]
    %v4788 = vld [vmem:[#allocation4 + $0x30] sm:$0xff]
    %v4789 = vld [vmem:[#allocation4 + $0x38] sm:$0xff]
    %v4790 = vld [vmem:[#allocation4 + $0x40] sm:$0xff]
    %v4791 = vld [vmem:[#allocation4 + $0x48] sm:$0xff]
    %v4792 = vld [vmem:[#allocation4 + $0x50] sm:$0xff]
    %v4793 = vld [vmem:[#allocation4 + $0x58] sm:$0xff]
    %v4794 = vld [vmem:[#allocation4 + $0x60] sm:$0xff]
    %v4795 = vld [vmem:[#allocation4 + $0x68] sm:$0xff]
    %v4924 = vunpack.c.l.b16 %v4654
    %v4925 = vunpack.c.h.b16 %v4654
    %v4926 = vunpack.c.l.b16 %v4655
    %v4927 = vunpack.c.h.b16 %v4655
    %v4928 = vunpack.c.l.b16 %v4656
    %v4929 = vunpack.c.h.b16 %v4656
    %v4930 = vunpack.c.l.b16 %v4657
    %v4931 = vunpack.c.l.b16 %v4658
    %v4932 = vunpack.c.h.b16 %v4658
    %v4933 = vunpack.c.l.b16 %v4659
    %v4934 = vunpack.c.h.b16 %v4659
    %v4935 = vunpack.c.l.b16 %v4660
    %v4936 = vunpack.c.h.b16 %v4660
    %v4937 = vunpack.c.l.b16 %v4661
    %v4938 = vunpack.c.l.b16 %v4662
    %v4939 = vunpack.c.h.b16 %v4662
    %v4940 = vunpack.c.l.b16 %v4663
    %v4941 = vunpack.c.h.b16 %v4663
    %v4942 = vunpack.c.l.b16 %v4664
    %v4943 = vunpack.c.h.b16 %v4664
    %v4944 = vunpack.c.l.b16 %v4665
    %v4945 = vunpack.c.l.b16 %v4666
    %v4946 = vunpack.c.h.b16 %v4666
    %v4947 = vunpack.c.l.b16 %v4667
    %v4948 = vunpack.c.h.b16 %v4667
    %v4949 = vunpack.c.l.b16 %v4668
    %v4950 = vunpack.c.h.b16 %v4668
    %v4951 = vunpack.c.l.b16 %v4669
    %v4952 = vunpack.c.l.b16 %v4670
    %v4953 = vunpack.c.h.b16 %v4670
    %v4954 = vunpack.c.l.b16 %v4671
    %v4955 = vunpack.c.h.b16 %v4671
    %v4956 = vunpack.c.l.b16 %v4672
    %v4957 = vunpack.c.h.b16 %v4672
    %v4958 = vunpack.c.l.b16 %v4673
    %v4959 = vunpack.c.l.b16 %v4674
    %v4960 = vunpack.c.h.b16 %v4674
    %v4961 = vunpack.c.l.b16 %v4675
    %v4962 = vunpack.c.h.b16 %v4675
    %v4963 = vunpack.c.l.b16 %v4676
    %v4964 = vunpack.c.h.b16 %v4676
    %v4965 = vunpack.c.l.b16 %v4677
    %v4966 = vunpack.c.l.b16 %v4678
    %v4967 = vunpack.c.h.b16 %v4678
    %v4968 = vunpack.c.l.b16 %v4679
    %v4969 = vunpack.c.h.b16 %v4679
    %v4970 = vunpack.c.l.b16 %v4680
    %v4971 = vunpack.c.h.b16 %v4680
    %v4972 = vunpack.c.l.b16 %v4681
    %v4973 = vunpack.c.l.b16 %v4682
    %v4974 = vunpack.c.h.b16 %v4682
    %v4975 = vunpack.c.l.b16 %v4683
    %v4976 = vunpack.c.h.b16 %v4683
    %v4977 = vunpack.c.l.b16 %v4684
    %v4978 = vunpack.c.h.b16 %v4684
    %v4979 = vunpack.c.l.b16 %v4685
    %v4980 = vunpack.c.l.b16 %v4686
    %v4981 = vunpack.c.h.b16 %v4686
    %v4982 = vunpack.c.l.b16 %v4687
    %v4983 = vunpack.c.h.b16 %v4687
    %v4984 = vunpack.c.l.b16 %v4688
    %v4985 = vunpack.c.h.b16 %v4688
    %v4986 = vunpack.c.l.b16 %v4689
    %v4987 = vunpack.c.l.b16 %v4690
    %v4988 = vunpack.c.h.b16 %v4690
    %v4989 = vunpack.c.l.b16 %v4691
    %v4990 = vunpack.c.h.b16 %v4691
    %v4991 = vunpack.c.l.b16 %v4692
    %v4992 = vunpack.c.h.b16 %v4692
    %v4993 = vunpack.c.l.b16 %v4693
    %v4994 = vunpack.c.l.b16 %v4694
    %v4995 = vunpack.c.h.b16 %v4694
    %v4996 = vunpack.c.l.b16 %v4695
    %v4997 = vunpack.c.h.b16 %v4695
    %v4998 = vunpack.c.l.b16 %v4696
    %v4999 = vunpack.c.h.b16 %v4696
    %v5000 = vunpack.c.l.b16 %v4697
    %v5001 = vunpack.c.l.b16 %v4698
    %v5002 = vunpack.c.h.b16 %v4698
    %v5003 = vunpack.c.l.b16 %v4699
    %v5004 = vunpack.c.h.b16 %v4699
    %v5005 = vunpack.c.l.b16 %v4700
    %v5006 = vunpack.c.h.b16 %v4700
    %v5007 = vunpack.c.l.b16 %v4701
    %v5008 = vunpack.c.l.b16 %v4702
    %v5009 = vunpack.c.h.b16 %v4702
    %v5010 = vunpack.c.l.b16 %v4703
    %v5011 = vunpack.c.h.b16 %v4703
    %v5012 = vunpack.c.l.b16 %v4704
    %v5013 = vunpack.c.h.b16 %v4704
    %v5014 = vunpack.c.l.b16 %v4705
    %v5015 = vunpack.c.l.b16 %v4706
    %v5016 = vunpack.c.h.b16 %v4706
    %v5017 = vunpack.c.l.b16 %v4707
    %v5018 = vunpack.c.h.b16 %v4707
    %v5019 = vunpack.c.l.b16 %v4708
    %v5020 = vunpack.c.h.b16 %v4708
    %v5021 = vunpack.c.l.b16 %v4709
    %v5022 = vunpack.c.l.b16 %v4710
    %v5023 = vunpack.c.h.b16 %v4710
    %v5024 = vunpack.c.l.b16 %v4711
    %v5025 = vunpack.c.h.b16 %v4711
    %v5026 = vunpack.c.l.b16 %v4712
    %v5027 = vunpack.c.h.b16 %v4712
    %v5028 = vunpack.c.l.b16 %v4713
    %v5029 = vunpack.c.l.b16 %v4714
    %v5030 = vunpack.c.h.b16 %v4714
    %v5031 = vunpack.c.l.b16 %v4715
    %v5032 = vunpack.c.h.b16 %v4715
    %v5033 = vunpack.c.l.b16 %v4716
    %v5034 = vunpack.c.h.b16 %v4716
    %v5035 = vunpack.c.l.b16 %v4717
    %v5036 = vunpack.c.l.b16 %v4718
    %v5037 = vunpack.c.h.b16 %v4718
    %v5038 = vunpack.c.l.b16 %v4719
    %v5039 = vunpack.c.h.b16 %v4719
    %v5040 = vunpack.c.l.b16 %v4720
    %v5041 = vunpack.c.h.b16 %v4720
    %v5042 = vunpack.c.l.b16 %v4721
    %v5043 = vunpack.c.l.b16 %v4722
    %v5044 = vunpack.c.h.b16 %v4722
    %v5045 = vunpack.c.l.b16 %v4723
    %v5046 = vunpack.c.h.b16 %v4723
    %v5047 = vunpack.c.l.b16 %v4724
    %v5048 = vunpack.c.h.b16 %v4724
    %v5049 = vunpack.c.l.b16 %v4725
    %v5050 = vunpack.c.l.b16 %v4726
    %v5051 = vunpack.c.h.b16 %v4726
    %v5052 = vunpack.c.l.b16 %v4727
    %v5053 = vunpack.c.h.b16 %v4727
    %v5054 = vunpack.c.l.b16 %v4728
    %v5055 = vunpack.c.h.b16 %v4728
    %v5056 = vunpack.c.l.b16 %v4729
    %v5057 = vunpack.c.l.b16 %v4730
    %v5058 = vunpack.c.h.b16 %v4730
    %v5059 = vunpack.c.l.b16 %v4731
    %v5060 = vunpack.c.h.b16 %v4731
    %v5061 = vunpack.c.l.b16 %v4732
    %v5062 = vunpack.c.h.b16 %v4732
    %v5063 = vunpack.c.l.b16 %v4733
    %v5064 = vunpack.c.l.b16 %v4734
    %v5065 = vunpack.c.h.b16 %v4734
    %v5066 = vunpack.c.l.b16 %v4735
    %v5067 = vunpack.c.h.b16 %v4735
    %v5068 = vunpack.c.l.b16 %v4736
    %v5069 = vunpack.c.h.b16 %v4736
    %v5070 = vunpack.c.l.b16 %v4737
    %v5071 = vunpack.c.l.b16 %v4738
    %v5072 = vunpack.c.h.b16 %v4738
    %v5073 = vunpack.c.l.b16 %v4739
    %v5074 = vunpack.c.h.b16 %v4739
    %v5075 = vunpack.c.l.b16 %v4740
    %v5076 = vunpack.c.h.b16 %v4740
    %v5077 = vunpack.c.l.b16 %v4741
    %v5078 = vunpack.c.l.b16 %v4742
    %v5079 = vunpack.c.h.b16 %v4742
    %v5080 = vunpack.c.l.b16 %v4743
    %v5081 = vunpack.c.h.b16 %v4743
    %v5082 = vunpack.c.l.b16 %v4744
    %v5083 = vunpack.c.h.b16 %v4744
    %v5084 = vunpack.c.l.b16 %v4745
    %v5085 = vunpack.c.l.b16 %v4746
    %v5086 = vunpack.c.h.b16 %v4746
    %v5087 = vunpack.c.l.b16 %v4747
    %v5088 = vunpack.c.h.b16 %v4747
    %v5089 = vunpack.c.l.b16 %v4748
    %v5090 = vunpack.c.h.b16 %v4748
    %v5091 = vunpack.c.l.b16 %v4749
    %v5092 = vunpack.c.l.b16 %v4750
    %v5093 = vunpack.c.h.b16 %v4750
    %v5094 = vunpack.c.l.b16 %v4751
    %v5095 = vunpack.c.h.b16 %v4751
    %v5096 = vunpack.c.l.b16 %v4752
    %v5097 = vunpack.c.h.b16 %v4752
    %v5098 = vunpack.c.l.b16 %v4753
    %v5099 = vunpack.c.l.b16 %v4754
    %v5100 = vunpack.c.h.b16 %v4754
    %v5101 = vunpack.c.l.b16 %v4755
    %v5102 = vunpack.c.h.b16 %v4755
    %v5103 = vunpack.c.l.b16 %v4756
    %v5104 = vunpack.c.h.b16 %v4756
    %v5105 = vunpack.c.l.b16 %v4757
    %v5106 = vunpack.c.l.b16 %v4758
    %v5107 = vunpack.c.h.b16 %v4758
    %v5108 = vunpack.c.l.b16 %v4759
    %v5109 = vunpack.c.h.b16 %v4759
    %v5110 = vunpack.c.l.b16 %v4760
    %v5111 = vunpack.c.h.b16 %v4760
    %v5112 = vunpack.c.l.b16 %v4761
    %v5113 = vunpack.c.l.b16 %v4762
    %v5114 = vunpack.c.h.b16 %v4762
    %v5115 = vunpack.c.l.b16 %v4763
    %v5116 = vunpack.c.h.b16 %v4763
    %v5117 = vunpack.c.l.b16 %v4764
    %v5118 = vunpack.c.h.b16 %v4764
    %v5119 = vunpack.c.l.b16 %v4765
    %v5120 = vunpack.c.l.b16 %v4766
    %v5121 = vunpack.c.h.b16 %v4766
    %v5122 = vunpack.c.l.b16 %v4767
    %v5123 = vunpack.c.h.b16 %v4767
    %v5124 = vunpack.c.l.b16 %v4768
    %v5125 = vunpack.c.h.b16 %v4768
    %v5126 = vunpack.c.l.b16 %v4769
    %v5127 = vunpack.c.l.b16 %v4770
    %v5128 = vunpack.c.h.b16 %v4770
    %v5129 = vunpack.c.l.b16 %v4771
    %v5130 = vunpack.c.h.b16 %v4771
    %v5131 = vunpack.c.l.b16 %v4772
    %v5132 = vunpack.c.h.b16 %v4772
    %v5133 = vunpack.c.l.b16 %v4773
    %v5134 = vunpack.c.l.b16 %v4774
    %v5135 = vunpack.c.h.b16 %v4774
    %v5136 = vunpack.c.l.b16 %v4775
    %v5137 = vunpack.c.h.b16 %v4775
    %v5138 = vunpack.c.l.b16 %v4776
    %v5139 = vunpack.c.h.b16 %v4776
    %v5140 = vunpack.c.l.b16 %v4777
    %v5141 = vunpack.c.l.b16 %v4778
    %v5142 = vunpack.c.h.b16 %v4778
    %v5143 = vunpack.c.l.b16 %v4779
    %v5144 = vunpack.c.h.b16 %v4779
    %v5145 = vunpack.c.l.b16 %v4780
    %v5146 = vunpack.c.h.b16 %v4780
    %v5147 = vunpack.c.l.b16 %v4781
    %v5148 = vpack.c.b16 %v4931, %v4924
    %v5149 = vpack.c.b16 %v4932, %v4925
    %v5150 = vpack.c.b16 %v4933, %v4926
    %v5151 = vpack.c.b16 %v4934, %v4927
    %v5152 = vpack.c.b16 %v4935, %v4928
    %v5153 = vpack.c.b16 %v4936, %v4929
    %v5154 = vpack.c.b16 %v4937, %v4930
    %v5155 = vpack.c.b16 %v4945, %v4938
    %v5156 = vpack.c.b16 %v4946, %v4939
    %v5157 = vpack.c.b16 %v4947, %v4940
    %v5158 = vpack.c.b16 %v4948, %v4941
    %v5159 = vpack.c.b16 %v4949, %v4942
    %v5160 = vpack.c.b16 %v4950, %v4943
    %v5161 = vpack.c.b16 %v4951, %v4944
    %v5162 = vpack.c.b16 %v4959, %v4952
    %v5163 = vpack.c.b16 %v4960, %v4953
    %v5164 = vpack.c.b16 %v4961, %v4954
    %v5165 = vpack.c.b16 %v4962, %v4955
    %v5166 = vpack.c.b16 %v4963, %v4956
    %v5167 = vpack.c.b16 %v4964, %v4957
    %v5168 = vpack.c.b16 %v4965, %v4958
    %v5169 = vpack.c.b16 %v4973, %v4966
    %v5170 = vpack.c.b16 %v4974, %v4967
    %v5171 = vpack.c.b16 %v4975, %v4968
    %v5172 = vpack.c.b16 %v4976, %v4969
    %v5173 = vpack.c.b16 %v4977, %v4970
    %v5174 = vpack.c.b16 %v4978, %v4971
    %v5175 = vpack.c.b16 %v4979, %v4972
    %v5176 = vpack.c.b16 %v4987, %v4980
    %v5177 = vpack.c.b16 %v4988, %v4981
    %v5178 = vpack.c.b16 %v4989, %v4982
    %v5179 = vpack.c.b16 %v4990, %v4983
    %v5180 = vpack.c.b16 %v4991, %v4984
    %v5181 = vpack.c.b16 %v4992, %v4985
    %v5182 = vpack.c.b16 %v4993, %v4986
    %v5183 = vpack.c.b16 %v5001, %v4994
    %v5184 = vpack.c.b16 %v5002, %v4995
    %v5185 = vpack.c.b16 %v5003, %v4996
    %v5186 = vpack.c.b16 %v5004, %v4997
    %v5187 = vpack.c.b16 %v5005, %v4998
    %v5188 = vpack.c.b16 %v5006, %v4999
    %v5189 = vpack.c.b16 %v5007, %v5000
    %v5190 = vpack.c.b16 %v5015, %v5008
    %v5191 = vpack.c.b16 %v5016, %v5009
    %v5192 = vpack.c.b16 %v5017, %v5010
    %v5193 = vpack.c.b16 %v5018, %v5011
    %v5194 = vpack.c.b16 %v5019, %v5012
    %v5195 = vpack.c.b16 %v5020, %v5013
    %v5196 = vpack.c.b16 %v5021, %v5014
    %v5197 = vpack.c.b16 %v5029, %v5022
    %v5198 = vpack.c.b16 %v5030, %v5023
    %v5199 = vpack.c.b16 %v5031, %v5024
    %v5200 = vpack.c.b16 %v5032, %v5025
    %v5201 = vpack.c.b16 %v5033, %v5026
    %v5202 = vpack.c.b16 %v5034, %v5027
    %v5203 = vpack.c.b16 %v5035, %v5028
    %v5204 = vpack.c.b16 %v5043, %v5036
    %v5205 = vpack.c.b16 %v5044, %v5037
    %v5206 = vpack.c.b16 %v5045, %v5038
    %v5207 = vpack.c.b16 %v5046, %v5039
    %v5208 = vpack.c.b16 %v5047, %v5040
    %v5209 = vpack.c.b16 %v5048, %v5041
    %v5210 = vpack.c.b16 %v5049, %v5042
    %v5211 = vpack.c.b16 %v5057, %v5050
    %v5212 = vpack.c.b16 %v5058, %v5051
    %v5213 = vpack.c.b16 %v5059, %v5052
    %v5214 = vpack.c.b16 %v5060, %v5053
    %v5215 = vpack.c.b16 %v5061, %v5054
    %v5216 = vpack.c.b16 %v5062, %v5055
    %v5217 = vpack.c.b16 %v5063, %v5056
    %v5218 = vpack.c.b16 %v5071, %v5064
    %v5219 = vpack.c.b16 %v5072, %v5065
    %v5220 = vpack.c.b16 %v5073, %v5066
    %v5221 = vpack.c.b16 %v5074, %v5067
    %v5222 = vpack.c.b16 %v5075, %v5068
    %v5223 = vpack.c.b16 %v5076, %v5069
    %v5224 = vpack.c.b16 %v5077, %v5070
    %v5225 = vpack.c.b16 %v5085, %v5078
    %v5226 = vpack.c.b16 %v5086, %v5079
    %v5227 = vpack.c.b16 %v5087, %v5080
    %v5228 = vpack.c.b16 %v5088, %v5081
    %v5229 = vpack.c.b16 %v5089, %v5082
    %v5230 = vpack.c.b16 %v5090, %v5083
    %v5231 = vpack.c.b16 %v5091, %v5084
    %v5232 = vpack.c.b16 %v5099, %v5092
    %v5233 = vpack.c.b16 %v5100, %v5093
    %v5234 = vpack.c.b16 %v5101, %v5094
    %v5235 = vpack.c.b16 %v5102, %v5095
    %v5236 = vpack.c.b16 %v5103, %v5096
    %v5237 = vpack.c.b16 %v5104, %v5097
    %v5238 = vpack.c.b16 %v5105, %v5098
    %v5239 = vpack.c.b16 %v5113, %v5106
    %v5240 = vpack.c.b16 %v5114, %v5107
    %v5241 = vpack.c.b16 %v5115, %v5108
    %v5242 = vpack.c.b16 %v5116, %v5109
    %v5243 = vpack.c.b16 %v5117, %v5110
    %v5244 = vpack.c.b16 %v5118, %v5111
    %v5245 = vpack.c.b16 %v5119, %v5112
    %v5246 = vpack.c.b16 %v5127, %v5120
    %v5247 = vpack.c.b16 %v5128, %v5121
    %v5248 = vpack.c.b16 %v5129, %v5122
    %v5249 = vpack.c.b16 %v5130, %v5123
    %v5250 = vpack.c.b16 %v5131, %v5124
    %v5251 = vpack.c.b16 %v5132, %v5125
    %v5252 = vpack.c.b16 %v5133, %v5126
    %v5253 = vpack.c.b16 %v5141, %v5134
    %v5254 = vpack.c.b16 %v5142, %v5135
    %v5255 = vpack.c.b16 %v5143, %v5136
    %v5256 = vpack.c.b16 %v5144, %v5137
    %v5257 = vpack.c.b16 %v5145, %v5138
    %v5258 = vpack.c.b16 %v5146, %v5139
    %v5259 = vpack.c.b16 %v5147, %v5140
    %5372 = vmatprep.subr.bf16.mxu0 %v5198
    %5373 = vmatpush1.bf16.msra.mxu0 %v5197
    %5374 = vmatprep.subr.bf16.mxu0 %v5191
    %5375 = vmatpush1.bf16.msra.mxu0 %v5190
    %5376 = vmatprep.subr.bf16.mxu0 %v5184
    %5377 = vmatpush1.bf16.msra.mxu0 %v5183
    %5378 = vmatprep.subr.bf16.mxu0 %v5177
    %5379 = vmatpush1.bf16.msra.mxu0 %v5176
    %5380 = vmatprep.subr.bf16.mxu0 %v5170
    %5381 = vmatpush1.bf16.msra.mxu0 %v5169
    %5382 = vmatprep.subr.bf16.mxu0 %v5163
    %5383 = vmatpush1.bf16.msra.mxu0 %v5162
    %5384 = vmatprep.subr.bf16.mxu0 %v5156
    %5385 = vmatpush1.bf16.msra.mxu0 %v5155
    %5386 = vmatprep.subr.bf16.mxu0 %v5149
    %5387 = vmatpush1.bf16.msra.mxu0 %v5148
    %5388 = vmatprep.subr.bf16.mxu0 %v5254
    %5389 = vmatpush2.bf16.msra.mxu0 %v5253
    %5390 = vmatprep.subr.bf16.mxu0 %v5247
    %5391 = vmatpush2.bf16.msra.mxu0 %v5246
    %5392 = vmatprep.subr.bf16.mxu0 %v5240
    %5393 = vmatpush2.bf16.msra.mxu0 %v5239
    %5394 = vmatprep.subr.bf16.mxu0 %v5233
    %5395 = vmatpush2.bf16.msra.mxu0 %v5232
    %5396 = vmatprep.subr.bf16.mxu0 %v5226
    %5397 = vmatpush2.bf16.msra.mxu0 %v5225
    %5398 = vmatprep.subr.bf16.mxu0 %v5219
    %5399 = vmatpush2.bf16.msra.mxu0 %v5218
    %5400 = vmatprep.subr.bf16.mxu0 %v5212
    %5401 = vmatpush2.bf16.msra.mxu0 %v5211
    %5402 = vmatprep.subr.bf16.mxu0 %v5205
    %5403 = vmatpush2.bf16.msra.mxu0 %v5204
    %5404 = vmatprep.mubr.bf16.mxu0 %v4653
    %5405 = vmatmul.mubr.bf16.gmra.mxu0 %v4652
    %v5406 = vpop.f32.mrf.mxu0
    %v5407 = vadd.f32 %v4782, %v5406
    %v5408 = vpop.f32.mrf.mxu0
    %v5409 = vadd.f32 %v4783, %v5408
    %v5410 = vpop.f32.mrf.mxu0
    %v5411 = vadd.f32 %v4789, %v5410
    %v5412 = vpop.f32.mrf.mxu0
    %v5413 = vadd.f32 %v4790, %v5412
    %5414 = vdwg.mxu0
    %5415 = vmatprep.subr.bf16.mxu0 %v5200
    %5416 = vmatpush1.bf16.msra.mxu0 %v5199
    %5417 = vmatprep.subr.bf16.mxu0 %v5193
    %5418 = vmatpush1.bf16.msra.mxu0 %v5192
    %5419 = vmatprep.subr.bf16.mxu0 %v5186
    %5420 = vmatpush1.bf16.msra.mxu0 %v5185
    %5421 = vmatprep.subr.bf16.mxu0 %v5179
    %5422 = vmatpush1.bf16.msra.mxu0 %v5178
    %5423 = vmatprep.subr.bf16.mxu0 %v5172
    %5424 = vmatpush1.bf16.msra.mxu0 %v5171
    %5425 = vmatprep.subr.bf16.mxu0 %v5165
    %5426 = vmatpush1.bf16.msra.mxu0 %v5164
    %5427 = vmatprep.subr.bf16.mxu0 %v5158
    %5428 = vmatpush1.bf16.msra.mxu0 %v5157
    %5429 = vmatprep.subr.bf16.mxu0 %v5151
    %5430 = vmatpush1.bf16.msra.mxu0 %v5150
    %5431 = vmatprep.subr.bf16.mxu0 %v5256
    %5432 = vmatpush2.bf16.msra.mxu0 %v5255
    %5433 = vmatprep.subr.bf16.mxu0 %v5249
    %5434 = vmatpush2.bf16.msra.mxu0 %v5248
    %5435 = vmatprep.subr.bf16.mxu0 %v5242
    %5436 = vmatpush2.bf16.msra.mxu0 %v5241
    %5437 = vmatprep.subr.bf16.mxu0 %v5235
    %5438 = vmatpush2.bf16.msra.mxu0 %v5234
    %5439 = vmatprep.subr.bf16.mxu0 %v5228
    %5440 = vmatpush2.bf16.msra.mxu0 %v5227
    %5441 = vmatprep.subr.bf16.mxu0 %v5221
    %5442 = vmatpush2.bf16.msra.mxu0 %v5220
    %5443 = vmatprep.subr.bf16.mxu0 %v5214
    %5444 = vmatpush2.bf16.msra.mxu0 %v5213
    %5445 = vmatprep.subr.bf16.mxu0 %v5207
    %5446 = vmatpush2.bf16.msra.mxu0 %v5206
    %5447 = vmatprep.mubr.bf16.mxu0 %v4653
    %5448 = vmatmul.mubr.bf16.gmra.mxu0 %v4652
    %v5449 = vpop.f32.mrf.mxu0
    %v5450 = vadd.f32 %v4784, %v5449
    %v5451 = vpop.f32.mrf.mxu0
    %v5452 = vadd.f32 %v4785, %v5451
    %v5453 = vpop.f32.mrf.mxu0
    %v5454 = vadd.f32 %v4791, %v5453
    %v5455 = vpop.f32.mrf.mxu0
    %v5456 = vadd.f32 %v4792, %v5455
    %5457 = vdwg.mxu0
    %5458 = vmatprep.subr.bf16.mxu0 %v5202
    %5459 = vmatpush1.bf16.msra.mxu0 %v5201
    %5460 = vmatprep.subr.bf16.mxu0 %v5195
    %5461 = vmatpush1.bf16.msra.mxu0 %v5194
    %5462 = vmatprep.subr.bf16.mxu0 %v5188
    %5463 = vmatpush1.bf16.msra.mxu0 %v5187
    %5464 = vmatprep.subr.bf16.mxu0 %v5181
    %5465 = vmatpush1.bf16.msra.mxu0 %v5180
    %5466 = vmatprep.subr.bf16.mxu0 %v5174
    %5467 = vmatpush1.bf16.msra.mxu0 %v5173
    %5468 = vmatprep.subr.bf16.mxu0 %v5167
    %5469 = vmatpush1.bf16.msra.mxu0 %v5166
    %5470 = vmatprep.subr.bf16.mxu0 %v5160
    %5471 = vmatpush1.bf16.msra.mxu0 %v5159
    %5472 = vmatprep.subr.bf16.mxu0 %v5153
    %5473 = vmatpush1.bf16.msra.mxu0 %v5152
    %5474 = vmatprep.subr.bf16.mxu0 %v5258
    %5475 = vmatpush2.bf16.msra.mxu0 %v5257
    %5476 = vmatprep.subr.bf16.mxu0 %v5251
    %5477 = vmatpush2.bf16.msra.mxu0 %v5250
    %5478 = vmatprep.subr.bf16.mxu0 %v5244
    %5479 = vmatpush2.bf16.msra.mxu0 %v5243
    %5480 = vmatprep.subr.bf16.mxu0 %v5237
    %5481 = vmatpush2.bf16.msra.mxu0 %v5236
    %5482 = vmatprep.subr.bf16.mxu0 %v5230
    %5483 = vmatpush2.bf16.msra.mxu0 %v5229
    %5484 = vmatprep.subr.bf16.mxu0 %v5223
    %5485 = vmatpush2.bf16.msra.mxu0 %v5222
    %5486 = vmatprep.subr.bf16.mxu0 %v5216
    %5487 = vmatpush2.bf16.msra.mxu0 %v5215
    %5488 = vmatprep.subr.bf16.mxu0 %v5209
    %5489 = vmatpush2.bf16.msra.mxu0 %v5208
    %5490 = vmatprep.mubr.bf16.mxu0 %v4653
    %5491 = vmatmul.mubr.bf16.gmra.mxu0 %v4652
    %v5492 = vpop.f32.mrf.mxu0
    %v5493 = vadd.f32 %v4786, %v5492
    %v5494 = vpop.f32.mrf.mxu0
    %v5495 = vadd.f32 %v4787, %v5494
    %v5496 = vpop.f32.mrf.mxu0
    %v5497 = vadd.f32 %v4793, %v5496
    %v5498 = vpop.f32.mrf.mxu0
    %v5499 = vadd.f32 %v4794, %v5498
    %5500 = vdwg.mxu0
    %5501 = vmatprep.subr.bf16.mxu0 0
    %5502 = vmatpush1.bf16.msra.mxu0 %v5203
    %5503 = vmatprep.subr.bf16.mxu0 0
    %5504 = vmatpush1.bf16.msra.mxu0 %v5196
    %5505 = vmatprep.subr.bf16.mxu0 0
    %5506 = vmatpush1.bf16.msra.mxu0 %v5189
    %5507 = vmatprep.subr.bf16.mxu0 0
    %5508 = vmatpush1.bf16.msra.mxu0 %v5182
    %5509 = vmatprep.subr.bf16.mxu0 0
    %5510 = vmatpush1.bf16.msra.mxu0 %v5175
    %5511 = vmatprep.subr.bf16.mxu0 0
    %5512 = vmatpush1.bf16.msra.mxu0 %v5168
    %5513 = vmatprep.subr.bf16.mxu0 0
    %5514 = vmatpush1.bf16.msra.mxu0 %v5161
    %5515 = vmatprep.subr.bf16.mxu0 0
    %5516 = vmatpush1.bf16.msra.mxu0 %v5154
    %5517 = vmatprep.subr.bf16.mxu0 0
    %5518 = vmatpush2.bf16.msra.mxu0 %v5259
    %5519 = vmatprep.subr.bf16.mxu0 0
    %5520 = vmatpush2.bf16.msra.mxu0 %v5252
    %5521 = vmatprep.subr.bf16.mxu0 0
    %5522 = vmatpush2.bf16.msra.mxu0 %v5245
    %5523 = vmatprep.subr.bf16.mxu0 0
    %5524 = vmatpush2.bf16.msra.mxu0 %v5238
    %5525 = vmatprep.subr.bf16.mxu0 0
    %5526 = vmatpush2.bf16.msra.mxu0 %v5231
    %5527 = vmatprep.subr.bf16.mxu0 0
    %5528 = vmatpush2.bf16.msra.mxu0 %v5224
    %5529 = vmatprep.subr.bf16.mxu0 0
    %5530 = vmatpush2.bf16.msra.mxu0 %v5217
    %5531 = vmatprep.subr.bf16.mxu0 0
    %5532 = vmatpush2.bf16.msra.mxu0 %v5210
    %5533 = vmatprep.mubr.bf16.mxu0 %v4653
    %5534 = vmatmul.mubr.bf16.gmra.mxu0 %v4652
    %v5535 = vpop.f32.mrf.mxu0
    %v5536 = vadd.f32 %v4788, %v5535
    %v5537 = vpop.f32.mrf.mxu0
    %v5538 = vpop.f32.mrf.mxu0
    %v5539 = vadd.f32 %v4795, %v5538
    %v5540 = vpop.f32.mrf.mxu0
    %5541 = vdwg.mxu0
    %v5542 = vxor.u32 %v5452, 2147483648
    %v5543 = vxor.u32 %v5493, 2147483648
    %v5544 = vxor.u32 %v5456, 2147483648
    %v5545 = vxor.u32 %v5497, 2147483648
    %v5546 = vmul.f32 %v5542, 1.442695
    %v5547 = vpow.pop %v5546
    %v5548 = vmul.f32 %v5543, 1.442695
    %v5549 = vpow.pop %v5548
    %v5550 = vmul.f32 %v5544, 1.442695
    %v5551 = vpow.pop %v5550
    %v5552 = vmul.f32 %v5545, 1.442695
    %v5553 = vpow.pop %v5552
    %v5554 = vadd.f32 %v5547, 1.0
    %v5555 = vadd.f32 %v5549, 1.0
    %v5556 = vadd.f32 %v5551, 1.0
    %v5557 = vadd.f32 %v5553, 1.0
    %v5558 = vrcp.pop %v5554
    %v5559 = vmul.f32 1.0, %v5558
    %v5560 = vrcp.pop %v5555
    %v5561 = vmul.f32 1.0, %v5560
    %v5562 = vrcp.pop %v5556
    %v5563 = vmul.f32 1.0, %v5562
    %v5564 = vrcp.pop %v5557
    %v5565 = vmul.f32 1.0, %v5564
    %v5566 = vmul.f32 %v5559, %v5536
    %v5567 = vmul.f32 %v5563, %v5539
    %v5568 = vadd.f32 %v5495, %v5566
    %v5569 = vadd.f32 %v5499, %v5567
    %v5570 = vtanh.pop %v5568
    %v5571 = vtanh.pop %v5569
    %v5572 = vsub.f32 1.0, %v5561
    %v5573 = vsub.f32 1.0, %v5565
    %v5574 = vmul.f32 %v5572, %v5570
    %v5575 = vmul.f32 %v5573, %v5571
    %v5576 = vmul.f32 %v5561, %v4596
    %v5577 = vmul.f32 %v5565, %v4597
    %v5578 = vadd.f32 %v5574, %v5576
    %v5579 = vadd.f32 %v5575, %v5577
    %s5580 = scalar_lea.vmem [#allocation3], 64
    %5581 = vst [vmem:[%s5580] sm:$0xff] %v5578
    %5582 = vst [vmem:[%s5580 + $0x8] sm:$0xff] %v5579
    %s5583 = smul.u32 10, 3
    %s5584 = smul.addr %s5583, 8
    %s5585 = scalar_lea.vmem [#allocation2], %s5584
    %v5586 = vld [vmem:[%s5585] sm:$0xff]
    %v5587 = vld [vmem:[%s5585 + $0x8] sm:$0xff]
    %v5588 = vld [vmem:[%s5585 + $0x10] sm:$0xff]
    %v5589 = vld [vmem:[%s5585 + $0x18] sm:$0xff]
    %v5590 = vld [vmem:[%s5585 + $0x20] sm:$0xff]
    %v5591 = vld [vmem:[%s5585 + $0x28] sm:$0xff]
    %v5592 = vadd.f32 %v5586, %v5407
    %v5593 = vadd.f32 %v5587, %v5409
    %v5594 = vadd.f32 %v5589, %v5411
    %v5595 = vadd.f32 %v5590, %v5413
    %v5596 = vxor.u32 %v5592, 2147483648
    %v5597 = vxor.u32 %v5593, 2147483648
    %v5598 = vxor.u32 %v5594, 2147483648
    %v5599 = vxor.u32 %v5595, 2147483648
    %v5600 = vmul.f32 %v5596, 1.442695
    %v5601 = vpow.pop %v5600
    %v5602 = vmul.f32 %v5597, 1.442695
    %v5603 = vpow.pop %v5602
    %v5604 = vmul.f32 %v5598, 1.442695
    %v5605 = vpow.pop %v5604
    %v5606 = vmul.f32 %v5599, 1.442695
    %v5607 = vpow.pop %v5606
    %v5608 = vadd.f32 %v5601, 1.0
    %v5609 = vadd.f32 %v5603, 1.0
    %v5610 = vadd.f32 %v5605, 1.0
    %v5611 = vadd.f32 %v5607, 1.0
    %v5612 = vrcp.pop %v5608
    %v5613 = vmul.f32 1.0, %v5612
    %v5614 = vrcp.pop %v5609
    %v5615 = vmul.f32 1.0, %v5614
    %v5616 = vrcp.pop %v5610
    %v5617 = vmul.f32 1.0, %v5616
    %v5618 = vrcp.pop %v5611
    %v5619 = vmul.f32 1.0, %v5618
    %v5620 = vmul.f32 %v5613, %v5450
    %v5621 = vmul.f32 %v5617, %v5454
    %v5622 = vadd.f32 %v5588, %v5620
    %v5623 = vadd.f32 %v5591, %v5621
    %v5624 = vtanh.pop %v5622
    %v5625 = vtanh.pop %v5623
    %v5626 = vsub.f32 1.0, %v5615
    %v5627 = vsub.f32 1.0, %v5619
    %v5628 = vmul.f32 %v5626, %v5624
    %v5629 = vmul.f32 %v5627, %v5625
    %v5630 = vmul.f32 %v5615, %v4650
    %v5631 = vmul.f32 %v5619, %v4651
    %v5632 = vadd.f32 %v5628, %v5630
    %v5633 = vadd.f32 %v5629, %v5631
    %v5634 = vpack.c.bf16 %v5633, %v5632
    %v5635 = vpack.c.bf16 %v5579, %v5578
    %v5636 = vld [vmem:[#allocation13 + $0x8] sm:$0xff]
    %v5637 = vld [vmem:[#allocation13 + $0x10] sm:$0xff]
    %v5638 = vld [vmem:[#allocation13 + $0x18] sm:$0xf]
    %v5639 = vld [vmem:[#allocation13 + $0x24] sm:$0xff]
    %v5640 = vld [vmem:[#allocation13 + $0x2c] sm:$0xff]
    %v5641 = vld [vmem:[#allocation13 + $0x34] sm:$0xf]
    %v5642 = vld [vmem:[#allocation13 + $0x40] sm:$0xff]
    %v5643 = vld [vmem:[#allocation13 + $0x48] sm:$0xff]
    %v5644 = vld [vmem:[#allocation13 + $0x50] sm:$0xf]
    %v5645 = vld [vmem:[#allocation13 + $0x5c] sm:$0xff]
    %v5646 = vld [vmem:[#allocation13 + $0x64] sm:$0xff]
    %v5647 = vld [vmem:[#allocation13 + $0x6c] sm:$0xf]
    %v5648 = vld [vmem:[#allocation13 + $0x78] sm:$0xff]
    %v5649 = vld [vmem:[#allocation13 + $0x80] sm:$0xff]
    %v5650 = vld [vmem:[#allocation13 + $0x88] sm:$0xf]
    %v5651 = vld [vmem:[#allocation13 + $0x94] sm:$0xff]
    %v5652 = vld [vmem:[#allocation13 + $0x9c] sm:$0xff]
    %v5653 = vld [vmem:[#allocation13 + $0xa4] sm:$0xf]
    %v5654 = vld [vmem:[#allocation13 + $0xb0] sm:$0xff]
    %v5655 = vld [vmem:[#allocation13 + $0xb8] sm:$0xff]
    %v5656 = vld [vmem:[#allocation13 + $0xc0] sm:$0xf]
    %v5657 = vld [vmem:[#allocation13 + $0xcc] sm:$0xff]
    %v5658 = vld [vmem:[#allocation13 + $0xd4] sm:$0xff]
    %v5659 = vld [vmem:[#allocation13 + $0xdc] sm:$0xf]
    %v5660 = vld [vmem:[#allocation13 + $0xe8] sm:$0xff]
    %v5661 = vld [vmem:[#allocation13 + $0xf0] sm:$0xff]
    %v5662 = vld [vmem:[#allocation13 + $0xf8] sm:$0xf]
    %v5663 = vld [vmem:[#allocation13 + $0x104] sm:$0xff]
    %v5664 = vld [vmem:[#allocation13 + $0x10c] sm:$0xff]
    %v5665 = vld [vmem:[#allocation13 + $0x114] sm:$0xf]
    %v5666 = vld [vmem:[#allocation13 + $0x120] sm:$0xff]
    %v5667 = vld [vmem:[#allocation13 + $0x128] sm:$0xff]
    %v5668 = vld [vmem:[#allocation13 + $0x130] sm:$0xf]
    %v5669 = vld [vmem:[#allocation13 + $0x13c] sm:$0xff]
    %v5670 = vld [vmem:[#allocation13 + $0x144] sm:$0xff]
    %v5671 = vld [vmem:[#allocation13 + $0x14c] sm:$0xf]
    %v5672 = vld [vmem:[#allocation13 + $0x158] sm:$0xff]
    %v5673 = vld [vmem:[#allocation13 + $0x160] sm:$0xff]
    %v5674 = vld [vmem:[#allocation13 + $0x168] sm:$0xf]
    %v5675 = vld [vmem:[#allocation13 + $0x174] sm:$0xff]
    %v5676 = vld [vmem:[#allocation13 + $0x17c] sm:$0xff]
    %v5677 = vld [vmem:[#allocation13 + $0x184] sm:$0xf]
    %v5678 = vld [vmem:[#allocation13 + $0x190] sm:$0xff]
    %v5679 = vld [vmem:[#allocation13 + $0x198] sm:$0xff]
    %v5680 = vld [vmem:[#allocation13 + $0x1a0] sm:$0xf]
    %v5681 = vld [vmem:[#allocation13 + $0x1ac] sm:$0xff]
    %v5682 = vld [vmem:[#allocation13 + $0x1b4] sm:$0xff]
    %v5683 = vld [vmem:[#allocation13 + $0x1bc] sm:$0xf]
    %v5684 = vld [vmem:[#allocation13 + $0x1c8] sm:$0xff]
    %v5685 = vld [vmem:[#allocation13 + $0x1d0] sm:$0xff]
    %v5686 = vld [vmem:[#allocation13 + $0x1d8] sm:$0xf]
    %v5687 = vld [vmem:[#allocation13 + $0x1e4] sm:$0xff]
    %v5688 = vld [vmem:[#allocation13 + $0x1ec] sm:$0xff]
    %v5689 = vld [vmem:[#allocation13 + $0x1f4] sm:$0xf]
    %v5690 = vld [vmem:[#allocation13 + $0x200] sm:$0xff]
    %v5691 = vld [vmem:[#allocation13 + $0x208] sm:$0xff]
    %v5692 = vld [vmem:[#allocation13 + $0x210] sm:$0xf]
    %v5693 = vld [vmem:[#allocation13 + $0x21c] sm:$0xff]
    %v5694 = vld [vmem:[#allocation13 + $0x224] sm:$0xff]
    %v5695 = vld [vmem:[#allocation13 + $0x22c] sm:$0xf]
    %v5696 = vld [vmem:[#allocation13 + $0x238] sm:$0xff]
    %v5697 = vld [vmem:[#allocation13 + $0x240] sm:$0xff]
    %v5698 = vld [vmem:[#allocation13 + $0x248] sm:$0xf]
    %v5699 = vld [vmem:[#allocation13 + $0x254] sm:$0xff]
    %v5700 = vld [vmem:[#allocation13 + $0x25c] sm:$0xff]
    %v5701 = vld [vmem:[#allocation13 + $0x264] sm:$0xf]
    %v5702 = vld [vmem:[#allocation13 + $0x270] sm:$0xff]
    %v5703 = vld [vmem:[#allocation13 + $0x278] sm:$0xff]
    %v5704 = vld [vmem:[#allocation13 + $0x280] sm:$0xf]
    %v5705 = vld [vmem:[#allocation13 + $0x28c] sm:$0xff]
    %v5706 = vld [vmem:[#allocation13 + $0x294] sm:$0xff]
    %v5707 = vld [vmem:[#allocation13 + $0x29c] sm:$0xf]
    %v5708 = vld [vmem:[#allocation13 + $0x2a8] sm:$0xff]
    %v5709 = vld [vmem:[#allocation13 + $0x2b0] sm:$0xff]
    %v5710 = vld [vmem:[#allocation13 + $0x2b8] sm:$0xf]
    %v5711 = vld [vmem:[#allocation13 + $0x2c4] sm:$0xff]
    %v5712 = vld [vmem:[#allocation13 + $0x2cc] sm:$0xff]
    %v5713 = vld [vmem:[#allocation13 + $0x2d4] sm:$0xf]
    %v5714 = vld [vmem:[#allocation13 + $0x2e0] sm:$0xff]
    %v5715 = vld [vmem:[#allocation13 + $0x2e8] sm:$0xff]
    %v5716 = vld [vmem:[#allocation13 + $0x2f0] sm:$0xf]
    %v5717 = vld [vmem:[#allocation13 + $0x2fc] sm:$0xff]
    %v5718 = vld [vmem:[#allocation13 + $0x304] sm:$0xff]
    %v5719 = vld [vmem:[#allocation13 + $0x30c] sm:$0xf]
    %v5720 = vld [vmem:[#allocation13 + $0x318] sm:$0xff]
    %v5721 = vld [vmem:[#allocation13 + $0x320] sm:$0xff]
    %v5722 = vld [vmem:[#allocation13 + $0x328] sm:$0xf]
    %v5723 = vld [vmem:[#allocation13 + $0x334] sm:$0xff]
    %v5724 = vld [vmem:[#allocation13 + $0x33c] sm:$0xff]
    %v5725 = vld [vmem:[#allocation13 + $0x344] sm:$0xf]
    %v5726 = vld [vmem:[#allocation13 + $0x350] sm:$0xff]
    %v5727 = vld [vmem:[#allocation13 + $0x358] sm:$0xff]
    %v5728 = vld [vmem:[#allocation13 + $0x360] sm:$0xf]
    %v5729 = vld [vmem:[#allocation13 + $0x36c] sm:$0xff]
    %v5730 = vld [vmem:[#allocation13 + $0x374] sm:$0xff]
    %v5731 = vld [vmem:[#allocation13 + $0x37c] sm:$0xf]
    %v5732 = vld [vmem:[#allocation4 + $0x18] sm:$0xff]
    %v5733 = vld [vmem:[#allocation4 + $0x20] sm:$0xff]
    %v5734 = vld [vmem:[#allocation4 + $0x28] sm:$0xff]
    %v5735 = vld [vmem:[#allocation4 + $0x30] sm:$0xff]
    %v5736 = vld [vmem:[#allocation4 + $0x50] sm:$0xff]
    %v5737 = vld [vmem:[#allocation4 + $0x58] sm:$0xff]
    %v5738 = vld [vmem:[#allocation4 + $0x60] sm:$0xff]
    %v5739 = vld [vmem:[#allocation4 + $0x68] sm:$0xff]
    %v5836 = vunpack.c.l.b16 %v5636
    %v5837 = vunpack.c.h.b16 %v5636
    %v5838 = vunpack.c.l.b16 %v5637
    %v5839 = vunpack.c.h.b16 %v5637
    %v5840 = vunpack.c.l.b16 %v5638
    %v5841 = vunpack.c.l.b16 %v5639
    %v5842 = vunpack.c.h.b16 %v5639
    %v5843 = vunpack.c.l.b16 %v5640
    %v5844 = vunpack.c.h.b16 %v5640
    %v5845 = vunpack.c.l.b16 %v5641
    %v5846 = vunpack.c.l.b16 %v5642
    %v5847 = vunpack.c.h.b16 %v5642
    %v5848 = vunpack.c.l.b16 %v5643
    %v5849 = vunpack.c.h.b16 %v5643
    %v5850 = vunpack.c.l.b16 %v5644
    %v5851 = vunpack.c.l.b16 %v5645
    %v5852 = vunpack.c.h.b16 %v5645
    %v5853 = vunpack.c.l.b16 %v5646
    %v5854 = vunpack.c.h.b16 %v5646
    %v5855 = vunpack.c.l.b16 %v5647
    %v5856 = vunpack.c.l.b16 %v5648
    %v5857 = vunpack.c.h.b16 %v5648
    %v5858 = vunpack.c.l.b16 %v5649
    %v5859 = vunpack.c.h.b16 %v5649
    %v5860 = vunpack.c.l.b16 %v5650
    %v5861 = vunpack.c.l.b16 %v5651
    %v5862 = vunpack.c.h.b16 %v5651
    %v5863 = vunpack.c.l.b16 %v5652
    %v5864 = vunpack.c.h.b16 %v5652
    %v5865 = vunpack.c.l.b16 %v5653
    %v5866 = vunpack.c.l.b16 %v5654
    %v5867 = vunpack.c.h.b16 %v5654
    %v5868 = vunpack.c.l.b16 %v5655
    %v5869 = vunpack.c.h.b16 %v5655
    %v5870 = vunpack.c.l.b16 %v5656
    %v5871 = vunpack.c.l.b16 %v5657
    %v5872 = vunpack.c.h.b16 %v5657
    %v5873 = vunpack.c.l.b16 %v5658
    %v5874 = vunpack.c.h.b16 %v5658
    %v5875 = vunpack.c.l.b16 %v5659
    %v5876 = vunpack.c.l.b16 %v5660
    %v5877 = vunpack.c.h.b16 %v5660
    %v5878 = vunpack.c.l.b16 %v5661
    %v5879 = vunpack.c.h.b16 %v5661
    %v5880 = vunpack.c.l.b16 %v5662
    %v5881 = vunpack.c.l.b16 %v5663
    %v5882 = vunpack.c.h.b16 %v5663
    %v5883 = vunpack.c.l.b16 %v5664
    %v5884 = vunpack.c.h.b16 %v5664
    %v5885 = vunpack.c.l.b16 %v5665
    %v5886 = vunpack.c.l.b16 %v5666
    %v5887 = vunpack.c.h.b16 %v5666
    %v5888 = vunpack.c.l.b16 %v5667
    %v5889 = vunpack.c.h.b16 %v5667
    %v5890 = vunpack.c.l.b16 %v5668
    %v5891 = vunpack.c.l.b16 %v5669
    %v5892 = vunpack.c.h.b16 %v5669
    %v5893 = vunpack.c.l.b16 %v5670
    %v5894 = vunpack.c.h.b16 %v5670
    %v5895 = vunpack.c.l.b16 %v5671
    %v5896 = vunpack.c.l.b16 %v5672
    %v5897 = vunpack.c.h.b16 %v5672
    %v5898 = vunpack.c.l.b16 %v5673
    %v5899 = vunpack.c.h.b16 %v5673
    %v5900 = vunpack.c.l.b16 %v5674
    %v5901 = vunpack.c.l.b16 %v5675
    %v5902 = vunpack.c.h.b16 %v5675
    %v5903 = vunpack.c.l.b16 %v5676
    %v5904 = vunpack.c.h.b16 %v5676
    %v5905 = vunpack.c.l.b16 %v5677
    %v5906 = vunpack.c.l.b16 %v5678
    %v5907 = vunpack.c.h.b16 %v5678
    %v5908 = vunpack.c.l.b16 %v5679
    %v5909 = vunpack.c.h.b16 %v5679
    %v5910 = vunpack.c.l.b16 %v5680
    %v5911 = vunpack.c.l.b16 %v5681
    %v5912 = vunpack.c.h.b16 %v5681
    %v5913 = vunpack.c.l.b16 %v5682
    %v5914 = vunpack.c.h.b16 %v5682
    %v5915 = vunpack.c.l.b16 %v5683
    %v5916 = vunpack.c.l.b16 %v5684
    %v5917 = vunpack.c.h.b16 %v5684
    %v5918 = vunpack.c.l.b16 %v5685
    %v5919 = vunpack.c.h.b16 %v5685
    %v5920 = vunpack.c.l.b16 %v5686
    %v5921 = vunpack.c.l.b16 %v5687
    %v5922 = vunpack.c.h.b16 %v5687
    %v5923 = vunpack.c.l.b16 %v5688
    %v5924 = vunpack.c.h.b16 %v5688
    %v5925 = vunpack.c.l.b16 %v5689
    %v5926 = vunpack.c.l.b16 %v5690
    %v5927 = vunpack.c.h.b16 %v5690
    %v5928 = vunpack.c.l.b16 %v5691
    %v5929 = vunpack.c.h.b16 %v5691
    %v5930 = vunpack.c.l.b16 %v5692
    %v5931 = vunpack.c.l.b16 %v5693
    %v5932 = vunpack.c.h.b16 %v5693
    %v5933 = vunpack.c.l.b16 %v5694
    %v5934 = vunpack.c.h.b16 %v5694
    %v5935 = vunpack.c.l.b16 %v5695
    %v5936 = vunpack.c.l.b16 %v5696
    %v5937 = vunpack.c.h.b16 %v5696
    %v5938 = vunpack.c.l.b16 %v5697
    %v5939 = vunpack.c.h.b16 %v5697
    %v5940 = vunpack.c.l.b16 %v5698
    %v5941 = vunpack.c.l.b16 %v5699
    %v5942 = vunpack.c.h.b16 %v5699
    %v5943 = vunpack.c.l.b16 %v5700
    %v5944 = vunpack.c.h.b16 %v5700
    %v5945 = vunpack.c.l.b16 %v5701
    %v5946 = vunpack.c.l.b16 %v5702
    %v5947 = vunpack.c.h.b16 %v5702
    %v5948 = vunpack.c.l.b16 %v5703
    %v5949 = vunpack.c.h.b16 %v5703
    %v5950 = vunpack.c.l.b16 %v5704
    %v5951 = vunpack.c.l.b16 %v5705
    %v5952 = vunpack.c.h.b16 %v5705
    %v5953 = vunpack.c.l.b16 %v5706
    %v5954 = vunpack.c.h.b16 %v5706
    %v5955 = vunpack.c.l.b16 %v5707
    %v5956 = vunpack.c.l.b16 %v5708
    %v5957 = vunpack.c.h.b16 %v5708
    %v5958 = vunpack.c.l.b16 %v5709
    %v5959 = vunpack.c.h.b16 %v5709
    %v5960 = vunpack.c.l.b16 %v5710
    %v5961 = vunpack.c.l.b16 %v5711
    %v5962 = vunpack.c.h.b16 %v5711
    %v5963 = vunpack.c.l.b16 %v5712
    %v5964 = vunpack.c.h.b16 %v5712
    %v5965 = vunpack.c.l.b16 %v5713
    %v5966 = vunpack.c.l.b16 %v5714
    %v5967 = vunpack.c.h.b16 %v5714
    %v5968 = vunpack.c.l.b16 %v5715
    %v5969 = vunpack.c.h.b16 %v5715
    %v5970 = vunpack.c.l.b16 %v5716
    %v5971 = vunpack.c.l.b16 %v5717
    %v5972 = vunpack.c.h.b16 %v5717
    %v5973 = vunpack.c.l.b16 %v5718
    %v5974 = vunpack.c.h.b16 %v5718
    %v5975 = vunpack.c.l.b16 %v5719
    %v5976 = vunpack.c.l.b16 %v5720
    %v5977 = vunpack.c.h.b16 %v5720
    %v5978 = vunpack.c.l.b16 %v5721
    %v5979 = vunpack.c.h.b16 %v5721
    %v5980 = vunpack.c.l.b16 %v5722
    %v5981 = vunpack.c.l.b16 %v5723
    %v5982 = vunpack.c.h.b16 %v5723
    %v5983 = vunpack.c.l.b16 %v5724
    %v5984 = vunpack.c.h.b16 %v5724
    %v5985 = vunpack.c.l.b16 %v5725
    %v5986 = vunpack.c.l.b16 %v5726
    %v5987 = vunpack.c.h.b16 %v5726
    %v5988 = vunpack.c.l.b16 %v5727
    %v5989 = vunpack.c.h.b16 %v5727
    %v5990 = vunpack.c.l.b16 %v5728
    %v5991 = vunpack.c.l.b16 %v5729
    %v5992 = vunpack.c.h.b16 %v5729
    %v5993 = vunpack.c.l.b16 %v5730
    %v5994 = vunpack.c.h.b16 %v5730
    %v5995 = vunpack.c.l.b16 %v5731
    %v5996 = vpack.c.b16 %v5841, %v5836
    %v5997 = vpack.c.b16 %v5842, %v5837
    %v5998 = vpack.c.b16 %v5843, %v5838
    %v5999 = vpack.c.b16 %v5844, %v5839
    %v6000 = vpack.c.b16 %v5845, %v5840
    %v6001 = vpack.c.b16 %v5851, %v5846
    %v6002 = vpack.c.b16 %v5852, %v5847
    %v6003 = vpack.c.b16 %v5853, %v5848
    %v6004 = vpack.c.b16 %v5854, %v5849
    %v6005 = vpack.c.b16 %v5855, %v5850
    %v6006 = vpack.c.b16 %v5861, %v5856
    %v6007 = vpack.c.b16 %v5862, %v5857
    %v6008 = vpack.c.b16 %v5863, %v5858
    %v6009 = vpack.c.b16 %v5864, %v5859
    %v6010 = vpack.c.b16 %v5865, %v5860
    %v6011 = vpack.c.b16 %v5871, %v5866
    %v6012 = vpack.c.b16 %v5872, %v5867
    %v6013 = vpack.c.b16 %v5873, %v5868
    %v6014 = vpack.c.b16 %v5874, %v5869
    %v6015 = vpack.c.b16 %v5875, %v5870
    %v6016 = vpack.c.b16 %v5881, %v5876
    %v6017 = vpack.c.b16 %v5882, %v5877
    %v6018 = vpack.c.b16 %v5883, %v5878
    %v6019 = vpack.c.b16 %v5884, %v5879
    %v6020 = vpack.c.b16 %v5885, %v5880
    %v6021 = vpack.c.b16 %v5891, %v5886
    %v6022 = vpack.c.b16 %v5892, %v5887
    %v6023 = vpack.c.b16 %v5893, %v5888
    %v6024 = vpack.c.b16 %v5894, %v5889
    %v6025 = vpack.c.b16 %v5895, %v5890
    %v6026 = vpack.c.b16 %v5901, %v5896
    %v6027 = vpack.c.b16 %v5902, %v5897
    %v6028 = vpack.c.b16 %v5903, %v5898
    %v6029 = vpack.c.b16 %v5904, %v5899
    %v6030 = vpack.c.b16 %v5905, %v5900
    %v6031 = vpack.c.b16 %v5911, %v5906
    %v6032 = vpack.c.b16 %v5912, %v5907
    %v6033 = vpack.c.b16 %v5913, %v5908
    %v6034 = vpack.c.b16 %v5914, %v5909
    %v6035 = vpack.c.b16 %v5915, %v5910
    %v6036 = vpack.c.b16 %v5921, %v5916
    %v6037 = vpack.c.b16 %v5922, %v5917
    %v6038 = vpack.c.b16 %v5923, %v5918
    %v6039 = vpack.c.b16 %v5924, %v5919
    %v6040 = vpack.c.b16 %v5925, %v5920
    %v6041 = vpack.c.b16 %v5931, %v5926
    %v6042 = vpack.c.b16 %v5932, %v5927
    %v6043 = vpack.c.b16 %v5933, %v5928
    %v6044 = vpack.c.b16 %v5934, %v5929
    %v6045 = vpack.c.b16 %v5935, %v5930
    %v6046 = vpack.c.b16 %v5941, %v5936
    %v6047 = vpack.c.b16 %v5942, %v5937
    %v6048 = vpack.c.b16 %v5943, %v5938
    %v6049 = vpack.c.b16 %v5944, %v5939
    %v6050 = vpack.c.b16 %v5945, %v5940
    %v6051 = vpack.c.b16 %v5951, %v5946
    %v6052 = vpack.c.b16 %v5952, %v5947
    %v6053 = vpack.c.b16 %v5953, %v5948
    %v6054 = vpack.c.b16 %v5954, %v5949
    %v6055 = vpack.c.b16 %v5955, %v5950
    %v6056 = vpack.c.b16 %v5961, %v5956
    %v6057 = vpack.c.b16 %v5962, %v5957
    %v6058 = vpack.c.b16 %v5963, %v5958
    %v6059 = vpack.c.b16 %v5964, %v5959
    %v6060 = vpack.c.b16 %v5965, %v5960
    %v6061 = vpack.c.b16 %v5971, %v5966
    %v6062 = vpack.c.b16 %v5972, %v5967
    %v6063 = vpack.c.b16 %v5973, %v5968
    %v6064 = vpack.c.b16 %v5974, %v5969
    %v6065 = vpack.c.b16 %v5975, %v5970
    %v6066 = vpack.c.b16 %v5981, %v5976
    %v6067 = vpack.c.b16 %v5982, %v5977
    %v6068 = vpack.c.b16 %v5983, %v5978
    %v6069 = vpack.c.b16 %v5984, %v5979
    %v6070 = vpack.c.b16 %v5985, %v5980
    %v6071 = vpack.c.b16 %v5991, %v5986
    %v6072 = vpack.c.b16 %v5992, %v5987
    %v6073 = vpack.c.b16 %v5993, %v5988
    %v6074 = vpack.c.b16 %v5994, %v5989
    %v6075 = vpack.c.b16 %v5995, %v5990
    %6156 = vmatprep.subr.bf16.mxu0 %v6032
    %6157 = vmatpush1.bf16.msra.mxu0 %v6031
    %6158 = vmatprep.subr.bf16.mxu0 %v6027
    %6159 = vmatpush1.bf16.msra.mxu0 %v6026
    %6160 = vmatprep.subr.bf16.mxu0 %v6022
    %6161 = vmatpush1.bf16.msra.mxu0 %v6021
    %6162 = vmatprep.subr.bf16.mxu0 %v6017
    %6163 = vmatpush1.bf16.msra.mxu0 %v6016
    %6164 = vmatprep.subr.bf16.mxu0 %v6012
    %6165 = vmatpush1.bf16.msra.mxu0 %v6011
    %6166 = vmatprep.subr.bf16.mxu0 %v6007
    %6167 = vmatpush1.bf16.msra.mxu0 %v6006
    %6168 = vmatprep.subr.bf16.mxu0 %v6002
    %6169 = vmatpush1.bf16.msra.mxu0 %v6001
    %6170 = vmatprep.subr.bf16.mxu0 %v5997
    %6171 = vmatpush1.bf16.msra.mxu0 %v5996
    %6172 = vmatprep.subr.bf16.mxu0 %v6072
    %6173 = vmatpush2.bf16.msra.mxu0 %v6071
    %6174 = vmatprep.subr.bf16.mxu0 %v6067
    %6175 = vmatpush2.bf16.msra.mxu0 %v6066
    %6176 = vmatprep.subr.bf16.mxu0 %v6062
    %6177 = vmatpush2.bf16.msra.mxu0 %v6061
    %6178 = vmatprep.subr.bf16.mxu0 %v6057
    %6179 = vmatpush2.bf16.msra.mxu0 %v6056
    %6180 = vmatprep.subr.bf16.mxu0 %v6052
    %6181 = vmatpush2.bf16.msra.mxu0 %v6051
    %6182 = vmatprep.subr.bf16.mxu0 %v6047
    %6183 = vmatpush2.bf16.msra.mxu0 %v6046
    %6184 = vmatprep.subr.bf16.mxu0 %v6042
    %6185 = vmatpush2.bf16.msra.mxu0 %v6041
    %6186 = vmatprep.subr.bf16.mxu0 %v6037
    %6187 = vmatpush2.bf16.msra.mxu0 %v6036
    %6188 = vmatprep.mubr.bf16.mxu0 %v5635
    %6189 = vmatmul.mubr.bf16.gmra.mxu0 %v5634
    %v6190 = vpop.f32.mrf.mxu0
    %v6191 = vpop.f32.mrf.mxu0
    %v6192 = vadd.f32 %v5732, %v6191
    %v6193 = vpop.f32.mrf.mxu0
    %v6194 = vpop.f32.mrf.mxu0
    %v6195 = vadd.f32 %v5736, %v6194
    %6196 = vdwg.mxu0
    %6197 = vmatprep.subr.bf16.mxu0 %v6034
    %6198 = vmatpush1.bf16.msra.mxu0 %v6033
    %6199 = vmatprep.subr.bf16.mxu0 %v6029
    %6200 = vmatpush1.bf16.msra.mxu0 %v6028
    %6201 = vmatprep.subr.bf16.mxu0 %v6024
    %6202 = vmatpush1.bf16.msra.mxu0 %v6023
    %6203 = vmatprep.subr.bf16.mxu0 %v6019
    %6204 = vmatpush1.bf16.msra.mxu0 %v6018
    %6205 = vmatprep.subr.bf16.mxu0 %v6014
    %6206 = vmatpush1.bf16.msra.mxu0 %v6013
    %6207 = vmatprep.subr.bf16.mxu0 %v6009
    %6208 = vmatpush1.bf16.msra.mxu0 %v6008
    %6209 = vmatprep.subr.bf16.mxu0 %v6004
    %6210 = vmatpush1.bf16.msra.mxu0 %v6003
    %6211 = vmatprep.subr.bf16.mxu0 %v5999
    %6212 = vmatpush1.bf16.msra.mxu0 %v5998
    %6213 = vmatprep.subr.bf16.mxu0 %v6074
    %6214 = vmatpush2.bf16.msra.mxu0 %v6073
    %6215 = vmatprep.subr.bf16.mxu0 %v6069
    %6216 = vmatpush2.bf16.msra.mxu0 %v6068
    %6217 = vmatprep.subr.bf16.mxu0 %v6064
    %6218 = vmatpush2.bf16.msra.mxu0 %v6063
    %6219 = vmatprep.subr.bf16.mxu0 %v6059
    %6220 = vmatpush2.bf16.msra.mxu0 %v6058
    %6221 = vmatprep.subr.bf16.mxu0 %v6054
    %6222 = vmatpush2.bf16.msra.mxu0 %v6053
    %6223 = vmatprep.subr.bf16.mxu0 %v6049
    %6224 = vmatpush2.bf16.msra.mxu0 %v6048
    %6225 = vmatprep.subr.bf16.mxu0 %v6044
    %6226 = vmatpush2.bf16.msra.mxu0 %v6043
    %6227 = vmatprep.subr.bf16.mxu0 %v6039
    %6228 = vmatpush2.bf16.msra.mxu0 %v6038
    %6229 = vmatprep.mubr.bf16.mxu0 %v5635
    %6230 = vmatmul.mubr.bf16.gmra.mxu0 %v5634
    %v6231 = vpop.f32.mrf.mxu0
    %v6232 = vadd.f32 %v5733, %v6231
    %v6233 = vpop.f32.mrf.mxu0
    %v6234 = vadd.f32 %v5734, %v6233
    %v6235 = vpop.f32.mrf.mxu0
    %v6236 = vadd.f32 %v5737, %v6235
    %v6237 = vpop.f32.mrf.mxu0
    %v6238 = vadd.f32 %v5738, %v6237
    %6239 = vdwg.mxu0
    %6240 = vmatprep.subr.bf16.mxu0 0
    %6241 = vmatpush1.bf16.msra.mxu0 %v6035
    %6242 = vmatprep.subr.bf16.mxu0 0
    %6243 = vmatpush1.bf16.msra.mxu0 %v6030
    %6244 = vmatprep.subr.bf16.mxu0 0
    %6245 = vmatpush1.bf16.msra.mxu0 %v6025
    %6246 = vmatprep.subr.bf16.mxu0 0
    %6247 = vmatpush1.bf16.msra.mxu0 %v6020
    %6248 = vmatprep.subr.bf16.mxu0 0
    %6249 = vmatpush1.bf16.msra.mxu0 %v6015
    %6250 = vmatprep.subr.bf16.mxu0 0
    %6251 = vmatpush1.bf16.msra.mxu0 %v6010
    %6252 = vmatprep.subr.bf16.mxu0 0
    %6253 = vmatpush1.bf16.msra.mxu0 %v6005
    %6254 = vmatprep.subr.bf16.mxu0 0
    %6255 = vmatpush1.bf16.msra.mxu0 %v6000
    %6256 = vmatprep.subr.bf16.mxu0 0
    %6257 = vmatpush2.bf16.msra.mxu0 %v6075
    %6258 = vmatprep.subr.bf16.mxu0 0
    %6259 = vmatpush2.bf16.msra.mxu0 %v6070
    %6260 = vmatprep.subr.bf16.mxu0 0
    %6261 = vmatpush2.bf16.msra.mxu0 %v6065
    %6262 = vmatprep.subr.bf16.mxu0 0
    %6263 = vmatpush2.bf16.msra.mxu0 %v6060
    %6264 = vmatprep.subr.bf16.mxu0 0
    %6265 = vmatpush2.bf16.msra.mxu0 %v6055
    %6266 = vmatprep.subr.bf16.mxu0 0
    %6267 = vmatpush2.bf16.msra.mxu0 %v6050
    %6268 = vmatprep.subr.bf16.mxu0 0
    %6269 = vmatpush2.bf16.msra.mxu0 %v6045
    %6270 = vmatprep.subr.bf16.mxu0 0
    %6271 = vmatpush2.bf16.msra.mxu0 %v6040
    %6272 = vmatprep.mubr.bf16.mxu0 %v5635
    %6273 = vmatmul.mubr.bf16.gmra.mxu0 %v5634
    %v6274 = vpop.f32.mrf.mxu0
    %v6275 = vadd.f32 %v5735, %v6274
    %v6276 = vpop.f32.mrf.mxu0
    %v6277 = vpop.f32.mrf.mxu0
    %v6278 = vadd.f32 %v5739, %v6277
    %v6279 = vpop.f32.mrf.mxu0
    %6280 = vdwg.mxu0
    %v6281 = vxor.u32 %v6192, 2147483648
    %v6282 = vxor.u32 %v6232, 2147483648
    %v6283 = vxor.u32 %v6195, 2147483648
    %v6284 = vxor.u32 %v6236, 2147483648
    %v6285 = vmul.f32 %v6281, 1.442695
    %v6286 = vpow.pop %v6285
    %v6287 = vmul.f32 %v6282, 1.442695
    %v6288 = vpow.pop %v6287
    %v6289 = vmul.f32 %v6283, 1.442695
    %v6290 = vpow.pop %v6289
    %v6291 = vmul.f32 %v6284, 1.442695
    %v6292 = vpow.pop %v6291
    %v6293 = vadd.f32 %v6286, 1.0
    %v6294 = vadd.f32 %v6288, 1.0
    %v6295 = vadd.f32 %v6290, 1.0
    %v6296 = vadd.f32 %v6292, 1.0
    %v6297 = vrcp.pop %v6293
    %v6298 = vmul.f32 1.0, %v6297
    %v6299 = vrcp.pop %v6294
    %v6300 = vmul.f32 1.0, %v6299
    %v6301 = vrcp.pop %v6295
    %v6302 = vmul.f32 1.0, %v6301
    %v6303 = vrcp.pop %v6296
    %v6304 = vmul.f32 1.0, %v6303
    %v6305 = vmul.f32 %v6298, %v6275
    %v6306 = vmul.f32 %v6302, %v6278
    %v6307 = vadd.f32 %v6234, %v6305
    %v6308 = vadd.f32 %v6238, %v6306
    %v6309 = vtanh.pop %v6307
    %v6310 = vtanh.pop %v6308
    %v6311 = vsub.f32 1.0, %v6300
    %v6312 = vsub.f32 1.0, %v6304
    %v6313 = vmul.f32 %v6311, %v6309
    %v6314 = vmul.f32 %v6312, %v6310
    %v6315 = vmul.f32 %v6300, %v5578
    %v6316 = vmul.f32 %v6304, %v5579
    %v6317 = vadd.f32 %v6313, %v6315
    %v6318 = vadd.f32 %v6314, %v6316
    %6319 = vst [vmem:[#allocation3 + $0x50] sm:$0xff] %v6317
    %6320 = vst [vmem:[#allocation3 + $0x58] sm:$0xff] %v6318
    %6321 = vst [vmem:[#allocation17] sm:$0xff] %v5632
    %6322 = vst [vmem:[#allocation17 + $0x8] sm:$0xff] %v5633
    %6323 = vst [vmem:[#allocation19] sm:$0xff] %v6317
    %6324 = vst [vmem:[#allocation19 + $0x8] sm:$0xff] %v6318
    %v6325 = vld [vmem:[#allocation3] sm:$0xff]
    %v6326 = vld [vmem:[#allocation3 + $0x8] sm:$0xff]
    %v6327 = vld [vmem:[#allocation3 + $0x10] sm:$0xff]
    %v6328 = vld [vmem:[#allocation3 + $0x18] sm:$0xff]
    %v6329 = vld [vmem:[#allocation3 + $0x20] sm:$0xff]
    %v6330 = vld [vmem:[#allocation3 + $0x28] sm:$0xff]
    %v6331 = vld [vmem:[#allocation3 + $0x30] sm:$0xff]
    %v6332 = vld [vmem:[#allocation3 + $0x38] sm:$0xff]
    %v6333 = vld [vmem:[#allocation3 + $0x40] sm:$0xff]
    %v6334 = vld [vmem:[#allocation3 + $0x48] sm:$0xff]
    %v6335 = vld [vmem:[#allocation3 + $0x50] sm:$0xff]
    %v6336 = vld [vmem:[#allocation3 + $0x58] sm:$0xff]
    %v6337 = vpack.c.bf16 %v6326, %v6325
    %v6338 = vpack.c.bf16 %v6328, %v6327
    %v6339 = vpack.c.bf16 %v6330, %v6329
    %v6340 = vpack.c.bf16 %v6332, %v6331
    %v6341 = vpack.c.bf16 %v6334, %v6333
    %v6342 = vpack.c.bf16 %v6336, %v6335
    %v6343 = vld [vmem:[#allocation14] sm:$0xf]
    %v6344 = vld [vmem:[#allocation14 + $0x4] sm:$0xf]
    %v6345 = vld [vmem:[#allocation14 + $0x8] sm:$0xf]
    %v6346 = vld [vmem:[#allocation14 + $0xc] sm:$0xf]
    %v6347 = vld [vmem:[#allocation14 + $0x10] sm:$0xf]
    %v6348 = vld [vmem:[#allocation14 + $0x14] sm:$0xf]
    %v6349 = vld [vmem:[#allocation14 + $0x18] sm:$0xf]
    %v6350 = vld [vmem:[#allocation14 + $0x1c] sm:$0xf]
    %v6351 = vld [vmem:[#allocation14 + $0x20] sm:$0xf]
    %v6352 = vld [vmem:[#allocation14 + $0x24] sm:$0xf]
    %v6353 = vld [vmem:[#allocation14 + $0x28] sm:$0xf]
    %v6354 = vld [vmem:[#allocation14 + $0x2c] sm:$0xf]
    %v6355 = vld [vmem:[#allocation14 + $0x30] sm:$0xf]
    %v6356 = vld [vmem:[#allocation14 + $0x34] sm:$0xf]
    %v6357 = vld [vmem:[#allocation14 + $0x38] sm:$0xf]
    %v6358 = vld [vmem:[#allocation14 + $0x3c] sm:$0xf]
    %v6359 = vld [vmem:[%s8] sm:$0x1]
    %v6361 = vlaneseq
    %v6362 = vshrl.u32 %v6361, 7
    %v6363 = vsub.s32 0, %v6362
    %v6364 = vrot.slane %v6359, %v6363
    %v6382 = vunpack.c.l.b16 %v6343
    %v6383 = vunpack.c.l.b16 %v6344
    %v6384 = vunpack.c.l.b16 %v6345
    %v6385 = vunpack.c.l.b16 %v6346
    %v6386 = vunpack.c.l.b16 %v6347
    %v6387 = vunpack.c.l.b16 %v6348
    %v6388 = vunpack.c.l.b16 %v6349
    %v6389 = vunpack.c.l.b16 %v6350
    %v6390 = vunpack.c.l.b16 %v6351
    %v6391 = vunpack.c.l.b16 %v6352
    %v6392 = vunpack.c.l.b16 %v6353
    %v6393 = vunpack.c.l.b16 %v6354
    %v6394 = vunpack.c.l.b16 %v6355
    %v6395 = vunpack.c.l.b16 %v6356
    %v6396 = vunpack.c.l.b16 %v6357
    %v6397 = vunpack.c.l.b16 %v6358
    %v6398 = vpack.c.b16 %v6383, %v6382
    %v6399 = vpack.c.b16 %v6385, %v6384
    %v6400 = vpack.c.b16 %v6387, %v6386
    %v6401 = vpack.c.b16 %v6389, %v6388
    %v6402 = vpack.c.b16 %v6391, %v6390
    %v6403 = vpack.c.b16 %v6393, %v6392
    %v6404 = vpack.c.b16 %v6395, %v6394
    %v6405 = vpack.c.b16 %v6397, %v6396
    %6414 = vmatprep.subr.bf16.mxu0 0
    %6415 = vmatpush1.bf16.msra.mxu0 %v6405
    %6416 = vmatprep.subr.bf16.mxu0 0
    %6417 = vmatpush1.bf16.msra.mxu0 %v6404
    %6418 = vmatprep.subr.bf16.mxu0 0
    %6419 = vmatpush1.bf16.msra.mxu0 %v6403
    %6420 = vmatprep.subr.bf16.mxu0 0
    %6421 = vmatpush1.bf16.msra.mxu0 %v6402
    %6422 = vmatprep.subr.bf16.mxu0 0
    %6423 = vmatpush1.bf16.msra.mxu0 %v6401
    %6424 = vmatprep.subr.bf16.mxu0 0
    %6425 = vmatpush1.bf16.msra.mxu0 %v6400
    %6426 = vmatprep.subr.bf16.mxu0 0
    %6427 = vmatpush1.bf16.msra.mxu0 %v6399
    %6428 = vmatprep.subr.bf16.mxu0 0
    %6429 = vmatpush1.bf16.msra.mxu0 %v6398
    %6430 = vmatprep.subr.bf16.mxu0 0
    %6431 = vmatpush2.bf16.msra.mxu0 0
    %6432 = vmatprep.subr.bf16.mxu0 0
    %6433 = vmatpush2.bf16.msra.mxu0 0
    %6434 = vmatprep.subr.bf16.mxu0 0
    %6435 = vmatpush2.bf16.msra.mxu0 0
    %6436 = vmatprep.subr.bf16.mxu0 0
    %6437 = vmatpush2.bf16.msra.mxu0 0
    %6438 = vmatprep.subr.bf16.mxu0 0
    %6439 = vmatpush2.bf16.msra.mxu0 0
    %6440 = vmatprep.subr.bf16.mxu0 0
    %6441 = vmatpush2.bf16.msra.mxu0 0
    %6442 = vmatprep.subr.bf16.mxu0 0
    %6443 = vmatpush2.bf16.msra.mxu0 0
    %6444 = vmatprep.subr.bf16.mxu0 0
    %6445 = vmatpush2.bf16.msra.mxu0 0
    %6446 = vmatprep.mubr.bf16.mxu0 0
    %6447 = vmatmul.mubr.bf16.gmra.mxu0 %v6337
    %v6448 = vpop.f32.mrf.mxu0
    %v6449 = vadd.f32 %v6364, %v6448
    %v6450 = vpop.f32.mrf.mxu0
    %v6451 = vpop.f32.mrf.mxu0
    %v6452 = vadd.f32 %v6364, %v6451
    %v6453 = vpop.f32.mrf.mxu0
    %6454 = vmatprep.mubr.bf16.mxu0 0
    %6455 = vmatmul.mubr.bf16.gmra.mxu0 %v6338
    %v6456 = vpop.f32.mrf.mxu0
    %v6457 = vadd.f32 %v6364, %v6456
    %v6458 = vpop.f32.mrf.mxu0
    %v6459 = vpop.f32.mrf.mxu0
    %v6460 = vadd.f32 %v6364, %v6459
    %v6461 = vpop.f32.mrf.mxu0
    %6462 = vmatprep.mubr.bf16.mxu0 0
    %6463 = vmatmul.mubr.bf16.gmra.mxu0 %v6339
    %v6464 = vpop.f32.mrf.mxu0
    %v6465 = vadd.f32 %v6364, %v6464
    %v6466 = vpop.f32.mrf.mxu0
    %v6467 = vpop.f32.mrf.mxu0
    %v6468 = vadd.f32 %v6364, %v6467
    %v6469 = vpop.f32.mrf.mxu0
    %6470 = vmatprep.mubr.bf16.mxu0 0
    %6471 = vmatmul.mubr.bf16.gmra.mxu0 %v6340
    %v6472 = vpop.f32.mrf.mxu0
    %v6473 = vadd.f32 %v6364, %v6472
    %v6474 = vpop.f32.mrf.mxu0
    %v6475 = vpop.f32.mrf.mxu0
    %v6476 = vadd.f32 %v6364, %v6475
    %v6477 = vpop.f32.mrf.mxu0
    %6478 = vmatprep.mubr.bf16.mxu0 0
    %6479 = vmatmul.mubr.bf16.gmra.mxu0 %v6341
    %v6480 = vpop.f32.mrf.mxu0
    %v6481 = vadd.f32 %v6364, %v6480
    %v6482 = vpop.f32.mrf.mxu0
    %v6483 = vpop.f32.mrf.mxu0
    %v6484 = vadd.f32 %v6364, %v6483
    %v6485 = vpop.f32.mrf.mxu0
    %6486 = vmatprep.mubr.bf16.mxu0 0
    %6487 = vmatmul.mubr.bf16.gmra.mxu0 %v6342
    %v6488 = vpop.f32.mrf.mxu0
    %v6489 = vadd.f32 %v6364, %v6488
    %v6490 = vpop.f32.mrf.mxu0
    %v6491 = vpop.f32.mrf.mxu0
    %v6492 = vadd.f32 %v6364, %v6491
    %v6493 = vpop.f32.mrf.mxu0
    %6494 = vdwg.mxu0
    %v6495 = vxor.u32 %v6449, 2147483648
    %v6496 = vxor.u32 %v6452, 2147483648
    %v6497 = vxor.u32 %v6457, 2147483648
    %v6498 = vxor.u32 %v6460, 2147483648
    %v6499 = vxor.u32 %v6465, 2147483648
    %v6500 = vxor.u32 %v6468, 2147483648
    %v6501 = vxor.u32 %v6473, 2147483648
    %v6502 = vxor.u32 %v6476, 2147483648
    %v6503 = vxor.u32 %v6481, 2147483648
    %v6504 = vxor.u32 %v6484, 2147483648
    %v6505 = vxor.u32 %v6489, 2147483648
    %v6506 = vxor.u32 %v6492, 2147483648
    %v6507 = vmul.f32 %v6495, 1.442695
    %v6508 = vpow.pop %v6507
    %v6509 = vmul.f32 %v6496, 1.442695
    %v6510 = vpow.pop %v6509
    %v6511 = vmul.f32 %v6497, 1.442695
    %v6512 = vpow.pop %v6511
    %v6513 = vmul.f32 %v6498, 1.442695
    %v6514 = vpow.pop %v6513
    %v6515 = vmul.f32 %v6499, 1.442695
    %v6516 = vpow.pop %v6515
    %v6517 = vmul.f32 %v6500, 1.442695
    %v6518 = vpow.pop %v6517
    %v6519 = vmul.f32 %v6501, 1.442695
    %v6520 = vpow.pop %v6519
    %v6521 = vmul.f32 %v6502, 1.442695
    %v6522 = vpow.pop %v6521
    %v6523 = vmul.f32 %v6503, 1.442695
    %v6524 = vpow.pop %v6523
    %v6525 = vmul.f32 %v6504, 1.442695
    %v6526 = vpow.pop %v6525
    %v6527 = vmul.f32 %v6505, 1.442695
    %v6528 = vpow.pop %v6527
    %v6529 = vmul.f32 %v6506, 1.442695
    %v6530 = vpow.pop %v6529
    %v6531 = vadd.f32 %v6508, 1.0
    %v6532 = vadd.f32 %v6510, 1.0
    %v6533 = vadd.f32 %v6512, 1.0
    %v6534 = vadd.f32 %v6514, 1.0
    %v6535 = vadd.f32 %v6516, 1.0
    %v6536 = vadd.f32 %v6518, 1.0
    %v6537 = vadd.f32 %v6520, 1.0
    %v6538 = vadd.f32 %v6522, 1.0
    %v6539 = vadd.f32 %v6524, 1.0
    %v6540 = vadd.f32 %v6526, 1.0
    %v6541 = vadd.f32 %v6528, 1.0
    %v6542 = vadd.f32 %v6530, 1.0
    %v6543 = vrcp.pop %v6531
    %v6544 = vmul.f32 1.0, %v6543
    %v6545 = vrcp.pop %v6532
    %v6546 = vmul.f32 1.0, %v6545
    %v6547 = vrcp.pop %v6533
    %v6548 = vmul.f32 1.0, %v6547
    %v6549 = vrcp.pop %v6534
    %v6550 = vmul.f32 1.0, %v6549
    %v6551 = vrcp.pop %v6535
    %v6552 = vmul.f32 1.0, %v6551
    %v6553 = vrcp.pop %v6536
    %v6554 = vmul.f32 1.0, %v6553
    %v6555 = vrcp.pop %v6537
    %v6556 = vmul.f32 1.0, %v6555
    %v6557 = vrcp.pop %v6538
    %v6558 = vmul.f32 1.0, %v6557
    %v6559 = vrcp.pop %v6539
    %v6560 = vmul.f32 1.0, %v6559
    %v6561 = vrcp.pop %v6540
    %v6562 = vmul.f32 1.0, %v6561
    %v6563 = vrcp.pop %v6541
    %v6564 = vmul.f32 1.0, %v6563
    %v6565 = vrcp.pop %v6542
    %v6566 = vmul.f32 1.0, %v6565
    %6567 = vst [vmem:[#allocation16] sm:$0xff] %v6544
    %6568 = vst [vmem:[#allocation16 + $0x8] sm:$0xff] %v6546
    %6569 = vst [vmem:[#allocation16 + $0x10] sm:$0xff] %v6548
    %6570 = vst [vmem:[#allocation16 + $0x18] sm:$0xff] %v6550
    %6571 = vst [vmem:[#allocation16 + $0x20] sm:$0xff] %v6552
    %6572 = vst [vmem:[#allocation16 + $0x28] sm:$0xff] %v6554
    %6573 = vst [vmem:[#allocation16 + $0x30] sm:$0xff] %v6556
    %6574 = vst [vmem:[#allocation16 + $0x38] sm:$0xff] %v6558
    %6575 = vst [vmem:[#allocation16 + $0x40] sm:$0xff] %v6560
    %6576 = vst [vmem:[#allocation16 + $0x48] sm:$0xff] %v6562
    %6577 = vst [vmem:[#allocation16 + $0x50] sm:$0xff] %v6564
    %6578 = vst [vmem:[#allocation16 + $0x58] sm:$0xff] %v6566
    // Predicated region
    $region62: #{tpu_custom_call.1} parent=1 // pred_check
      _
    $region63: #{tpu_custom_call.1} parent=1 // pred_check_branch
      %6580 = sbr.rel (0) target = $region65
    $region64: #{tpu_custom_call.1} parent=1 // pred_region
      %s6582 = ssub.s32 1536, 1536
      %6583 = vsyncadd [#allocation7], %s6582
      %s6584 = sshll.u32 [#allocation16], 4
      %s6585 = int_to_ptr.vmem [resolvable:$true] %s6584
      %6590 = dma.vmem_to_hbm [thread:$0]  %s6585, 1536, %s9, [#allocation7], 128, 128, 8
    $region65: #{tpu_custom_call.1} parent=1 // pred_fallthru
      _
    // Predicated region
    $region66: #{tpu_custom_call.1} parent=1 // pred_check
      _
    $region67: #{tpu_custom_call.1} parent=1 // pred_check_branch
      %6592 = sbr.rel (0) target = $region69
    $region68: #{tpu_custom_call.1} parent=1 // pred_region
      %s6594 = ssub.s32 256, 256
      %6595 = vsyncadd [#allocation18], %s6594
      %s6596 = sshll.u32 [#allocation17], 4
      %s6597 = int_to_ptr.vmem [resolvable:$true] %s6596
      %6602 = dma.vmem_to_hbm [thread:$0]  %s6597, 256, %s10, [#allocation18], 128, 128, 8
    $region69: #{tpu_custom_call.1} parent=1 // pred_fallthru
      _
    // Predicated region
    $region70: #{tpu_custom_call.1} parent=1 // pred_check
      _
    $region71: #{tpu_custom_call.1} parent=1 // pred_check_branch
      %6604 = sbr.rel (0) target = $region73
    $region72: #{tpu_custom_call.1} parent=1 // pred_region
      %s6606 = ssub.s32 256, 256
      %6607 = vsyncadd [#allocation18], %s6606
      %s6608 = sshll.u32 [#allocation19], 4
      %s6609 = int_to_ptr.vmem [resolvable:$true] %s6608
      %6614 = dma.vmem_to_hbm [thread:$0]  %s6609, 256, %s11, [#allocation18], 128, 128, 8
    $region73: #{tpu_custom_call.1} parent=1 // pred_fallthru
      _
    // Predicated region
    $region74: #{tpu_custom_call.1} parent=1 // pred_check
      _
    $region75: #{tpu_custom_call.1} parent=1 // pred_check_branch
      %6616 = sbr.rel (0) target = $region77
    $region76: #{tpu_custom_call.1} parent=1 // pred_region
      %6617 = dma.done [#allocation7], 1536
    $region77: #{tpu_custom_call.1} parent=1 // pred_fallthru
      _
    // Predicated region
    $region78: #{tpu_custom_call.1} parent=1 // pred_check
      _
    $region79: #{tpu_custom_call.1} parent=1 // pred_check_branch
      %6619 = sbr.rel (0) target = $region81
    $region80: #{tpu_custom_call.1} parent=1 // pred_region
      %6620 = dma.done [#allocation18], 256
    $region81: #{tpu_custom_call.1} parent=1 // pred_fallthru
      _
    // Predicated region
    $region82: #{tpu_custom_call.1} parent=1 // pred_check
      _
    $region83: #{tpu_custom_call.1} parent=1 // pred_check_branch
      %6622 = sbr.rel (0) target = $region85
    $region84: #{tpu_custom_call.1} parent=1 // pred_region
      %6623 = dma.done [#allocation18], 256
    $region85: #{tpu_custom_call.1} parent=1 // pred_fallthru
      _
    %6624 = vsyncpa [#allocation6], 1
    %6625 = vsyncpa [#allocation9], 1
    %6626 = vsyncpa [#allocation12], 1
    %6627 = vsyncpa [#allocation15], 1
    %6628 = vsyncpa [#allocation7], 1
    %6629 = vsyncpa [#allocation18], 1

</llo_original>
